<compile_context>
chip_gen: v6e
topology: v6e:2x2x1
jax: 0.10.0
libtpu: 0.0.40
codegen_flags: <defaults>
</compile_context>

<pallas_src>
import functools

import jax
import jax.numpy as jnp
import numpy as np
from jax.experimental import pallas as pl
from jax.experimental.pallas import tpu as pltpu

LANE = 128
SUBLANE = 8
MAX_BATCH_BLOCK = 8


def _round_up(x, m):
    return ((x + m - 1) // m) * m


# ---------------------------------------------------------------------------
# Fused pipeline kernel (one batch block per grid step).
# ---------------------------------------------------------------------------
def _fused_pipeline_kernel(x_ref, mask_ref, pool_ref, w1_ref, b1_ref, w2_ref,
                           b2_ref, wfc_ref, bfc_ref, out_ref, *, wp):
    # x_ref   : (MB, KIN)  im2col of the batch block over the zero-PADDED
    #                      (H+2)x(W+2) output grid, spatially flattened
    #                      (MB = b_blk * MP rows, MP = pad((H+2)*(W+2), 8)).
    # mask_ref: (MB, 1)    1.0 on real-pixel rows, 0.0 on halo / pad rows.
    # pool_ref: (8, MB)    block-diagonal per-image avg-pool weights
    #                      (interior mask / (H*W)); rows >= b_blk are zero.
    # w1_ref  : (KIN, C)   conv1 weights (9*Cin taps stacked along K).
    # b1_ref  : (8, C)     conv1 bias pre-broadcast to 8 sublanes.
    # w2_ref  : (9*C, C)   conv2 weights, one (C, C) block per 3x3 tap.
    # b2_ref  : (8, C)
    # wfc_ref : (C, K)     fc weights.
    # bfc_ref : (8, K)
    # out_ref : (8, K)     logits; row b (< b_blk) = image b of this block.
    mb = x_ref.shape[0]
    c = w1_ref.shape[1]

    # --- trainer_1: conv1 as ONE (MB,KIN)x(KIN,C) MXU matmul ----------------
    y1 = jnp.dot(x_ref[...], w1_ref[...], preferred_element_type=jnp.float32)
    b1 = b1_ref[...][0:1, :]
    # bias + ReLU, then zero the halo / pad rows so they behave as SAME zero
    # padding for conv2 (replaces the old (H+2,W+2,C) scratch, its full
    # zeroing and the sublane-offset-1 interior store).
    y1 = jnp.maximum(y1 + b1, 0.0) * mask_ref[...]                  # (MB, C)

    # --- trainer_2: conv2 as 9 accumulated shifted-tap matmuls --------------
    # Each tap is a flat-row offset realised with pltpu.roll (XLU slot):
    # no y2col materialisation, no concatenate, no misaligned slices.
    # Wrap-around / cross-image contamination lands only on halo rows, which
    # the pool matrix ignores.
    acc = None
    for k in range(9):
        kh, kw = divmod(k, 3)
        s = (kh - 1) * wp + (kw - 1)               # flat offset of tap (kh,kw)
        tap = y1 if s == 0 else pltpu.roll(y1, (-s) % mb, 0)
        part = jnp.dot(tap, w2_ref[k * c:(k + 1) * c, :],
                       preferred_element_type=jnp.float32)
        acc = part if acc is None else acc + part
    y2 = jnp.maximum(acc + b2_ref[...][0:1, :], 0.0)                # (MB, C)

    # --- global average pool (on the MXU) + fc ("model.fc") -----------------
    pooled = jnp.dot(pool_ref[...], y2, preferred_element_type=jnp.float32)
    logits = jnp.dot(pooled, wfc_ref[...],
                     preferred_element_type=jnp.float32) + bfc_ref[...]
    out_ref[...] = logits.astype(out_ref.dtype)


def fused_forward(x_col, mask, pool_mat, w1c, b1, w2c, b2, wfc, bfc, *,
                  wp, mp, b_blk):
    """x_col: (G*b_blk*MP, KIN) flat im2col.  Returns (G, 8, Kpad) logits."""
    rows, kin = x_col.shape
    mb = b_blk * mp
    g = rows // mb
    c = w1c.shape[1]
    kcls = wfc.shape[1]
    kernel = functools.partial(_fused_pipeline_kernel, wp=wp)
    return pl.pallas_call(
        kernel,
        out_shape=jax.ShapeDtypeStruct((g, 8, kcls), jnp.float32),
        grid=(g,),
        in_specs=[
            pl.BlockSpec((mb, kin), lambda i: (i, 0)),
            # Constant-index blocks below are fetched once and revisited.
            # TODO(synk): single-buffer them (pipeline_mode=pl.Buffered(1)) and
            # tile conv2 over taps / spatial rows before scaling H/W/C so the
            # intermediates stay inside v7x's 64 MiB VMEM.
            pl.BlockSpec((mb, 1), lambda i: (0, 0)),
            pl.BlockSpec((8, mb), lambda i: (0, 0)),
            pl.BlockSpec((kin, c), lambda i: (0, 0)),
            pl.BlockSpec((8, c), lambda i: (0, 0)),
            pl.BlockSpec((9 * c, c), lambda i: (0, 0)),
            pl.BlockSpec((8, c), lambda i: (0, 0)),
            pl.BlockSpec((c, kcls), lambda i: (0, 0)),
            pl.BlockSpec((8, kcls), lambda i: (0, 0)),
        ],
        out_specs=pl.BlockSpec((None, 8, kcls), lambda i: (i, 0, 0)),
        compiler_params=pltpu.CompilerParams(
            # batch blocks are independent -> megacore-shard across v7x's 2 TCs
            dimension_semantics=("parallel",),
            vmem_limit_bytes=32 * 1024 * 1024),
    )(x_col, mask, pool_mat, w1c, b1, w2c, b2, wfc, bfc)


# ---------------------------------------------------------------------------
# DistModel analogue: deterministic parameter init + fused forward.
# ---------------------------------------------------------------------------
class DistModelPallas:
    def __init__(self, cin, cmid, num_classes, key):
        k1, k2, k3 = jax.random.split(key, 3)
        self.cin, self.cmid, self.num_classes = cin, cmid, num_classes

        # Raw (unpadded) parameters — deterministic init.
        self.w1 = 0.1 * jax.random.normal(k1, (3, 3, cin, cmid), jnp.float32)
        self.b1 = jnp.zeros((cmid,), jnp.float32)
        self.w2 = 0.1 * jax.random.normal(k2, (3, 3, cmid, cmid), jnp.float32)
        self.b2 = jnp.zeros((cmid,), jnp.float32)
        self.wfc = 0.1 * jax.random.normal(k3, (cmid, num_classes), jnp.float32)
        self.bfc = jnp.zeros((num_classes,), jnp.float32)

        # Lane-dense zero-padded copies for the kernel (padding done once).
        self.cmid_p = _round_up(cmid, LANE)
        self.kin_p = _round_up(9 * cin, LANE)
        self.ncls_p = _round_up(num_classes, LANE)

        w1c = self.w1.reshape(9 * cin, cmid)
        self.w1_col = jnp.zeros((self.kin_p, self.cmid_p), jnp.float32) \
            .at[:9 * cin, :cmid].set(w1c)

        # conv2: one (cmid_p, cmid_p) block per tap, stacked tap-major — the
        # accumulated-tap formulation pays channel padding only in the lane dim.
        w2_pad = jnp.zeros((3, 3, self.cmid_p, self.cmid_p), jnp.float32) \
            .at[:, :, :cmid, :cmid].set(self.w2)
        self.w2_col = w2_pad.reshape(9 * self.cmid_p, self.cmid_p)

        self.wfc_p = jnp.zeros((self.cmid_p, self.ncls_p), jnp.float32) \
            .at[:cmid, :num_classes].set(self.wfc)

        # Biases pre-broadcast to 8 sublanes so their loads are unmasked.
        self.b1_p = jnp.zeros((8, self.cmid_p), jnp.float32) \
            .at[:, :cmid].set(jnp.broadcast_to(self.b1, (8, cmid)))
        self.b2_p = jnp.zeros((8, self.cmid_p), jnp.float32) \
            .at[:, :cmid].set(jnp.broadcast_to(self.b2, (8, cmid)))
        self.bfc_p = jnp.zeros((8, self.ncls_p), jnp.float32) \
            .at[:, :num_classes].set(
                jnp.broadcast_to(self.bfc, (8, num_classes)))
        # TODO(synk): rpc.remote / RRef / dist_autograd plumbing has no device
        # compute and no Pallas equivalent; both stages run fused on one chip.

    def __call__(self, x_nchw):
        x = jnp.transpose(x_nchw, (0, 2, 3, 1))          # NCHW -> NHWC
        n, h, w, cin = x.shape
        hp, wp = h + 2, w + 2
        mp = _round_up(hp * wp, SUBLANE)

        # Batch blocking: amortise per-step grid overhead, keep >= 2 steps.
        b_blk = 1 if n < 2 else min(MAX_BATCH_BLOCK, -(-n // 2))
        g = -(-n // b_blk)
        n_pad = g * b_blk

        # Host-side im2col over the zero-PADDED (hp x wp) output grid so conv1
        # output lands directly in the flat padded layout used by conv2's
        # shifted-tap matmuls (halo rows are garbage and get masked in-kernel).
        xp2 = jnp.pad(x, ((0, n_pad - n), (2, 2), (2, 2), (0, 0)))
        cols = [xp2[:, kh:kh + hp, kw:kw + wp, :]
                for kh in range(3) for kw in range(3)]
        x_col = jnp.concatenate(cols, axis=-1).reshape(n_pad, hp * wp, 9 * cin)
        x_col = jnp.pad(x_col, ((0, 0), (0, mp - hp * wp),
                                (0, self.kin_p - 9 * cin)))
        x_col = x_col.reshape(n_pad * mp, self.kin_p)

        # Static interior mask + per-image pool matrix (jit-time constants).
        m2d = np.zeros((hp, wp), np.float32)
        m2d[1:h + 1, 1:w + 1] = 1.0
        mask_img = np.zeros((mp,), np.float32)
        mask_img[:hp * wp] = m2d.reshape(-1)
        mask = jnp.asarray(np.tile(mask_img, b_blk).reshape(b_blk * mp, 1))
        pool_np = np.zeros((8, b_blk * mp), np.float32)
        for b in range(b_blk):
            pool_np[b, b * mp:(b + 1) * mp] = mask_img / float(h * w)
        pool_mat = jnp.asarray(pool_np)

        out = fused_forward(x_col, mask, pool_mat, self.w1_col, self.b1_p,
                            self.w2_col, self.b2_p, self.wfc_p, self.bfc_p,
                            wp=wp, mp=mp, b_blk=b_blk)
        logits = out[:, :b_blk, :].reshape(g * b_blk, self.ncls_p)
        logits = logits[:n, :self.num_classes]
        # DistModel.forward returns torch.cat([final_output]) == identity.
        return jnp.concatenate([logits], axis=0)


def _reference(x_nchw, m):
    """Pure-JAX reference of the same forward pass (for correctness check)."""
    x = jnp.transpose(x_nchw, (0, 2, 3, 1))

    def conv(x, w, b):
        y = jax.lax.conv_general_dilated(
            x, w, window_strides=(1, 1), padding="SAME",
            dimension_numbers=("NHWC", "HWIO", "NHWC"))
        return jax.nn.relu(y + b.reshape(1, 1, 1, -1))

    y = conv(x, m.w1, m.b1)
    z = conv(y, m.w2, m.b2)
    pooled = jnp.mean(z, axis=(1, 2))
    return pooled @ m.wfc + m.bfc


if __name__ == "__main__":
    N, C_IN, H, W = 2, 4, 16, 16
    C_MID, NUM_CLASSES = 32, 10

    key = jax.random.PRNGKey(0)
    kx, kp = jax.random.split(key)
    x = jax.random.normal(kx, (N, C_IN, H, W), jnp.float32)

    model = DistModelPallas(C_IN, C_MID, NUM_CLASSES, kp)

    fwd = jax.jit(model.__call__)
    out = jax.block_until_ready(fwd(x))
    assert out.shape == (N, NUM_CLASSES), out.shape

    ref = jax.block_until_ready(_reference(x, model))
    np.testing.assert_allclose(np.asarray(out), np.asarray(ref),
                               rtol=1e-4, atol=1e-4)

    print("KERNEL_OK")
</pallas_src>

<mosaic_0001>
module attributes {stable_mosaic.version = 11 : i64} {
  func.func @_fused_pipeline_kernel(%arg0: i32, %arg1: memref<328x128xf32, #tpu.memory_space<vmem>>, %arg2: memref<328x1xf32, #tpu.memory_space<vmem>>, %arg3: memref<8x328xf32, #tpu.memory_space<vmem>>, %arg4: memref<128x128xf32, #tpu.memory_space<vmem>>, %arg5: memref<8x128xf32, #tpu.memory_space<vmem>>, %arg6: memref<1152x128xf32, #tpu.memory_space<vmem>>, %arg7: memref<8x128xf32, #tpu.memory_space<vmem>>, %arg8: memref<128x128xf32, #tpu.memory_space<vmem>>, %arg9: memref<8x128xf32, #tpu.memory_space<vmem>>, %arg10: memref<1x8x128xf32, #tpu.memory_space<vmem>>) attributes {dimension_semantics = [#tpu.dimension_semantics<parallel>], iteration_bounds = array<i64: 2>, scalar_prefetch = 0 : i64, scratch_operands = 0 : i64, tpu.core_type = #tpu.core_type<tc>, window_params = [{transform_indices = @transform_0, window_bounds = array<i64: 328, 128>}, {pipeline_mode = #tpu.pipeline_mode<synchronous>, transform_indices = @transform_1, window_bounds = array<i64: 328, 1>}, {pipeline_mode = #tpu.pipeline_mode<synchronous>, transform_indices = @transform_2, window_bounds = array<i64: 8, 328>}, {pipeline_mode = #tpu.pipeline_mode<synchronous>, transform_indices = @transform_3, window_bounds = array<i64: 128, 128>}, {pipeline_mode = #tpu.pipeline_mode<synchronous>, transform_indices = @transform_4, window_bounds = array<i64: 8, 128>}, {pipeline_mode = #tpu.pipeline_mode<synchronous>, transform_indices = @transform_5, window_bounds = array<i64: 1152, 128>}, {pipeline_mode = #tpu.pipeline_mode<synchronous>, transform_indices = @transform_6, window_bounds = array<i64: 8, 128>}, {pipeline_mode = #tpu.pipeline_mode<synchronous>, transform_indices = @transform_7, window_bounds = array<i64: 128, 128>}, {pipeline_mode = #tpu.pipeline_mode<synchronous>, transform_indices = @transform_8, window_bounds = array<i64: 8, 128>}, {transform_indices = @transform_9, window_bounds = array<i64: 1, 8, 128>}]} {
    %c0 = arith.constant 0 : index
    %c0_0 = arith.constant 0 : index
    %0 = vector.load %arg1[%c0, %c0_0] : memref<328x128xf32, #tpu.memory_space<vmem>>, vector<328x128xf32>
    %c0_1 = arith.constant 0 : index
    %c0_2 = arith.constant 0 : index
    %1 = vector.load %arg4[%c0_1, %c0_2] : memref<128x128xf32, #tpu.memory_space<vmem>>, vector<128x128xf32>
    %cst = arith.constant dense<0.000000e+00> : vector<328x128xf32>
    %2 = tpu.matmul %0, %1, %cst {dimension_numbers = #tpu.dot_dimension_numbers<[1], [0], [0], [1], [0, 0, 1, 1], [], []>} : vector<328x128xf32>, vector<128x128xf32>, vector<328x128xf32> -> vector<328x128xf32>
    %c0_3 = arith.constant 0 : index
    %c0_4 = arith.constant 0 : index
    %3 = vector.load %arg5[%c0_3, %c0_4] : memref<8x128xf32, #tpu.memory_space<vmem>>, vector<8x128xf32>
    %4 = vector.extract_strided_slice %3 {offsets = [0, 0], sizes = [1, 128], strides = [1, 1]} : vector<8x128xf32> to vector<1x128xf32>
    %5 = vector.broadcast %4 : vector<1x128xf32> to vector<328x128xf32>
    %6 = arith.addf %2, %5 : vector<328x128xf32>
    %cst_5 = arith.constant 0.000000e+00 : f32
    %7 = vector.broadcast %cst_5 : f32 to vector<328x128xf32>
    %8 = arith.maximumf %6, %7 : vector<328x128xf32>
    %c0_6 = arith.constant 0 : index
    %c0_7 = arith.constant 0 : index
    %9 = vector.load %arg2[%c0_6, %c0_7] : memref<328x1xf32, #tpu.memory_space<vmem>>, vector<328x1xf32>
    %10 = vector.broadcast %9 : vector<328x1xf32> to vector<328x128xf32>
    %11 = arith.mulf %8, %10 : vector<328x128xf32>
    %c19_i32 = arith.constant 19 : i32
    %12 = tpu.dynamic_rotate %11 by %c19_i32 dim 0 : vector<328x128xf32>, i32 -> vector<328x128xf32>
    %c0_8 = arith.constant 0 : index
    %c0_9 = arith.constant 0 : index
    %13 = vector.load %arg6[%c0_8, %c0_9] : memref<1152x128xf32, #tpu.memory_space<vmem>>, vector<128x128xf32>
    %cst_10 = arith.constant dense<0.000000e+00> : vector<328x128xf32>
    %14 = tpu.matmul %12, %13, %cst_10 {dimension_numbers = #tpu.dot_dimension_numbers<[1], [0], [0], [1], [0, 0, 1, 1], [], []>} : vector<328x128xf32>, vector<128x128xf32>, vector<328x128xf32> -> vector<328x128xf32>
    %c18_i32 = arith.constant 18 : i32
    %15 = tpu.dynamic_rotate %11 by %c18_i32 dim 0 : vector<328x128xf32>, i32 -> vector<328x128xf32>
    %c128 = arith.constant 128 : index
    %c0_11 = arith.constant 0 : index
    %16 = vector.load %arg6[%c128, %c0_11] : memref<1152x128xf32, #tpu.memory_space<vmem>>, vector<128x128xf32>
    %cst_12 = arith.constant dense<0.000000e+00> : vector<328x128xf32>
    %17 = tpu.matmul %15, %16, %cst_12 {dimension_numbers = #tpu.dot_dimension_numbers<[1], [0], [0], [1], [0, 0, 1, 1], [], []>} : vector<328x128xf32>, vector<128x128xf32>, vector<328x128xf32> -> vector<328x128xf32>
    %18 = arith.addf %14, %17 : vector<328x128xf32>
    %c17_i32 = arith.constant 17 : i32
    %19 = tpu.dynamic_rotate %11 by %c17_i32 dim 0 : vector<328x128xf32>, i32 -> vector<328x128xf32>
    %c256 = arith.constant 256 : index
    %c0_13 = arith.constant 0 : index
    %20 = vector.load %arg6[%c256, %c0_13] : memref<1152x128xf32, #tpu.memory_space<vmem>>, vector<128x128xf32>
    %cst_14 = arith.constant dense<0.000000e+00> : vector<328x128xf32>
    %21 = tpu.matmul %19, %20, %cst_14 {dimension_numbers = #tpu.dot_dimension_numbers<[1], [0], [0], [1], [0, 0, 1, 1], [], []>} : vector<328x128xf32>, vector<128x128xf32>, vector<328x128xf32> -> vector<328x128xf32>
    %22 = arith.addf %18, %21 : vector<328x128xf32>
    %c1_i32 = arith.constant 1 : i32
    %23 = tpu.dynamic_rotate %11 by %c1_i32 dim 0 : vector<328x128xf32>, i32 -> vector<328x128xf32>
    %c384 = arith.constant 384 : index
    %c0_15 = arith.constant 0 : index
    %24 = vector.load %arg6[%c384, %c0_15] : memref<1152x128xf32, #tpu.memory_space<vmem>>, vector<128x128xf32>
    %cst_16 = arith.constant dense<0.000000e+00> : vector<328x128xf32>
    %25 = tpu.matmul %23, %24, %cst_16 {dimension_numbers = #tpu.dot_dimension_numbers<[1], [0], [0], [1], [0, 0, 1, 1], [], []>} : vector<328x128xf32>, vector<128x128xf32>, vector<328x128xf32> -> vector<328x128xf32>
    %26 = arith.addf %22, %25 : vector<328x128xf32>
    %c512 = arith.constant 512 : index
    %c0_17 = arith.constant 0 : index
    %27 = vector.load %arg6[%c512, %c0_17] : memref<1152x128xf32, #tpu.memory_space<vmem>>, vector<128x128xf32>
    %cst_18 = arith.constant dense<0.000000e+00> : vector<328x128xf32>
    %28 = tpu.matmul %11, %27, %cst_18 {dimension_numbers = #tpu.dot_dimension_numbers<[1], [0], [0], [1], [0, 0, 1, 1], [], []>} : vector<328x128xf32>, vector<128x128xf32>, vector<328x128xf32> -> vector<328x128xf32>
    %29 = arith.addf %26, %28 : vector<328x128xf32>
    %c327_i32 = arith.constant 327 : i32
    %30 = tpu.dynamic_rotate %11 by %c327_i32 dim 0 : vector<328x128xf32>, i32 -> vector<328x128xf32>
    %c640 = arith.constant 640 : index
    %c0_19 = arith.constant 0 : index
    %31 = vector.load %arg6[%c640, %c0_19] : memref<1152x128xf32, #tpu.memory_space<vmem>>, vector<128x128xf32>
    %cst_20 = arith.constant dense<0.000000e+00> : vector<328x128xf32>
    %32 = tpu.matmul %30, %31, %cst_20 {dimension_numbers = #tpu.dot_dimension_numbers<[1], [0], [0], [1], [0, 0, 1, 1], [], []>} : vector<328x128xf32>, vector<128x128xf32>, vector<328x128xf32> -> vector<328x128xf32>
    %33 = arith.addf %29, %32 : vector<328x128xf32>
    %c311_i32 = arith.constant 311 : i32
    %34 = tpu.dynamic_rotate %11 by %c311_i32 dim 0 : vector<328x128xf32>, i32 -> vector<328x128xf32>
    %c768 = arith.constant 768 : index
    %c0_21 = arith.constant 0 : index
    %35 = vector.load %arg6[%c768, %c0_21] : memref<1152x128xf32, #tpu.memory_space<vmem>>, vector<128x128xf32>
    %cst_22 = arith.constant dense<0.000000e+00> : vector<328x128xf32>
    %36 = tpu.matmul %34, %35, %cst_22 {dimension_numbers = #tpu.dot_dimension_numbers<[1], [0], [0], [1], [0, 0, 1, 1], [], []>} : vector<328x128xf32>, vector<128x128xf32>, vector<328x128xf32> -> vector<328x128xf32>
    %37 = arith.addf %33, %36 : vector<328x128xf32>
    %c310_i32 = arith.constant 310 : i32
    %38 = tpu.dynamic_rotate %11 by %c310_i32 dim 0 : vector<328x128xf32>, i32 -> vector<328x128xf32>
    %c896 = arith.constant 896 : index
    %c0_23 = arith.constant 0 : index
    %39 = vector.load %arg6[%c896, %c0_23] : memref<1152x128xf32, #tpu.memory_space<vmem>>, vector<128x128xf32>
    %cst_24 = arith.constant dense<0.000000e+00> : vector<328x128xf32>
    %40 = tpu.matmul %38, %39, %cst_24 {dimension_numbers = #tpu.dot_dimension_numbers<[1], [0], [0], [1], [0, 0, 1, 1], [], []>} : vector<328x128xf32>, vector<128x128xf32>, vector<328x128xf32> -> vector<328x128xf32>
    %41 = arith.addf %37, %40 : vector<328x128xf32>
    %c309_i32 = arith.constant 309 : i32
    %42 = tpu.dynamic_rotate %11 by %c309_i32 dim 0 : vector<328x128xf32>, i32 -> vector<328x128xf32>
    %c1024 = arith.constant 1024 : index
    %c0_25 = arith.constant 0 : index
    %43 = vector.load %arg6[%c1024, %c0_25] : memref<1152x128xf32, #tpu.memory_space<vmem>>, vector<128x128xf32>
    %cst_26 = arith.constant dense<0.000000e+00> : vector<328x128xf32>
    %44 = tpu.matmul %42, %43, %cst_26 {dimension_numbers = #tpu.dot_dimension_numbers<[1], [0], [0], [1], [0, 0, 1, 1], [], []>} : vector<328x128xf32>, vector<128x128xf32>, vector<328x128xf32> -> vector<328x128xf32>
    %45 = arith.addf %41, %44 : vector<328x128xf32>
    %c0_27 = arith.constant 0 : index
    %c0_28 = arith.constant 0 : index
    %46 = vector.load %arg7[%c0_27, %c0_28] : memref<8x128xf32, #tpu.memory_space<vmem>>, vector<8x128xf32>
    %47 = vector.extract_strided_slice %46 {offsets = [0, 0], sizes = [1, 128], strides = [1, 1]} : vector<8x128xf32> to vector<1x128xf32>
    %48 = vector.broadcast %47 : vector<1x128xf32> to vector<328x128xf32>
    %49 = arith.addf %45, %48 : vector<328x128xf32>
    %cst_29 = arith.constant 0.000000e+00 : f32
    %50 = vector.broadcast %cst_29 : f32 to vector<328x128xf32>
    %51 = arith.maximumf %49, %50 : vector<328x128xf32>
    %c0_30 = arith.constant 0 : index
    %c0_31 = arith.constant 0 : index
    %52 = vector.load %arg3[%c0_30, %c0_31] : memref<8x328xf32, #tpu.memory_space<vmem>>, vector<8x328xf32>
    %cst_32 = arith.constant dense<0.000000e+00> : vector<8x128xf32>
    %53 = tpu.matmul %52, %51, %cst_32 {dimension_numbers = #tpu.dot_dimension_numbers<[1], [0], [0], [1], [0, 0, 1, 1], [], []>} : vector<8x328xf32>, vector<328x128xf32>, vector<8x128xf32> -> vector<8x128xf32>
    %c0_33 = arith.constant 0 : index
    %c0_34 = arith.constant 0 : index
    %54 = vector.load %arg8[%c0_33, %c0_34] : memref<128x128xf32, #tpu.memory_space<vmem>>, vector<128x128xf32>
    %cst_35 = arith.constant dense<0.000000e+00> : vector<8x128xf32>
    %55 = tpu.matmul %53, %54, %cst_35 {dimension_numbers = #tpu.dot_dimension_numbers<[1], [0], [0], [1], [0, 0, 1, 1], [], []>} : vector<8x128xf32>, vector<128x128xf32>, vector<8x128xf32> -> vector<8x128xf32>
    %c0_36 = arith.constant 0 : index
    %c0_37 = arith.constant 0 : index
    %56 = vector.load %arg9[%c0_36, %c0_37] : memref<8x128xf32, #tpu.memory_space<vmem>>, vector<8x128xf32>
    %57 = arith.addf %55, %56 : vector<8x128xf32>
    %c0_38 = arith.constant 0 : index
    %c0_39 = arith.constant 0 : index
    %c0_40 = arith.constant 0 : index
    %58 = vector.load %arg10[%c0_38, %c0_39, %c0_40] : memref<1x8x128xf32, #tpu.memory_space<vmem>>, vector<1x8x128xf32>
    %59 = vector.shape_cast %58 : vector<1x8x128xf32> to vector<8x128xf32>
    %60 = vector.shape_cast %57 : vector<8x128xf32> to vector<1x8x128xf32>
    tpu.vector_store %arg10[%c0_38, %c0_39, %c0_40], %60 {strides = array<i32>} : memref<1x8x128xf32, #tpu.memory_space<vmem>>, vector<1x8x128xf32>,
    return
  }
  func.func @transform_0(%arg0: i32) -> (i32, i32) {
    %c0_i32 = arith.constant 0 : i32
    %c0_i32_0 = arith.constant 0 : i32
    return %arg0, %c0_i32 : i32, i32
  }
  func.func @transform_1(%arg0: i32) -> (i32, i32) {
    %c0_i32 = arith.constant 0 : i32
    %c0_i32_0 = arith.constant 0 : i32
    %c0_i32_1 = arith.constant 0 : i32
    return %c0_i32, %c0_i32_0 : i32, i32
  }
  func.func @transform_2(%arg0: i32) -> (i32, i32) {
    %c0_i32 = arith.constant 0 : i32
    %c0_i32_0 = arith.constant 0 : i32
    %c0_i32_1 = arith.constant 0 : i32
    return %c0_i32, %c0_i32_0 : i32, i32
  }
  func.func @transform_3(%arg0: i32) -> (i32, i32) {
    %c0_i32 = arith.constant 0 : i32
    %c0_i32_0 = arith.constant 0 : i32
    %c0_i32_1 = arith.constant 0 : i32
    return %c0_i32, %c0_i32_0 : i32, i32
  }
  func.func @transform_4(%arg0: i32) -> (i32, i32) {
    %c0_i32 = arith.constant 0 : i32
    %c0_i32_0 = arith.constant 0 : i32
    %c0_i32_1 = arith.constant 0 : i32
    return %c0_i32, %c0_i32_0 : i32, i32
  }
  func.func @transform_5(%arg0: i32) -> (i32, i32) {
    %c0_i32 = arith.constant 0 : i32
    %c0_i32_0 = arith.constant 0 : i32
    %c0_i32_1 = arith.constant 0 : i32
    return %c0_i32, %c0_i32_0 : i32, i32
  }
  func.func @transform_6(%arg0: i32) -> (i32, i32) {
    %c0_i32 = arith.constant 0 : i32
    %c0_i32_0 = arith.constant 0 : i32
    %c0_i32_1 = arith.constant 0 : i32
    return %c0_i32, %c0_i32_0 : i32, i32
  }
  func.func @transform_7(%arg0: i32) -> (i32, i32) {
    %c0_i32 = arith.constant 0 : i32
    %c0_i32_0 = arith.constant 0 : i32
    %c0_i32_1 = arith.constant 0 : i32
    return %c0_i32, %c0_i32_0 : i32, i32
  }
  func.func @transform_8(%arg0: i32) -> (i32, i32) {
    %c0_i32 = arith.constant 0 : i32
    %c0_i32_0 = arith.constant 0 : i32
    %c0_i32_1 = arith.constant 0 : i32
    return %c0_i32, %c0_i32_0 : i32, i32
  }
  func.func @transform_9(%arg0: i32) -> (i32, i32, i32) {
    %c0_i32 = arith.constant 0 : i32
    %c0_i32_0 = arith.constant 0 : i32
    %c0_i32_1 = arith.constant 0 : i32
    return %arg0, %c0_i32, %c0_i32_0 : i32, i32, i32
  }
}

</mosaic_0001>

<llo_original>
// kernel: a_call__.1
$region0: #{a_call__.1}
  #allocation0 [shape = 'u32[]', space=smem, size = 0x4, offset = 0x4, fixed_abs, tag = 'smem constant byte address 0x4 - core index']
  #allocation1 [shape = 'u32[144,128]{1,0:T(1,128)}', space=vmem, size = 0x12000, scoped, tag = 'internal scratch']
  %s0 = inlined_call_operand.vmem [shape: f32[656,128], index: 0, kind: input, shape index: {}]
  %s1 = inlined_call_operand.vmem [shape: f32[328,1], index: 1, kind: input, shape index: {}]
  %s2 = inlined_call_operand.vmem [shape: f32[8,328], index: 2, kind: input, shape index: {}]
  %s3 = inlined_call_operand.vmem [shape: f32[128,128], index: 3, kind: input, shape index: {}]
  %s4 = inlined_call_operand.vmem [shape: f32[8,128], index: 4, kind: input, shape index: {}, may-alias: {4,6,8}]
  %s5 = inlined_call_operand.vmem [shape: f32[1152,128], index: 5, kind: input, shape index: {}]
  %s6 = inlined_call_operand.vmem [shape: f32[8,128], index: 6, kind: input, shape index: {}, may-alias: {4,6,8}]
  %s7 = inlined_call_operand.vmem [shape: f32[128,128], index: 7, kind: input, shape index: {}]
  %s8 = inlined_call_operand.vmem [shape: f32[8,128], index: 8, kind: input, shape index: {}, may-alias: {4,6,8}]
  %s9 = inlined_call_operand.vmem [shape: f32[2,8,128], index: 9, kind: output, shape index: {}]
  %s10 = sld [smem:[#allocation0]]
  $region69: #{a_call__.1} parent=0
    _
  %s12 = ssub.s32 1, %s10
  %s13 = scalar_select 0, %s12, %s10
  loop: start=0, step=1, limit=4
  $region2: #{a_call__.1} parent=0 // loop_pre_header
    _
  $region3: #{a_call__.1} parent=0 // loop_header
    %s15 = sphi 0, %s19
    %p16 = scmp.ge.s32.totalorder %s15, 4
    %s25 = sphi 0, %s27
    %s28 = sphi 0, %s25
    %s29 = sphi 0, %s28
    %s45 = sphi 0, %s29
    %s49 = sphi 0, %s49
    %s51 = sphi 0, %s49
    %s52 = sphi 0, %s51
    %s66 = sphi 0, %s52
    %s70 = sphi 0, %s70
    %s72 = sphi 0, %s70
    %s73 = sphi 0, %s72
    %s87 = sphi 0, %s73
    %s91 = sphi 0, %s91
    %s93 = sphi 0, %s91
    %s94 = sphi 0, %s93
    %s108 = sphi 0, %s94
    %s112 = sphi 0, %s112
    %s114 = sphi 0, %s112
    %s115 = sphi 0, %s114
    %s129 = sphi 0, %s115
    %s133 = sphi 0, %s133
    %s135 = sphi 0, %s133
    %s136 = sphi 0, %s135
    %s150 = sphi 0, %s136
    %s154 = sphi 0, %s154
    %s156 = sphi 0, %s154
    %s157 = sphi 0, %s156
    %s171 = sphi 0, %s157
    %s175 = sphi 0, %s175
    %s177 = sphi 0, %s175
    %s178 = sphi 0, %s177
    %s192 = sphi 0, %s178
    %s196 = sphi 0, %s196
    %s198 = sphi 0, %s196
    %s199 = sphi 0, %s198
    %s213 = sphi 0, %s199
    %s219 = sphi 0, %s221
    %s222 = sphi 0, %s219
    %s223 = sphi 0, %s222
    %s239 = sphi 0, %s223
  $region4: #{a_call__.1} parent=0 // loop_header_branch
    %18 = sbr.rel (%p16) target = $region8
  $region5: #{a_call__.1} parent=0 // loop_body
    %s20 = ssub.s32 %s15, 1
    %s21 = ssub.s32 %s15, 2
    %s22 = sadd.s32 %s15, 1
    %s23 = ssub.s32 %s15, %s22
    %p24 = scmp.eq.s32.totalorder %s23, 0
    %s26 = sadd.s32 %s25, 1
    %s27 = scalar_select %p24, %s25, %s26
    %p30 = pneg %p24
    %p31 = scmp.eq.s32.totalorder %s15, 1
    %p32 = por %p30, %p31
    %p33 = scmp.ne.s32.totalorder %s25, %s28
    %p34 = scmp.eq.s32.totalorder %s15, 0
    %p35 = por %p33, %p34
    %p36 = scmp.ne.s32.totalorder %s25, %s28
    %p37 = scmp.eq.s32.totalorder %s20, 1
    %p38 = por %p36, %p37
    %p39 = scmp.ne.s32.totalorder %s28, %s29
    %p40 = scmp.eq.s32.totalorder %s20, 0
    %p41 = por %p39, %p40
    %p42 = scmp.ne.s32.totalorder %s28, %s29
    %p43 = scmp.eq.s32.totalorder %s21, 1
    %p44 = por %p42, %p43
    %p46 = scmp.ne.s32.totalorder %s29, %s45
    %p47 = scmp.eq.s32.totalorder %s21, 0
    %p48 = por %p46, %p47
    %s50 = sadd.s32 %s49, 1
    %p53 = scmp.eq.s32.totalorder %s15, 1
    %p54 = scmp.ne.s32.totalorder %s49, %s51
    %p55 = scmp.eq.s32.totalorder %s15, 0
    %p56 = por %p54, %p55
    %p57 = scmp.ne.s32.totalorder %s49, %s51
    %p58 = scmp.eq.s32.totalorder %s20, 1
    %p59 = por %p57, %p58
    %p60 = scmp.ne.s32.totalorder %s51, %s52
    %p61 = scmp.eq.s32.totalorder %s20, 0
    %p62 = por %p60, %p61
    %p63 = scmp.ne.s32.totalorder %s51, %s52
    %p64 = scmp.eq.s32.totalorder %s21, 1
    %p65 = por %p63, %p64
    %p67 = scmp.ne.s32.totalorder %s52, %s66
    %p68 = scmp.eq.s32.totalorder %s21, 0
    %p69 = por %p67, %p68
    %s71 = sadd.s32 %s70, 1
    %p74 = scmp.eq.s32.totalorder %s15, 1
    %p75 = scmp.ne.s32.totalorder %s70, %s72
    %p76 = scmp.eq.s32.totalorder %s15, 0
    %p77 = por %p75, %p76
    %p78 = scmp.ne.s32.totalorder %s70, %s72
    %p79 = scmp.eq.s32.totalorder %s20, 1
    %p80 = por %p78, %p79
    %p81 = scmp.ne.s32.totalorder %s72, %s73
    %p82 = scmp.eq.s32.totalorder %s20, 0
    %p83 = por %p81, %p82
    %p84 = scmp.ne.s32.totalorder %s72, %s73
    %p85 = scmp.eq.s32.totalorder %s21, 1
    %p86 = por %p84, %p85
    %p88 = scmp.ne.s32.totalorder %s73, %s87
    %p89 = scmp.eq.s32.totalorder %s21, 0
    %p90 = por %p88, %p89
    %s92 = sadd.s32 %s91, 1
    %p95 = scmp.eq.s32.totalorder %s15, 1
    %p96 = scmp.ne.s32.totalorder %s91, %s93
    %p97 = scmp.eq.s32.totalorder %s15, 0
    %p98 = por %p96, %p97
    %p99 = scmp.ne.s32.totalorder %s91, %s93
    %p100 = scmp.eq.s32.totalorder %s20, 1
    %p101 = por %p99, %p100
    %p102 = scmp.ne.s32.totalorder %s93, %s94
    %p103 = scmp.eq.s32.totalorder %s20, 0
    %p104 = por %p102, %p103
    %p105 = scmp.ne.s32.totalorder %s93, %s94
    %p106 = scmp.eq.s32.totalorder %s21, 1
    %p107 = por %p105, %p106
    %p109 = scmp.ne.s32.totalorder %s94, %s108
    %p110 = scmp.eq.s32.totalorder %s21, 0
    %p111 = por %p109, %p110
    %s113 = sadd.s32 %s112, 1
    %p116 = scmp.eq.s32.totalorder %s15, 1
    %p117 = scmp.ne.s32.totalorder %s112, %s114
    %p118 = scmp.eq.s32.totalorder %s15, 0
    %p119 = por %p117, %p118
    %p120 = scmp.ne.s32.totalorder %s112, %s114
    %p121 = scmp.eq.s32.totalorder %s20, 1
    %p122 = por %p120, %p121
    %p123 = scmp.ne.s32.totalorder %s114, %s115
    %p124 = scmp.eq.s32.totalorder %s20, 0
    %p125 = por %p123, %p124
    %p126 = scmp.ne.s32.totalorder %s114, %s115
    %p127 = scmp.eq.s32.totalorder %s21, 1
    %p128 = por %p126, %p127
    %p130 = scmp.ne.s32.totalorder %s115, %s129
    %p131 = scmp.eq.s32.totalorder %s21, 0
    %p132 = por %p130, %p131
    %s134 = sadd.s32 %s133, 1
    %p137 = scmp.eq.s32.totalorder %s15, 1
    %p138 = scmp.ne.s32.totalorder %s133, %s135
    %p139 = scmp.eq.s32.totalorder %s15, 0
    %p140 = por %p138, %p139
    %p141 = scmp.ne.s32.totalorder %s133, %s135
    %p142 = scmp.eq.s32.totalorder %s20, 1
    %p143 = por %p141, %p142
    %p144 = scmp.ne.s32.totalorder %s135, %s136
    %p145 = scmp.eq.s32.totalorder %s20, 0
    %p146 = por %p144, %p145
    %p147 = scmp.ne.s32.totalorder %s135, %s136
    %p148 = scmp.eq.s32.totalorder %s21, 1
    %p149 = por %p147, %p148
    %p151 = scmp.ne.s32.totalorder %s136, %s150
    %p152 = scmp.eq.s32.totalorder %s21, 0
    %p153 = por %p151, %p152
    %s155 = sadd.s32 %s154, 1
    %p158 = scmp.eq.s32.totalorder %s15, 1
    %p159 = scmp.ne.s32.totalorder %s154, %s156
    %p160 = scmp.eq.s32.totalorder %s15, 0
    %p161 = por %p159, %p160
    %p162 = scmp.ne.s32.totalorder %s154, %s156
    %p163 = scmp.eq.s32.totalorder %s20, 1
    %p164 = por %p162, %p163
    %p165 = scmp.ne.s32.totalorder %s156, %s157
    %p166 = scmp.eq.s32.totalorder %s20, 0
    %p167 = por %p165, %p166
    %p168 = scmp.ne.s32.totalorder %s156, %s157
    %p169 = scmp.eq.s32.totalorder %s21, 1
    %p170 = por %p168, %p169
    %p172 = scmp.ne.s32.totalorder %s157, %s171
    %p173 = scmp.eq.s32.totalorder %s21, 0
    %p174 = por %p172, %p173
    %s176 = sadd.s32 %s175, 1
    %p179 = scmp.eq.s32.totalorder %s15, 1
    %p180 = scmp.ne.s32.totalorder %s175, %s177
    %p181 = scmp.eq.s32.totalorder %s15, 0
    %p182 = por %p180, %p181
    %p183 = scmp.ne.s32.totalorder %s175, %s177
    %p184 = scmp.eq.s32.totalorder %s20, 1
    %p185 = por %p183, %p184
    %p186 = scmp.ne.s32.totalorder %s177, %s178
    %p187 = scmp.eq.s32.totalorder %s20, 0
    %p188 = por %p186, %p187
    %p189 = scmp.ne.s32.totalorder %s177, %s178
    %p190 = scmp.eq.s32.totalorder %s21, 1
    %p191 = por %p189, %p190
    %p193 = scmp.ne.s32.totalorder %s178, %s192
    %p194 = scmp.eq.s32.totalorder %s21, 0
    %p195 = por %p193, %p194
    %s197 = sadd.s32 %s196, 1
    %p200 = scmp.eq.s32.totalorder %s15, 1
    %p201 = scmp.ne.s32.totalorder %s196, %s198
    %p202 = scmp.eq.s32.totalorder %s15, 0
    %p203 = por %p201, %p202
    %p204 = scmp.ne.s32.totalorder %s196, %s198
    %p205 = scmp.eq.s32.totalorder %s20, 1
    %p206 = por %p204, %p205
    %p207 = scmp.ne.s32.totalorder %s198, %s199
    %p208 = scmp.eq.s32.totalorder %s20, 0
    %p209 = por %p207, %p208
    %p210 = scmp.ne.s32.totalorder %s198, %s199
    %p211 = scmp.eq.s32.totalorder %s21, 1
    %p212 = por %p210, %p211
    %p214 = scmp.ne.s32.totalorder %s199, %s213
    %p215 = scmp.eq.s32.totalorder %s21, 0
    %p216 = por %p214, %p215
    %s217 = ssub.s32 %s15, %s22
    %p218 = scmp.eq.s32.totalorder %s217, 0
    %s220 = sadd.s32 %s219, 1
    %s221 = scalar_select %p218, %s219, %s220
    %p224 = pneg %p218
    %p225 = scmp.eq.s32.totalorder %s15, 1
    %p226 = por %p224, %p225
    %p227 = scmp.ne.s32.totalorder %s219, %s222
    %p228 = scmp.eq.s32.totalorder %s15, 0
    %p229 = por %p227, %p228
    %p230 = scmp.ne.s32.totalorder %s219, %s222
    %p231 = scmp.eq.s32.totalorder %s20, 1
    %p232 = por %p230, %p231
    %p233 = scmp.ne.s32.totalorder %s222, %s223
    %p234 = scmp.eq.s32.totalorder %s20, 0
    %p235 = por %p233, %p234
    %p236 = scmp.ne.s32.totalorder %s222, %s223
    %p237 = scmp.eq.s32.totalorder %s21, 1
    %p238 = por %p236, %p237
    %p240 = scmp.ne.s32.totalorder %s223, %s239
    %p241 = scmp.eq.s32.totalorder %s21, 0
    %p242 = por %p240, %p241
    %p243 = scmp.le.s32.totalorder 1, %s15
    %p244 = scmp.lt.s32.totalorder %s15, 3
    %p245 = pnand %p243, %p244
    %p246 = pneg %p245
    // Predicated region
    $region9: #{a_call__.1} parent=5 // pred_check
      _
    $region10: #{a_call__.1} parent=5 // pred_check_branch
      %248 = sbr.rel (%p245) target = $region12
    $region11: #{a_call__.1} parent=5 // pred_region
      %s249 = ssub.s32 %s15, 1
      // Predicated region
      $region13: #{a_call__.1} parent=11 // pred_check
        %p250 = pneg %p62
      $region14: #{a_call__.1} parent=11 // pred_check_branch
        %252 = sbr.rel (%p250) target = $region16
      $region15: #{a_call__.1} parent=11 // pred_region
        _
      $region16: #{a_call__.1} parent=11 // pred_fallthru
        _
      // Predicated region
      $region17: #{a_call__.1} parent=11 // pred_check
        %p253 = pneg %p83
      $region18: #{a_call__.1} parent=11 // pred_check_branch
        %255 = sbr.rel (%p253) target = $region20
      $region19: #{a_call__.1} parent=11 // pred_region
        _
      $region20: #{a_call__.1} parent=11 // pred_fallthru
        _
      // Predicated region
      $region21: #{a_call__.1} parent=11 // pred_check
        %p256 = pneg %p104
      $region22: #{a_call__.1} parent=11 // pred_check_branch
        %258 = sbr.rel (%p256) target = $region24
      $region23: #{a_call__.1} parent=11 // pred_region
        _
      $region24: #{a_call__.1} parent=11 // pred_fallthru
        _
      // Predicated region
      $region25: #{a_call__.1} parent=11 // pred_check
        %p259 = pneg %p125
      $region26: #{a_call__.1} parent=11 // pred_check_branch
        %261 = sbr.rel (%p259) target = $region28
      $region27: #{a_call__.1} parent=11 // pred_region
        _
      $region28: #{a_call__.1} parent=11 // pred_fallthru
        _
      // Predicated region
      $region29: #{a_call__.1} parent=11 // pred_check
        %p262 = pneg %p146
      $region30: #{a_call__.1} parent=11 // pred_check_branch
        %264 = sbr.rel (%p262) target = $region32
      $region31: #{a_call__.1} parent=11 // pred_region
        _
      $region32: #{a_call__.1} parent=11 // pred_fallthru
        _
      // Predicated region
      $region33: #{a_call__.1} parent=11 // pred_check
        %p265 = pneg %p167
      $region34: #{a_call__.1} parent=11 // pred_check_branch
        %267 = sbr.rel (%p265) target = $region36
      $region35: #{a_call__.1} parent=11 // pred_region
        _
      $region36: #{a_call__.1} parent=11 // pred_fallthru
        _
      // Predicated region
      $region37: #{a_call__.1} parent=11 // pred_check
        %p268 = pneg %p188
      $region38: #{a_call__.1} parent=11 // pred_check_branch
        %270 = sbr.rel (%p268) target = $region40
      $region39: #{a_call__.1} parent=11 // pred_region
        _
      $region40: #{a_call__.1} parent=11 // pred_fallthru
        _
      // Predicated region
      $region41: #{a_call__.1} parent=11 // pred_check
        %p271 = pneg %p209
      $region42: #{a_call__.1} parent=11 // pred_check_branch
        %273 = sbr.rel (%p271) target = $region44
      $region43: #{a_call__.1} parent=11 // pred_region
        _
      $region44: #{a_call__.1} parent=11 // pred_fallthru
        _
    $region12: #{a_call__.1} parent=5 // pred_fallthru
      _
    %p274 = scmp.lt.s32.totalorder %s15, 2
    // Predicated region
    $region45: #{a_call__.1} parent=5 // pred_check
      %p275 = pneg %p274
    $region46: #{a_call__.1} parent=5 // pred_check_branch
      %277 = sbr.rel (%p275) target = $region48
    $region47: #{a_call__.1} parent=5 // pred_region
      // Predicated region
      $region49: #{a_call__.1} parent=47 // pred_check
        %p278 = pneg %p35
      $region50: #{a_call__.1} parent=47 // pred_check_branch
        %280 = sbr.rel (%p278) target = $region52
      $region51: #{a_call__.1} parent=47 // pred_region
        %s281 = smul.u32 41, %s15
        %p282 = scmp.lt.s32.totalorder %s281, 81
        %s283 = scalar_select %p282, %s281, 81
        %s284 = smul.addr %s283, 8
        %s285 = scalar_lea.vmem %s0, %s284
        %s286 = smul.u32 41, %s15
      $region52: #{a_call__.1} parent=47 // pred_fallthru
        _
    $region48: #{a_call__.1} parent=5 // pred_fallthru
      _
    %p287 = scmp.le.s32.totalorder 1, %s15
    %p288 = scmp.lt.s32.totalorder %s15, 3
    %p289 = pnand %p287, %p288
    %p290 = pneg %p289
    // Predicated region
    $region53: #{a_call__.1} parent=5 // pred_check
      _
    $region54: #{a_call__.1} parent=5 // pred_check_branch
      %292 = sbr.rel (%p289) target = $region56
    $region55: #{a_call__.1} parent=5 // pred_region
      %s293 = ssub.s32 %s15, 1
      %s294 = smul.u32 41, %s20
      %p295 = scmp.lt.s32.totalorder %s294, 81
      %s296 = scalar_select %p295, %s294, 81
      %s297 = smul.addr %s296, 8
      %s298 = scalar_lea.vmem %s0, %s297
      %p299 = pneg %p41
      %p300 = pneg %p38
      %p301 = pneg %p62
      %p302 = pneg %p59
      %p303 = pneg %p83
      %p304 = pneg %p80
      %p305 = pneg %p104
      %p306 = pneg %p101
      %p307 = pneg %p125
      %p308 = pneg %p122
      %p309 = pneg %p146
      %p310 = pneg %p143
      %p311 = pneg %p167
      %p312 = pneg %p164
      %p313 = pneg %p188
      %p314 = pneg %p185
      %p315 = pneg %p209
      %p316 = pneg %p206
      %p317 = pneg %p235
      %p318 = pneg %p232
      %p319 = scmp.lt.s32.totalorder %s20, 1
      %s320 = scalar_select %p319, %s20, 1
      %s321 = smul.addr %s320, 8
      %s322 = scalar_lea.vmem %s9, %s321
      %s323 = smul.u32 41, %s20
      %p324 = scmp.lt.s32.totalorder %s323, 81
      %s325 = scalar_select %p324, %s323, 81
      %s326 = smul.addr %s325, 8
      %s327 = scalar_lea.vmem %s0, %s326
      %s328 = smul.u32 41, %s20
      %p329 = scmp.lt.s32.totalorder %s20, 1
      %s330 = scalar_select %p329, %s20, 1
      %s331 = smul.addr %s330, 8
      %s332 = scalar_lea.vmem %s9, %s331
      %v333 = vld [vmem:[%s327] sm:$0xff]
      %v334 = vld [vmem:[%s327 + $0x8] sm:$0xff]
      %v335 = vld [vmem:[%s327 + $0x10] sm:$0xff]
      %v336 = vld [vmem:[%s327 + $0x18] sm:$0xff]
      %v337 = vld [vmem:[%s327 + $0x20] sm:$0xff]
      %v338 = vld [vmem:[%s327 + $0x28] sm:$0xff]
      %v339 = vld [vmem:[%s327 + $0x30] sm:$0xff]
      %v340 = vld [vmem:[%s327 + $0x38] sm:$0xff]
      %v341 = vld [vmem:[%s327 + $0x40] sm:$0xff]
      %v342 = vld [vmem:[%s327 + $0x48] sm:$0xff]
      %v343 = vld [vmem:[%s327 + $0x50] sm:$0xff]
      %v344 = vld [vmem:[%s327 + $0x58] sm:$0xff]
      %v345 = vld [vmem:[%s327 + $0x60] sm:$0xff]
      %v346 = vld [vmem:[%s327 + $0x68] sm:$0xff]
      %v347 = vld [vmem:[%s327 + $0x70] sm:$0xff]
      %v348 = vld [vmem:[%s327 + $0x78] sm:$0xff]
      %v349 = vld [vmem:[%s327 + $0x80] sm:$0xff]
      %v350 = vld [vmem:[%s327 + $0x88] sm:$0xff]
      %v351 = vld [vmem:[%s327 + $0x90] sm:$0xff]
      %v352 = vld [vmem:[%s327 + $0x98] sm:$0xff]
      %v353 = vld [vmem:[%s327 + $0xa0] sm:$0xff]
      %v354 = vld [vmem:[%s327 + $0xa8] sm:$0xff]
      %v355 = vld [vmem:[%s327 + $0xb0] sm:$0xff]
      %v356 = vld [vmem:[%s327 + $0xb8] sm:$0xff]
      %v357 = vld [vmem:[%s327 + $0xc0] sm:$0xff]
      %v358 = vld [vmem:[%s327 + $0xc8] sm:$0xff]
      %v359 = vld [vmem:[%s327 + $0xd0] sm:$0xff]
      %v360 = vld [vmem:[%s327 + $0xd8] sm:$0xff]
      %v361 = vld [vmem:[%s327 + $0xe0] sm:$0xff]
      %v362 = vld [vmem:[%s327 + $0xe8] sm:$0xff]
      %v363 = vld [vmem:[%s327 + $0xf0] sm:$0xff]
      %v364 = vld [vmem:[%s327 + $0xf8] sm:$0xff]
      %v365 = vld [vmem:[%s327 + $0x100] sm:$0xff]
      %v366 = vld [vmem:[%s327 + $0x108] sm:$0xff]
      %v367 = vld [vmem:[%s327 + $0x110] sm:$0xff]
      %v368 = vld [vmem:[%s327 + $0x118] sm:$0xff]
      %v369 = vld [vmem:[%s327 + $0x120] sm:$0xff]
      %v370 = vld [vmem:[%s327 + $0x128] sm:$0xff]
      %v371 = vld [vmem:[%s327 + $0x130] sm:$0xff]
      %v372 = vld [vmem:[%s327 + $0x138] sm:$0xff]
      %v373 = vld [vmem:[%s327 + $0x140] sm:$0xff]
      %v374 = vld [vmem:[%s3] sm:$0xff]
      %v375 = vld [vmem:[%s3 + $0x8] sm:$0xff]
      %v376 = vld [vmem:[%s3 + $0x10] sm:$0xff]
      %v377 = vld [vmem:[%s3 + $0x18] sm:$0xff]
      %v378 = vld [vmem:[%s3 + $0x20] sm:$0xff]
      %v379 = vld [vmem:[%s3 + $0x28] sm:$0xff]
      %v380 = vld [vmem:[%s3 + $0x30] sm:$0xff]
      %v381 = vld [vmem:[%s3 + $0x38] sm:$0xff]
      %v382 = vld [vmem:[%s3 + $0x40] sm:$0xff]
      %v383 = vld [vmem:[%s3 + $0x48] sm:$0xff]
      %v384 = vld [vmem:[%s3 + $0x50] sm:$0xff]
      %v385 = vld [vmem:[%s3 + $0x58] sm:$0xff]
      %v386 = vld [vmem:[%s3 + $0x60] sm:$0xff]
      %v387 = vld [vmem:[%s3 + $0x68] sm:$0xff]
      %v388 = vld [vmem:[%s3 + $0x70] sm:$0xff]
      %v389 = vld [vmem:[%s3 + $0x78] sm:$0xff]
      %v390 = vld [vmem:[%s4] sm:$0xff]
      %v391 = vlaneseq
      %v392 = vshrl.u32 %v391, 7
      %v393 = vsub.s32 0, %v392
      %v394 = vrot.slane %v390, %v393
      %395 = vmatprep.subr.mxu0 0.0
      %396 = vmatpush1.msra.mxu0 %v389
      %397 = vmatprep.subr.mxu0 0.0
      %398 = vmatpush1.msra.mxu0 %v388
      %399 = vmatprep.subr.mxu0 0.0
      %400 = vmatpush1.msra.mxu0 %v387
      %401 = vmatprep.subr.mxu0 0.0
      %402 = vmatpush1.msra.mxu0 %v386
      %403 = vmatprep.subr.mxu0 0.0
      %404 = vmatpush1.msra.mxu0 %v385
      %405 = vmatprep.subr.mxu0 0.0
      %406 = vmatpush1.msra.mxu0 %v384
      %407 = vmatprep.subr.mxu0 0.0
      %408 = vmatpush1.msra.mxu0 %v383
      %409 = vmatprep.subr.mxu0 0.0
      %410 = vmatpush1.msra.mxu0 %v382
      %411 = vmatprep.subr.mxu0 0.0
      %412 = vmatpush1.msra.mxu0 %v381
      %413 = vmatprep.subr.mxu0 0.0
      %414 = vmatpush1.msra.mxu0 %v380
      %415 = vmatprep.subr.mxu0 0.0
      %416 = vmatpush1.msra.mxu0 %v379
      %417 = vmatprep.subr.mxu0 0.0
      %418 = vmatpush1.msra.mxu0 %v378
      %419 = vmatprep.subr.mxu0 0.0
      %420 = vmatpush1.msra.mxu0 %v377
      %421 = vmatprep.subr.mxu0 0.0
      %422 = vmatpush1.msra.mxu0 %v376
      %423 = vmatprep.subr.mxu0 0.0
      %424 = vmatpush1.msra.mxu0 %v375
      %425 = vmatprep.subr.mxu0 0.0
      %426 = vmatpush1.msra.mxu0 %v374
      %427 = vmatprep.subr.mxu0 0.0
      %428 = vmatpush2.msra.mxu0 0.0
      %429 = vmatprep.subr.mxu0 0.0
      %430 = vmatpush2.msra.mxu0 0.0
      %431 = vmatprep.subr.mxu0 0.0
      %432 = vmatpush2.msra.mxu0 0.0
      %433 = vmatprep.subr.mxu0 0.0
      %434 = vmatpush2.msra.mxu0 0.0
      %435 = vmatprep.subr.mxu0 0.0
      %436 = vmatpush2.msra.mxu0 0.0
      %437 = vmatprep.subr.mxu0 0.0
      %438 = vmatpush2.msra.mxu0 0.0
      %439 = vmatprep.subr.mxu0 0.0
      %440 = vmatpush2.msra.mxu0 0.0
      %441 = vmatprep.subr.mxu0 0.0
      %442 = vmatpush2.msra.mxu0 0.0
      %443 = vmatprep.subr.mxu0 0.0
      %444 = vmatpush2.msra.mxu0 0.0
      %445 = vmatprep.subr.mxu0 0.0
      %446 = vmatpush2.msra.mxu0 0.0
      %447 = vmatprep.subr.mxu0 0.0
      %448 = vmatpush2.msra.mxu0 0.0
      %449 = vmatprep.subr.mxu0 0.0
      %450 = vmatpush2.msra.mxu0 0.0
      %451 = vmatprep.subr.mxu0 0.0
      %452 = vmatpush2.msra.mxu0 0.0
      %453 = vmatprep.subr.mxu0 0.0
      %454 = vmatpush2.msra.mxu0 0.0
      %455 = vmatprep.subr.mxu0 0.0
      %456 = vmatpush2.msra.mxu0 0.0
      %457 = vmatprep.subr.mxu0 0.0
      %458 = vmatpush2.msra.mxu0 0.0
      %459 = vmatprep.mubr.f32.mxu0 0.0
      %460 = vmatmul.mubr.f32.gmra.mxu0 %v333
      %v461 = vpop.f32.mrf.mxu0
      %v462 = vadd.f32 %v394, %v461
      %v463 = vpop.f32.mrf.mxu0
      %464 = vmatprep.mubr.f32.mxu0 0.0
      %465 = vmatmul.mubr.f32.gmra.mxu0 %v334
      %v466 = vpop.f32.mrf.mxu0
      %v467 = vadd.f32 %v394, %v466
      %v468 = vpop.f32.mrf.mxu0
      %469 = vmatprep.mubr.f32.mxu0 0.0
      %470 = vmatmul.mubr.f32.gmra.mxu0 %v335
      %v471 = vpop.f32.mrf.mxu0
      %v472 = vadd.f32 %v394, %v471
      %v473 = vpop.f32.mrf.mxu0
      %474 = vmatprep.mubr.f32.mxu0 0.0
      %475 = vmatmul.mubr.f32.gmra.mxu0 %v336
      %v476 = vpop.f32.mrf.mxu0
      %v477 = vadd.f32 %v394, %v476
      %v478 = vpop.f32.mrf.mxu0
      %479 = vmatprep.mubr.f32.mxu0 0.0
      %480 = vmatmul.mubr.f32.gmra.mxu0 %v337
      %v481 = vpop.f32.mrf.mxu0
      %v482 = vadd.f32 %v394, %v481
      %v483 = vpop.f32.mrf.mxu0
      %484 = vmatprep.mubr.f32.mxu0 0.0
      %485 = vmatmul.mubr.f32.gmra.mxu0 %v338
      %v486 = vpop.f32.mrf.mxu0
      %v487 = vadd.f32 %v394, %v486
      %v488 = vpop.f32.mrf.mxu0
      %489 = vmatprep.mubr.f32.mxu0 0.0
      %490 = vmatmul.mubr.f32.gmra.mxu0 %v339
      %v491 = vpop.f32.mrf.mxu0
      %v492 = vadd.f32 %v394, %v491
      %v493 = vpop.f32.mrf.mxu0
      %494 = vmatprep.mubr.f32.mxu0 0.0
      %495 = vmatmul.mubr.f32.gmra.mxu0 %v340
      %v496 = vpop.f32.mrf.mxu0
      %v497 = vadd.f32 %v394, %v496
      %v498 = vpop.f32.mrf.mxu0
      %499 = vmatprep.mubr.f32.mxu0 0.0
      %500 = vmatmul.mubr.f32.gmra.mxu0 %v341
      %v501 = vpop.f32.mrf.mxu0
      %v502 = vadd.f32 %v394, %v501
      %v503 = vpop.f32.mrf.mxu0
      %504 = vmatprep.mubr.f32.mxu0 0.0
      %505 = vmatmul.mubr.f32.gmra.mxu0 %v342
      %v506 = vpop.f32.mrf.mxu0
      %v507 = vadd.f32 %v394, %v506
      %v508 = vpop.f32.mrf.mxu0
      %509 = vmatprep.mubr.f32.mxu0 0.0
      %510 = vmatmul.mubr.f32.gmra.mxu0 %v343
      %v511 = vpop.f32.mrf.mxu0
      %v512 = vadd.f32 %v394, %v511
      %v513 = vpop.f32.mrf.mxu0
      %514 = vmatprep.mubr.f32.mxu0 0.0
      %515 = vmatmul.mubr.f32.gmra.mxu0 %v344
      %v516 = vpop.f32.mrf.mxu0
      %v517 = vadd.f32 %v394, %v516
      %v518 = vpop.f32.mrf.mxu0
      %519 = vmatprep.mubr.f32.mxu0 0.0
      %520 = vmatmul.mubr.f32.gmra.mxu0 %v345
      %v521 = vpop.f32.mrf.mxu0
      %v522 = vadd.f32 %v394, %v521
      %v523 = vpop.f32.mrf.mxu0
      %524 = vmatprep.mubr.f32.mxu0 0.0
      %525 = vmatmul.mubr.f32.gmra.mxu0 %v346
      %v526 = vpop.f32.mrf.mxu0
      %v527 = vadd.f32 %v394, %v526
      %v528 = vpop.f32.mrf.mxu0
      %529 = vmatprep.mubr.f32.mxu0 0.0
      %530 = vmatmul.mubr.f32.gmra.mxu0 %v347
      %v531 = vpop.f32.mrf.mxu0
      %v532 = vadd.f32 %v394, %v531
      %v533 = vpop.f32.mrf.mxu0
      %534 = vmatprep.mubr.f32.mxu0 0.0
      %535 = vmatmul.mubr.f32.gmra.mxu0 %v348
      %v536 = vpop.f32.mrf.mxu0
      %v537 = vadd.f32 %v394, %v536
      %v538 = vpop.f32.mrf.mxu0
      %539 = vmatprep.mubr.f32.mxu0 0.0
      %540 = vmatmul.mubr.f32.gmra.mxu0 %v349
      %v541 = vpop.f32.mrf.mxu0
      %v542 = vadd.f32 %v394, %v541
      %v543 = vpop.f32.mrf.mxu0
      %544 = vmatprep.mubr.f32.mxu0 0.0
      %545 = vmatmul.mubr.f32.gmra.mxu0 %v350
      %v546 = vpop.f32.mrf.mxu0
      %v547 = vadd.f32 %v394, %v546
      %v548 = vpop.f32.mrf.mxu0
      %549 = vmatprep.mubr.f32.mxu0 0.0
      %550 = vmatmul.mubr.f32.gmra.mxu0 %v351
      %v551 = vpop.f32.mrf.mxu0
      %v552 = vadd.f32 %v394, %v551
      %v553 = vpop.f32.mrf.mxu0
      %554 = vmatprep.mubr.f32.mxu0 0.0
      %555 = vmatmul.mubr.f32.gmra.mxu0 %v352
      %v556 = vpop.f32.mrf.mxu0
      %v557 = vadd.f32 %v394, %v556
      %v558 = vpop.f32.mrf.mxu0
      %559 = vmatprep.mubr.f32.mxu0 0.0
      %560 = vmatmul.mubr.f32.gmra.mxu0 %v353
      %v561 = vpop.f32.mrf.mxu0
      %v562 = vadd.f32 %v394, %v561
      %v563 = vpop.f32.mrf.mxu0
      %564 = vmatprep.mubr.f32.mxu0 0.0
      %565 = vmatmul.mubr.f32.gmra.mxu0 %v354
      %v566 = vpop.f32.mrf.mxu0
      %v567 = vadd.f32 %v394, %v566
      %v568 = vpop.f32.mrf.mxu0
      %569 = vmatprep.mubr.f32.mxu0 0.0
      %570 = vmatmul.mubr.f32.gmra.mxu0 %v355
      %v571 = vpop.f32.mrf.mxu0
      %v572 = vadd.f32 %v394, %v571
      %v573 = vpop.f32.mrf.mxu0
      %574 = vmatprep.mubr.f32.mxu0 0.0
      %575 = vmatmul.mubr.f32.gmra.mxu0 %v356
      %v576 = vpop.f32.mrf.mxu0
      %v577 = vadd.f32 %v394, %v576
      %v578 = vpop.f32.mrf.mxu0
      %579 = vmatprep.mubr.f32.mxu0 0.0
      %580 = vmatmul.mubr.f32.gmra.mxu0 %v357
      %v581 = vpop.f32.mrf.mxu0
      %v582 = vadd.f32 %v394, %v581
      %v583 = vpop.f32.mrf.mxu0
      %584 = vmatprep.mubr.f32.mxu0 0.0
      %585 = vmatmul.mubr.f32.gmra.mxu0 %v358
      %v586 = vpop.f32.mrf.mxu0
      %v587 = vadd.f32 %v394, %v586
      %v588 = vpop.f32.mrf.mxu0
      %589 = vmatprep.mubr.f32.mxu0 0.0
      %590 = vmatmul.mubr.f32.gmra.mxu0 %v359
      %v591 = vpop.f32.mrf.mxu0
      %v592 = vadd.f32 %v394, %v591
      %v593 = vpop.f32.mrf.mxu0
      %594 = vmatprep.mubr.f32.mxu0 0.0
      %595 = vmatmul.mubr.f32.gmra.mxu0 %v360
      %v596 = vpop.f32.mrf.mxu0
      %v597 = vadd.f32 %v394, %v596
      %v598 = vpop.f32.mrf.mxu0
      %599 = vmatprep.mubr.f32.mxu0 0.0
      %600 = vmatmul.mubr.f32.gmra.mxu0 %v361
      %v601 = vpop.f32.mrf.mxu0
      %v602 = vadd.f32 %v394, %v601
      %v603 = vpop.f32.mrf.mxu0
      %604 = vmatprep.mubr.f32.mxu0 0.0
      %605 = vmatmul.mubr.f32.gmra.mxu0 %v362
      %v606 = vpop.f32.mrf.mxu0
      %v607 = vadd.f32 %v394, %v606
      %v608 = vpop.f32.mrf.mxu0
      %609 = vmatprep.mubr.f32.mxu0 0.0
      %610 = vmatmul.mubr.f32.gmra.mxu0 %v363
      %v611 = vpop.f32.mrf.mxu0
      %v612 = vadd.f32 %v394, %v611
      %v613 = vpop.f32.mrf.mxu0
      %614 = vmatprep.mubr.f32.mxu0 0.0
      %615 = vmatmul.mubr.f32.gmra.mxu0 %v364
      %v616 = vpop.f32.mrf.mxu0
      %v617 = vadd.f32 %v394, %v616
      %v618 = vpop.f32.mrf.mxu0
      %619 = vmatprep.mubr.f32.mxu0 0.0
      %620 = vmatmul.mubr.f32.gmra.mxu0 %v365
      %v621 = vpop.f32.mrf.mxu0
      %v622 = vadd.f32 %v394, %v621
      %v623 = vpop.f32.mrf.mxu0
      %624 = vmatprep.mubr.f32.mxu0 0.0
      %625 = vmatmul.mubr.f32.gmra.mxu0 %v366
      %v626 = vpop.f32.mrf.mxu0
      %v627 = vadd.f32 %v394, %v626
      %v628 = vpop.f32.mrf.mxu0
      %629 = vmatprep.mubr.f32.mxu0 0.0
      %630 = vmatmul.mubr.f32.gmra.mxu0 %v367
      %v631 = vpop.f32.mrf.mxu0
      %v632 = vadd.f32 %v394, %v631
      %v633 = vpop.f32.mrf.mxu0
      %634 = vmatprep.mubr.f32.mxu0 0.0
      %635 = vmatmul.mubr.f32.gmra.mxu0 %v368
      %v636 = vpop.f32.mrf.mxu0
      %v637 = vadd.f32 %v394, %v636
      %v638 = vpop.f32.mrf.mxu0
      %639 = vmatprep.mubr.f32.mxu0 0.0
      %640 = vmatmul.mubr.f32.gmra.mxu0 %v369
      %v641 = vpop.f32.mrf.mxu0
      %v642 = vadd.f32 %v394, %v641
      %v643 = vpop.f32.mrf.mxu0
      %644 = vmatprep.mubr.f32.mxu0 0.0
      %645 = vmatmul.mubr.f32.gmra.mxu0 %v370
      %v646 = vpop.f32.mrf.mxu0
      %v647 = vadd.f32 %v394, %v646
      %v648 = vpop.f32.mrf.mxu0
      %649 = vmatprep.mubr.f32.mxu0 0.0
      %650 = vmatmul.mubr.f32.gmra.mxu0 %v371
      %v651 = vpop.f32.mrf.mxu0
      %v652 = vadd.f32 %v394, %v651
      %v653 = vpop.f32.mrf.mxu0
      %654 = vmatprep.mubr.f32.mxu0 0.0
      %655 = vmatmul.mubr.f32.gmra.mxu0 %v372
      %v656 = vpop.f32.mrf.mxu0
      %v657 = vadd.f32 %v394, %v656
      %v658 = vpop.f32.mrf.mxu0
      %659 = vmatprep.mubr.f32.mxu0 0.0
      %660 = vmatmul.mubr.f32.gmra.mxu0 %v373
      %v661 = vpop.f32.mrf.mxu0
      %v662 = vadd.f32 %v394, %v661
      %v663 = vpop.f32.mrf.mxu0
      %664 = vdwg.mxu0
      %v665 = vmax.f32 %v462, 0.0
      %v666 = vmax.f32 %v467, 0.0
      %v667 = vmax.f32 %v472, 0.0
      %v668 = vmax.f32 %v477, 0.0
      %v669 = vmax.f32 %v482, 0.0
      %v670 = vmax.f32 %v487, 0.0
      %v671 = vmax.f32 %v492, 0.0
      %v672 = vmax.f32 %v497, 0.0
      %v673 = vmax.f32 %v502, 0.0
      %v674 = vmax.f32 %v507, 0.0
      %v675 = vmax.f32 %v512, 0.0
      %v676 = vmax.f32 %v517, 0.0
      %v677 = vmax.f32 %v522, 0.0
      %v678 = vmax.f32 %v527, 0.0
      %v679 = vmax.f32 %v532, 0.0
      %v680 = vmax.f32 %v537, 0.0
      %v681 = vmax.f32 %v542, 0.0
      %v682 = vmax.f32 %v547, 0.0
      %v683 = vmax.f32 %v552, 0.0
      %v684 = vmax.f32 %v557, 0.0
      %v685 = vmax.f32 %v562, 0.0
      %v686 = vmax.f32 %v567, 0.0
      %v687 = vmax.f32 %v572, 0.0
      %v688 = vmax.f32 %v577, 0.0
      %v689 = vmax.f32 %v582, 0.0
      %v690 = vmax.f32 %v587, 0.0
      %v691 = vmax.f32 %v592, 0.0
      %v692 = vmax.f32 %v597, 0.0
      %v693 = vmax.f32 %v602, 0.0
      %v694 = vmax.f32 %v607, 0.0
      %v695 = vmax.f32 %v612, 0.0
      %v696 = vmax.f32 %v617, 0.0
      %v697 = vmax.f32 %v622, 0.0
      %v698 = vmax.f32 %v627, 0.0
      %v699 = vmax.f32 %v632, 0.0
      %v700 = vmax.f32 %v637, 0.0
      %v701 = vmax.f32 %v642, 0.0
      %v702 = vmax.f32 %v647, 0.0
      %v703 = vmax.f32 %v652, 0.0
      %v704 = vmax.f32 %v657, 0.0
      %v705 = vmax.f32 %v662, 0.0
      %v706 = vld [vmem:[%s1] sm:$0xff]
      %v707 = vld [vmem:[%s1 + $0x8] sm:$0xff]
      %v708 = vld [vmem:[%s1 + $0x10] sm:$0xff]
      %v709 = vld [vmem:[%s1 + $0x18] sm:$0xff]
      %v710 = vld [vmem:[%s1 + $0x20] sm:$0xff]
      %v711 = vld [vmem:[%s1 + $0x28] sm:$0xff]
      %v712 = vld [vmem:[%s1 + $0x30] sm:$0xff]
      %v713 = vld [vmem:[%s1 + $0x38] sm:$0xff]
      %v714 = vld [vmem:[%s1 + $0x40] sm:$0xff]
      %v715 = vld [vmem:[%s1 + $0x48] sm:$0xff]
      %v716 = vld [vmem:[%s1 + $0x50] sm:$0xff]
      %v717 = vld [vmem:[%s1 + $0x58] sm:$0xff]
      %v718 = vld [vmem:[%s1 + $0x60] sm:$0xff]
      %v719 = vld [vmem:[%s1 + $0x68] sm:$0xff]
      %v720 = vld [vmem:[%s1 + $0x70] sm:$0xff]
      %v721 = vld [vmem:[%s1 + $0x78] sm:$0xff]
      %v722 = vld [vmem:[%s1 + $0x80] sm:$0xff]
      %v723 = vld [vmem:[%s1 + $0x88] sm:$0xff]
      %v724 = vld [vmem:[%s1 + $0x90] sm:$0xff]
      %v725 = vld [vmem:[%s1 + $0x98] sm:$0xff]
      %v726 = vld [vmem:[%s1 + $0xa0] sm:$0xff]
      %v727 = vld [vmem:[%s1 + $0xa8] sm:$0xff]
      %v728 = vld [vmem:[%s1 + $0xb0] sm:$0xff]
      %v729 = vld [vmem:[%s1 + $0xb8] sm:$0xff]
      %v730 = vld [vmem:[%s1 + $0xc0] sm:$0xff]
      %v731 = vld [vmem:[%s1 + $0xc8] sm:$0xff]
      %v732 = vld [vmem:[%s1 + $0xd0] sm:$0xff]
      %v733 = vld [vmem:[%s1 + $0xd8] sm:$0xff]
      %v734 = vld [vmem:[%s1 + $0xe0] sm:$0xff]
      %v735 = vld [vmem:[%s1 + $0xe8] sm:$0xff]
      %v736 = vld [vmem:[%s1 + $0xf0] sm:$0xff]
      %v737 = vld [vmem:[%s1 + $0xf8] sm:$0xff]
      %v738 = vld [vmem:[%s1 + $0x100] sm:$0xff]
      %v739 = vld [vmem:[%s1 + $0x108] sm:$0xff]
      %v740 = vld [vmem:[%s1 + $0x110] sm:$0xff]
      %v741 = vld [vmem:[%s1 + $0x118] sm:$0xff]
      %v742 = vld [vmem:[%s1 + $0x120] sm:$0xff]
      %v743 = vld [vmem:[%s1 + $0x128] sm:$0xff]
      %v744 = vld [vmem:[%s1 + $0x130] sm:$0xff]
      %v745 = vld [vmem:[%s1 + $0x138] sm:$0xff]
      %v746 = vld [vmem:[%s1 + $0x140] sm:$0xff]
      %748 = vset.pattern.permute.xlu0 0
      %749 = vperm.xlu0 %748, %v706
      %v750 = vpop.permute.xlu0 %749
      %753 = vset.pattern.permute.xlu0 0
      %754 = vperm.xlu0 %753, %v707
      %v755 = vpop.permute.xlu0 %754
      %758 = vset.pattern.permute.xlu0 0
      %759 = vperm.xlu0 %758, %v708
      %v760 = vpop.permute.xlu0 %759
      %763 = vset.pattern.permute.xlu0 0
      %764 = vperm.xlu0 %763, %v709
      %v765 = vpop.permute.xlu0 %764
      %768 = vset.pattern.permute.xlu0 0
      %769 = vperm.xlu0 %768, %v710
      %v770 = vpop.permute.xlu0 %769
      %773 = vset.pattern.permute.xlu0 0
      %774 = vperm.xlu0 %773, %v711
      %v775 = vpop.permute.xlu0 %774
      %778 = vset.pattern.permute.xlu0 0
      %779 = vperm.xlu0 %778, %v712
      %v780 = vpop.permute.xlu0 %779
      %783 = vset.pattern.permute.xlu0 0
      %784 = vperm.xlu0 %783, %v713
      %v785 = vpop.permute.xlu0 %784
      %788 = vset.pattern.permute.xlu0 0
      %789 = vperm.xlu0 %788, %v714
      %v790 = vpop.permute.xlu0 %789
      %793 = vset.pattern.permute.xlu0 0
      %794 = vperm.xlu0 %793, %v715
      %v795 = vpop.permute.xlu0 %794
      %798 = vset.pattern.permute.xlu0 0
      %799 = vperm.xlu0 %798, %v716
      %v800 = vpop.permute.xlu0 %799
      %803 = vset.pattern.permute.xlu0 0
      %804 = vperm.xlu0 %803, %v717
      %v805 = vpop.permute.xlu0 %804
      %808 = vset.pattern.permute.xlu0 0
      %809 = vperm.xlu0 %808, %v718
      %v810 = vpop.permute.xlu0 %809
      %813 = vset.pattern.permute.xlu0 0
      %814 = vperm.xlu0 %813, %v719
      %v815 = vpop.permute.xlu0 %814
      %818 = vset.pattern.permute.xlu0 0
      %819 = vperm.xlu0 %818, %v720
      %v820 = vpop.permute.xlu0 %819
      %823 = vset.pattern.permute.xlu0 0
      %824 = vperm.xlu0 %823, %v721
      %v825 = vpop.permute.xlu0 %824
      %828 = vset.pattern.permute.xlu0 0
      %829 = vperm.xlu0 %828, %v722
      %v830 = vpop.permute.xlu0 %829
      %833 = vset.pattern.permute.xlu0 0
      %834 = vperm.xlu0 %833, %v723
      %v835 = vpop.permute.xlu0 %834
      %838 = vset.pattern.permute.xlu0 0
      %839 = vperm.xlu0 %838, %v724
      %v840 = vpop.permute.xlu0 %839
      %843 = vset.pattern.permute.xlu0 0
      %844 = vperm.xlu0 %843, %v725
      %v845 = vpop.permute.xlu0 %844
      %848 = vset.pattern.permute.xlu0 0
      %849 = vperm.xlu0 %848, %v726
      %v850 = vpop.permute.xlu0 %849
      %853 = vset.pattern.permute.xlu0 0
      %854 = vperm.xlu0 %853, %v727
      %v855 = vpop.permute.xlu0 %854
      %858 = vset.pattern.permute.xlu0 0
      %859 = vperm.xlu0 %858, %v728
      %v860 = vpop.permute.xlu0 %859
      %863 = vset.pattern.permute.xlu0 0
      %864 = vperm.xlu0 %863, %v729
      %v865 = vpop.permute.xlu0 %864
      %868 = vset.pattern.permute.xlu0 0
      %869 = vperm.xlu0 %868, %v730
      %v870 = vpop.permute.xlu0 %869
      %873 = vset.pattern.permute.xlu0 0
      %874 = vperm.xlu0 %873, %v731
      %v875 = vpop.permute.xlu0 %874
      %878 = vset.pattern.permute.xlu0 0
      %879 = vperm.xlu0 %878, %v732
      %v880 = vpop.permute.xlu0 %879
      %883 = vset.pattern.permute.xlu0 0
      %884 = vperm.xlu0 %883, %v733
      %v885 = vpop.permute.xlu0 %884
      %888 = vset.pattern.permute.xlu0 0
      %889 = vperm.xlu0 %888, %v734
      %v890 = vpop.permute.xlu0 %889
      %893 = vset.pattern.permute.xlu0 0
      %894 = vperm.xlu0 %893, %v735
      %v895 = vpop.permute.xlu0 %894
      %898 = vset.pattern.permute.xlu0 0
      %899 = vperm.xlu0 %898, %v736
      %v900 = vpop.permute.xlu0 %899
      %903 = vset.pattern.permute.xlu0 0
      %904 = vperm.xlu0 %903, %v737
      %v905 = vpop.permute.xlu0 %904
      %908 = vset.pattern.permute.xlu0 0
      %909 = vperm.xlu0 %908, %v738
      %v910 = vpop.permute.xlu0 %909
      %913 = vset.pattern.permute.xlu0 0
      %914 = vperm.xlu0 %913, %v739
      %v915 = vpop.permute.xlu0 %914
      %918 = vset.pattern.permute.xlu0 0
      %919 = vperm.xlu0 %918, %v740
      %v920 = vpop.permute.xlu0 %919
      %923 = vset.pattern.permute.xlu0 0
      %924 = vperm.xlu0 %923, %v741
      %v925 = vpop.permute.xlu0 %924
      %928 = vset.pattern.permute.xlu0 0
      %929 = vperm.xlu0 %928, %v742
      %v930 = vpop.permute.xlu0 %929
      %933 = vset.pattern.permute.xlu0 0
      %934 = vperm.xlu0 %933, %v743
      %v935 = vpop.permute.xlu0 %934
      %938 = vset.pattern.permute.xlu0 0
      %939 = vperm.xlu0 %938, %v744
      %v940 = vpop.permute.xlu0 %939
      %943 = vset.pattern.permute.xlu0 0
      %944 = vperm.xlu0 %943, %v745
      %v945 = vpop.permute.xlu0 %944
      %948 = vset.pattern.permute.xlu0 0
      %949 = vperm.xlu0 %948, %v746
      %v950 = vpop.permute.xlu0 %949
      %v952 = vmul.f32 %v665, %v750
      %v953 = vmul.f32 %v666, %v755
      %v954 = vmul.f32 %v667, %v760
      %v955 = vmul.f32 %v668, %v765
      %v956 = vmul.f32 %v669, %v770
      %v957 = vmul.f32 %v670, %v775
      %v958 = vmul.f32 %v671, %v780
      %v959 = vmul.f32 %v672, %v785
      %v960 = vmul.f32 %v673, %v790
      %v961 = vmul.f32 %v674, %v795
      %v962 = vmul.f32 %v675, %v800
      %v963 = vmul.f32 %v676, %v805
      %v964 = vmul.f32 %v677, %v810
      %v965 = vmul.f32 %v678, %v815
      %v966 = vmul.f32 %v679, %v820
      %v967 = vmul.f32 %v680, %v825
      %v968 = vmul.f32 %v681, %v830
      %v969 = vmul.f32 %v682, %v835
      %v970 = vmul.f32 %v683, %v840
      %v971 = vmul.f32 %v684, %v845
      %v972 = vmul.f32 %v685, %v850
      %v973 = vmul.f32 %v686, %v855
      %v974 = vmul.f32 %v687, %v860
      %v975 = vmul.f32 %v688, %v865
      %v976 = vmul.f32 %v689, %v870
      %v977 = vmul.f32 %v690, %v875
      %v978 = vmul.f32 %v691, %v880
      %v979 = vmul.f32 %v692, %v885
      %v980 = vmul.f32 %v693, %v890
      %v981 = vmul.f32 %v694, %v895
      %v982 = vmul.f32 %v695, %v900
      %v983 = vmul.f32 %v696, %v905
      %v984 = vmul.f32 %v697, %v910
      %v985 = vmul.f32 %v698, %v915
      %v986 = vmul.f32 %v699, %v920
      %v987 = vmul.f32 %v700, %v925
      %v988 = vmul.f32 %v701, %v930
      %v989 = vmul.f32 %v702, %v935
      %v990 = vmul.f32 %v703, %v940
      %v991 = vmul.f32 %v704, %v945
      %v992 = vmul.f32 %v705, %v950
      %v993 = vrot.slane %v952, 5
      %v994 = vrot.slane %v953, 5
      %v995 = vrot.slane %v954, 5
      %v996 = vrot.slane %v955, 5
      %v997 = vrot.slane %v956, 5
      %v998 = vrot.slane %v957, 5
      %v999 = vrot.slane %v958, 5
      %v1000 = vrot.slane %v959, 5
      %v1001 = vrot.slane %v960, 5
      %v1002 = vrot.slane %v961, 5
      %v1003 = vrot.slane %v962, 5
      %v1004 = vrot.slane %v963, 5
      %v1005 = vrot.slane %v964, 5
      %v1006 = vrot.slane %v965, 5
      %v1007 = vrot.slane %v966, 5
      %v1008 = vrot.slane %v967, 5
      %v1009 = vrot.slane %v968, 5
      %v1010 = vrot.slane %v969, 5
      %v1011 = vrot.slane %v970, 5
      %v1012 = vrot.slane %v971, 5
      %v1013 = vrot.slane %v972, 5
      %v1014 = vrot.slane %v973, 5
      %v1015 = vrot.slane %v974, 5
      %v1016 = vrot.slane %v975, 5
      %v1017 = vrot.slane %v976, 5
      %v1018 = vrot.slane %v977, 5
      %v1019 = vrot.slane %v978, 5
      %v1020 = vrot.slane %v979, 5
      %v1021 = vrot.slane %v980, 5
      %v1022 = vrot.slane %v981, 5
      %v1023 = vrot.slane %v982, 5
      %v1024 = vrot.slane %v983, 5
      %v1025 = vrot.slane %v984, 5
      %v1026 = vrot.slane %v985, 5
      %v1027 = vrot.slane %v986, 5
      %v1028 = vrot.slane %v987, 5
      %v1029 = vrot.slane %v988, 5
      %v1030 = vrot.slane %v989, 5
      %v1031 = vrot.slane %v990, 5
      %v1032 = vrot.slane %v991, 5
      %v1033 = vrot.slane %v992, 5
      %v1034 = vlaneseq
      %v1035 = vshrl.u32 %v1034, 7
      %vm1036 = vcmp.lt.s32.totalorder %v1035, 3
      %v1037 = vsel %vm1036, %v1032, %v1033
      %v1038 = vsel %vm1036, %v1031, %v1032
      %v1039 = vsel %vm1036, %v1030, %v1031
      %v1040 = vsel %vm1036, %v1029, %v1030
      %v1041 = vsel %vm1036, %v1028, %v1029
      %v1042 = vsel %vm1036, %v1027, %v1028
      %v1043 = vsel %vm1036, %v1026, %v1027
      %v1044 = vsel %vm1036, %v1025, %v1026
      %v1045 = vsel %vm1036, %v1024, %v1025
      %v1046 = vsel %vm1036, %v1023, %v1024
      %v1047 = vsel %vm1036, %v1022, %v1023
      %v1048 = vsel %vm1036, %v1021, %v1022
      %v1049 = vsel %vm1036, %v1020, %v1021
      %v1050 = vsel %vm1036, %v1019, %v1020
      %v1051 = vsel %vm1036, %v1018, %v1019
      %v1052 = vsel %vm1036, %v1017, %v1018
      %v1053 = vsel %vm1036, %v1016, %v1017
      %v1054 = vsel %vm1036, %v1015, %v1016
      %v1055 = vsel %vm1036, %v1014, %v1015
      %v1056 = vsel %vm1036, %v1013, %v1014
      %v1057 = vsel %vm1036, %v1012, %v1013
      %v1058 = vsel %vm1036, %v1011, %v1012
      %v1059 = vsel %vm1036, %v1010, %v1011
      %v1060 = vsel %vm1036, %v1009, %v1010
      %v1061 = vsel %vm1036, %v1008, %v1009
      %v1062 = vsel %vm1036, %v1007, %v1008
      %v1063 = vsel %vm1036, %v1006, %v1007
      %v1064 = vsel %vm1036, %v1005, %v1006
      %v1065 = vsel %vm1036, %v1004, %v1005
      %v1066 = vsel %vm1036, %v1003, %v1004
      %v1067 = vsel %vm1036, %v1002, %v1003
      %v1068 = vsel %vm1036, %v1001, %v1002
      %v1069 = vsel %vm1036, %v1000, %v1001
      %v1070 = vsel %vm1036, %v999, %v1000
      %v1071 = vsel %vm1036, %v998, %v999
      %v1072 = vsel %vm1036, %v997, %v998
      %v1073 = vsel %vm1036, %v996, %v997
      %v1074 = vsel %vm1036, %v995, %v996
      %v1075 = vsel %vm1036, %v994, %v995
      %v1076 = vsel %vm1036, %v993, %v994
      %v1077 = vsel %vm1036, %v1033, %v993
      %v1078 = vld [vmem:[%s5] sm:$0xff]
      %v1079 = vld [vmem:[%s5 + $0x8] sm:$0xff]
      %v1080 = vld [vmem:[%s5 + $0x10] sm:$0xff]
      %v1081 = vld [vmem:[%s5 + $0x18] sm:$0xff]
      %v1082 = vld [vmem:[%s5 + $0x20] sm:$0xff]
      %v1083 = vld [vmem:[%s5 + $0x28] sm:$0xff]
      %v1084 = vld [vmem:[%s5 + $0x30] sm:$0xff]
      %v1085 = vld [vmem:[%s5 + $0x38] sm:$0xff]
      %v1086 = vld [vmem:[%s5 + $0x40] sm:$0xff]
      %v1087 = vld [vmem:[%s5 + $0x48] sm:$0xff]
      %v1088 = vld [vmem:[%s5 + $0x50] sm:$0xff]
      %v1089 = vld [vmem:[%s5 + $0x58] sm:$0xff]
      %v1090 = vld [vmem:[%s5 + $0x60] sm:$0xff]
      %v1091 = vld [vmem:[%s5 + $0x68] sm:$0xff]
      %v1092 = vld [vmem:[%s5 + $0x70] sm:$0xff]
      %v1093 = vld [vmem:[%s5 + $0x78] sm:$0xff]
      %v1094 = vrot.slane %v952, 6
      %v1095 = vrot.slane %v953, 6
      %v1096 = vrot.slane %v954, 6
      %v1097 = vrot.slane %v955, 6
      %v1098 = vrot.slane %v956, 6
      %v1099 = vrot.slane %v957, 6
      %v1100 = vrot.slane %v958, 6
      %v1101 = vrot.slane %v959, 6
      %v1102 = vrot.slane %v960, 6
      %v1103 = vrot.slane %v961, 6
      %v1104 = vrot.slane %v962, 6
      %v1105 = vrot.slane %v963, 6
      %v1106 = vrot.slane %v964, 6
      %v1107 = vrot.slane %v965, 6
      %v1108 = vrot.slane %v966, 6
      %v1109 = vrot.slane %v967, 6
      %v1110 = vrot.slane %v968, 6
      %v1111 = vrot.slane %v969, 6
      %v1112 = vrot.slane %v970, 6
      %v1113 = vrot.slane %v971, 6
      %v1114 = vrot.slane %v972, 6
      %v1115 = vrot.slane %v973, 6
      %v1116 = vrot.slane %v974, 6
      %v1117 = vrot.slane %v975, 6
      %v1118 = vrot.slane %v976, 6
      %v1119 = vrot.slane %v977, 6
      %v1120 = vrot.slane %v978, 6
      %v1121 = vrot.slane %v979, 6
      %v1122 = vrot.slane %v980, 6
      %v1123 = vrot.slane %v981, 6
      %v1124 = vrot.slane %v982, 6
      %v1125 = vrot.slane %v983, 6
      %v1126 = vrot.slane %v984, 6
      %v1127 = vrot.slane %v985, 6
      %v1128 = vrot.slane %v986, 6
      %v1129 = vrot.slane %v987, 6
      %v1130 = vrot.slane %v988, 6
      %v1131 = vrot.slane %v989, 6
      %v1132 = vrot.slane %v990, 6
      %v1133 = vrot.slane %v991, 6
      %v1134 = vrot.slane %v992, 6
      %vm1135 = vcmp.lt.s32.totalorder %v1035, 2
      %v1136 = vsel %vm1135, %v1133, %v1134
      %v1137 = vsel %vm1135, %v1132, %v1133
      %v1138 = vsel %vm1135, %v1131, %v1132
      %v1139 = vsel %vm1135, %v1130, %v1131
      %v1140 = vsel %vm1135, %v1129, %v1130
      %v1141 = vsel %vm1135, %v1128, %v1129
      %v1142 = vsel %vm1135, %v1127, %v1128
      %v1143 = vsel %vm1135, %v1126, %v1127
      %v1144 = vsel %vm1135, %v1125, %v1126
      %v1145 = vsel %vm1135, %v1124, %v1125
      %v1146 = vsel %vm1135, %v1123, %v1124
      %v1147 = vsel %vm1135, %v1122, %v1123
      %v1148 = vsel %vm1135, %v1121, %v1122
      %v1149 = vsel %vm1135, %v1120, %v1121
      %v1150 = vsel %vm1135, %v1119, %v1120
      %v1151 = vsel %vm1135, %v1118, %v1119
      %v1152 = vsel %vm1135, %v1117, %v1118
      %v1153 = vsel %vm1135, %v1116, %v1117
      %v1154 = vsel %vm1135, %v1115, %v1116
      %v1155 = vsel %vm1135, %v1114, %v1115
      %v1156 = vsel %vm1135, %v1113, %v1114
      %v1157 = vsel %vm1135, %v1112, %v1113
      %v1158 = vsel %vm1135, %v1111, %v1112
      %v1159 = vsel %vm1135, %v1110, %v1111
      %v1160 = vsel %vm1135, %v1109, %v1110
      %v1161 = vsel %vm1135, %v1108, %v1109
      %v1162 = vsel %vm1135, %v1107, %v1108
      %v1163 = vsel %vm1135, %v1106, %v1107
      %v1164 = vsel %vm1135, %v1105, %v1106
      %v1165 = vsel %vm1135, %v1104, %v1105
      %v1166 = vsel %vm1135, %v1103, %v1104
      %v1167 = vsel %vm1135, %v1102, %v1103
      %v1168 = vsel %vm1135, %v1101, %v1102
      %v1169 = vsel %vm1135, %v1100, %v1101
      %v1170 = vsel %vm1135, %v1099, %v1100
      %v1171 = vsel %vm1135, %v1098, %v1099
      %v1172 = vsel %vm1135, %v1097, %v1098
      %v1173 = vsel %vm1135, %v1096, %v1097
      %v1174 = vsel %vm1135, %v1095, %v1096
      %v1175 = vsel %vm1135, %v1094, %v1095
      %v1176 = vsel %vm1135, %v1134, %v1094
      %v1177 = vld [vmem:[%s5 + $0x80] sm:$0xff]
      %v1178 = vld [vmem:[%s5 + $0x88] sm:$0xff]
      %v1179 = vld [vmem:[%s5 + $0x90] sm:$0xff]
      %v1180 = vld [vmem:[%s5 + $0x98] sm:$0xff]
      %v1181 = vld [vmem:[%s5 + $0xa0] sm:$0xff]
      %v1182 = vld [vmem:[%s5 + $0xa8] sm:$0xff]
      %v1183 = vld [vmem:[%s5 + $0xb0] sm:$0xff]
      %v1184 = vld [vmem:[%s5 + $0xb8] sm:$0xff]
      %v1185 = vld [vmem:[%s5 + $0xc0] sm:$0xff]
      %v1186 = vld [vmem:[%s5 + $0xc8] sm:$0xff]
      %v1187 = vld [vmem:[%s5 + $0xd0] sm:$0xff]
      %v1188 = vld [vmem:[%s5 + $0xd8] sm:$0xff]
      %v1189 = vld [vmem:[%s5 + $0xe0] sm:$0xff]
      %v1190 = vld [vmem:[%s5 + $0xe8] sm:$0xff]
      %v1191 = vld [vmem:[%s5 + $0xf0] sm:$0xff]
      %v1192 = vld [vmem:[%s5 + $0xf8] sm:$0xff]
      %1193 = vmatprep.subr.mxu0 0.0
      %1194 = vmatpush1.msra.mxu0 %v1192
      %1195 = vmatprep.subr.mxu0 0.0
      %1196 = vmatpush1.msra.mxu0 %v1191
      %1197 = vmatprep.subr.mxu0 0.0
      %1198 = vmatpush1.msra.mxu0 %v1190
      %1199 = vmatprep.subr.mxu0 0.0
      %1200 = vmatpush1.msra.mxu0 %v1189
      %1201 = vmatprep.subr.mxu0 0.0
      %1202 = vmatpush1.msra.mxu0 %v1188
      %1203 = vmatprep.subr.mxu0 0.0
      %1204 = vmatpush1.msra.mxu0 %v1187
      %1205 = vmatprep.subr.mxu0 0.0
      %1206 = vmatpush1.msra.mxu0 %v1186
      %1207 = vmatprep.subr.mxu0 0.0
      %1208 = vmatpush1.msra.mxu0 %v1185
      %1209 = vmatprep.subr.mxu0 0.0
      %1210 = vmatpush1.msra.mxu0 %v1184
      %1211 = vmatprep.subr.mxu0 0.0
      %1212 = vmatpush1.msra.mxu0 %v1183
      %1213 = vmatprep.subr.mxu0 0.0
      %1214 = vmatpush1.msra.mxu0 %v1182
      %1215 = vmatprep.subr.mxu0 0.0
      %1216 = vmatpush1.msra.mxu0 %v1181
      %1217 = vmatprep.subr.mxu0 0.0
      %1218 = vmatpush1.msra.mxu0 %v1180
      %1219 = vmatprep.subr.mxu0 0.0
      %1220 = vmatpush1.msra.mxu0 %v1179
      %1221 = vmatprep.subr.mxu0 0.0
      %1222 = vmatpush1.msra.mxu0 %v1178
      %1223 = vmatprep.subr.mxu0 0.0
      %1224 = vmatpush1.msra.mxu0 %v1177
      %1225 = vmatprep.subr.mxu0 0.0
      %1226 = vmatpush2.msra.mxu0 0.0
      %1227 = vmatprep.subr.mxu0 0.0
      %1228 = vmatpush2.msra.mxu0 0.0
      %1229 = vmatprep.subr.mxu0 0.0
      %1230 = vmatpush2.msra.mxu0 0.0
      %1231 = vmatprep.subr.mxu0 0.0
      %1232 = vmatpush2.msra.mxu0 0.0
      %1233 = vmatprep.subr.mxu0 0.0
      %1234 = vmatpush2.msra.mxu0 0.0
      %1235 = vmatprep.subr.mxu0 0.0
      %1236 = vmatpush2.msra.mxu0 0.0
      %1237 = vmatprep.subr.mxu0 0.0
      %1238 = vmatpush2.msra.mxu0 0.0
      %1239 = vmatprep.subr.mxu0 0.0
      %1240 = vmatpush2.msra.mxu0 0.0
      %1241 = vmatprep.subr.mxu0 0.0
      %1242 = vmatpush2.msra.mxu0 0.0
      %1243 = vmatprep.subr.mxu0 0.0
      %1244 = vmatpush2.msra.mxu0 0.0
      %1245 = vmatprep.subr.mxu0 0.0
      %1246 = vmatpush2.msra.mxu0 0.0
      %1247 = vmatprep.subr.mxu0 0.0
      %1248 = vmatpush2.msra.mxu0 0.0
      %1249 = vmatprep.subr.mxu0 0.0
      %1250 = vmatpush2.msra.mxu0 0.0
      %1251 = vmatprep.subr.mxu0 0.0
      %1252 = vmatpush2.msra.mxu0 0.0
      %1253 = vmatprep.subr.mxu0 0.0
      %1254 = vmatpush2.msra.mxu0 0.0
      %1255 = vmatprep.subr.mxu0 0.0
      %1256 = vmatpush2.msra.mxu0 0.0
      %1257 = vmatprep.mubr.f32.mxu0 0.0
      %1258 = vmatmul.mubr.f32.gmra.mxu0 %v1137
      %v1259 = vpop.f32.mrf.mxu0
      %v1260 = vadd.f32 0.0, %v1259
      %v1261 = vpop.f32.mrf.mxu0
      %1262 = vmatprep.mubr.f32.mxu0 0.0
      %1263 = vmatmul.mubr.f32.gmra.mxu0 %v1136
      %v1264 = vpop.f32.mrf.mxu0
      %v1265 = vadd.f32 0.0, %v1264
      %v1266 = vpop.f32.mrf.mxu0
      %1267 = vmatprep.mubr.f32.mxu0 0.0
      %1268 = vmatmul.mubr.f32.gmra.mxu0 %v1176
      %v1269 = vpop.f32.mrf.mxu0
      %v1270 = vadd.f32 0.0, %v1269
      %v1271 = vpop.f32.mrf.mxu0
      %1272 = vmatprep.mubr.f32.mxu0 0.0
      %1273 = vmatmul.mubr.f32.gmra.mxu0 %v1175
      %v1274 = vpop.f32.mrf.mxu0
      %v1275 = vadd.f32 0.0, %v1274
      %v1276 = vpop.f32.mrf.mxu0
      %1277 = vmatprep.mubr.f32.mxu0 0.0
      %1278 = vmatmul.mubr.f32.gmra.mxu0 %v1174
      %v1279 = vpop.f32.mrf.mxu0
      %v1280 = vadd.f32 0.0, %v1279
      %v1281 = vpop.f32.mrf.mxu0
      %1282 = vmatprep.mubr.f32.mxu0 0.0
      %1283 = vmatmul.mubr.f32.gmra.mxu0 %v1173
      %v1284 = vpop.f32.mrf.mxu0
      %v1285 = vadd.f32 0.0, %v1284
      %v1286 = vpop.f32.mrf.mxu0
      %1287 = vmatprep.mubr.f32.mxu0 0.0
      %1288 = vmatmul.mubr.f32.gmra.mxu0 %v1172
      %v1289 = vpop.f32.mrf.mxu0
      %v1290 = vadd.f32 0.0, %v1289
      %v1291 = vpop.f32.mrf.mxu0
      %1292 = vmatprep.mubr.f32.mxu0 0.0
      %1293 = vmatmul.mubr.f32.gmra.mxu0 %v1171
      %v1294 = vpop.f32.mrf.mxu0
      %v1295 = vadd.f32 0.0, %v1294
      %v1296 = vpop.f32.mrf.mxu0
      %1297 = vmatprep.mubr.f32.mxu0 0.0
      %1298 = vmatmul.mubr.f32.gmra.mxu0 %v1170
      %v1299 = vpop.f32.mrf.mxu0
      %v1300 = vadd.f32 0.0, %v1299
      %v1301 = vpop.f32.mrf.mxu0
      %1302 = vmatprep.mubr.f32.mxu0 0.0
      %1303 = vmatmul.mubr.f32.gmra.mxu0 %v1169
      %v1304 = vpop.f32.mrf.mxu0
      %v1305 = vadd.f32 0.0, %v1304
      %v1306 = vpop.f32.mrf.mxu0
      %1307 = vmatprep.mubr.f32.mxu0 0.0
      %1308 = vmatmul.mubr.f32.gmra.mxu0 %v1168
      %v1309 = vpop.f32.mrf.mxu0
      %v1310 = vadd.f32 0.0, %v1309
      %v1311 = vpop.f32.mrf.mxu0
      %1312 = vmatprep.mubr.f32.mxu0 0.0
      %1313 = vmatmul.mubr.f32.gmra.mxu0 %v1167
      %v1314 = vpop.f32.mrf.mxu0
      %v1315 = vadd.f32 0.0, %v1314
      %v1316 = vpop.f32.mrf.mxu0
      %1317 = vmatprep.mubr.f32.mxu0 0.0
      %1318 = vmatmul.mubr.f32.gmra.mxu0 %v1166
      %v1319 = vpop.f32.mrf.mxu0
      %v1320 = vadd.f32 0.0, %v1319
      %v1321 = vpop.f32.mrf.mxu0
      %1322 = vmatprep.mubr.f32.mxu0 0.0
      %1323 = vmatmul.mubr.f32.gmra.mxu0 %v1165
      %v1324 = vpop.f32.mrf.mxu0
      %v1325 = vadd.f32 0.0, %v1324
      %v1326 = vpop.f32.mrf.mxu0
      %1327 = vmatprep.mubr.f32.mxu0 0.0
      %1328 = vmatmul.mubr.f32.gmra.mxu0 %v1164
      %v1329 = vpop.f32.mrf.mxu0
      %v1330 = vadd.f32 0.0, %v1329
      %v1331 = vpop.f32.mrf.mxu0
      %1332 = vmatprep.mubr.f32.mxu0 0.0
      %1333 = vmatmul.mubr.f32.gmra.mxu0 %v1163
      %v1334 = vpop.f32.mrf.mxu0
      %v1335 = vadd.f32 0.0, %v1334
      %v1336 = vpop.f32.mrf.mxu0
      %1337 = vmatprep.mubr.f32.mxu0 0.0
      %1338 = vmatmul.mubr.f32.gmra.mxu0 %v1162
      %v1339 = vpop.f32.mrf.mxu0
      %v1340 = vadd.f32 0.0, %v1339
      %v1341 = vpop.f32.mrf.mxu0
      %1342 = vmatprep.mubr.f32.mxu0 0.0
      %1343 = vmatmul.mubr.f32.gmra.mxu0 %v1161
      %v1344 = vpop.f32.mrf.mxu0
      %v1345 = vadd.f32 0.0, %v1344
      %v1346 = vpop.f32.mrf.mxu0
      %1347 = vmatprep.mubr.f32.mxu0 0.0
      %1348 = vmatmul.mubr.f32.gmra.mxu0 %v1160
      %v1349 = vpop.f32.mrf.mxu0
      %v1350 = vadd.f32 0.0, %v1349
      %v1351 = vpop.f32.mrf.mxu0
      %1352 = vmatprep.mubr.f32.mxu0 0.0
      %1353 = vmatmul.mubr.f32.gmra.mxu0 %v1159
      %v1354 = vpop.f32.mrf.mxu0
      %v1355 = vadd.f32 0.0, %v1354
      %v1356 = vpop.f32.mrf.mxu0
      %1357 = vmatprep.mubr.f32.mxu0 0.0
      %1358 = vmatmul.mubr.f32.gmra.mxu0 %v1158
      %v1359 = vpop.f32.mrf.mxu0
      %v1360 = vadd.f32 0.0, %v1359
      %v1361 = vpop.f32.mrf.mxu0
      %1362 = vmatprep.mubr.f32.mxu0 0.0
      %1363 = vmatmul.mubr.f32.gmra.mxu0 %v1157
      %v1364 = vpop.f32.mrf.mxu0
      %v1365 = vadd.f32 0.0, %v1364
      %v1366 = vpop.f32.mrf.mxu0
      %1367 = vmatprep.mubr.f32.mxu0 0.0
      %1368 = vmatmul.mubr.f32.gmra.mxu0 %v1156
      %v1369 = vpop.f32.mrf.mxu0
      %v1370 = vadd.f32 0.0, %v1369
      %v1371 = vpop.f32.mrf.mxu0
      %1372 = vmatprep.mubr.f32.mxu0 0.0
      %1373 = vmatmul.mubr.f32.gmra.mxu0 %v1155
      %v1374 = vpop.f32.mrf.mxu0
      %v1375 = vadd.f32 0.0, %v1374
      %v1376 = vpop.f32.mrf.mxu0
      %1377 = vmatprep.mubr.f32.mxu0 0.0
      %1378 = vmatmul.mubr.f32.gmra.mxu0 %v1154
      %v1379 = vpop.f32.mrf.mxu0
      %v1380 = vadd.f32 0.0, %v1379
      %v1381 = vpop.f32.mrf.mxu0
      %1382 = vmatprep.mubr.f32.mxu0 0.0
      %1383 = vmatmul.mubr.f32.gmra.mxu0 %v1153
      %v1384 = vpop.f32.mrf.mxu0
      %v1385 = vadd.f32 0.0, %v1384
      %v1386 = vpop.f32.mrf.mxu0
      %1387 = vmatprep.mubr.f32.mxu0 0.0
      %1388 = vmatmul.mubr.f32.gmra.mxu0 %v1152
      %v1389 = vpop.f32.mrf.mxu0
      %v1390 = vadd.f32 0.0, %v1389
      %v1391 = vpop.f32.mrf.mxu0
      %1392 = vmatprep.mubr.f32.mxu0 0.0
      %1393 = vmatmul.mubr.f32.gmra.mxu0 %v1151
      %v1394 = vpop.f32.mrf.mxu0
      %v1395 = vadd.f32 0.0, %v1394
      %v1396 = vpop.f32.mrf.mxu0
      %1397 = vmatprep.mubr.f32.mxu0 0.0
      %1398 = vmatmul.mubr.f32.gmra.mxu0 %v1150
      %v1399 = vpop.f32.mrf.mxu0
      %v1400 = vadd.f32 0.0, %v1399
      %v1401 = vpop.f32.mrf.mxu0
      %1402 = vmatprep.mubr.f32.mxu0 0.0
      %1403 = vmatmul.mubr.f32.gmra.mxu0 %v1149
      %v1404 = vpop.f32.mrf.mxu0
      %v1405 = vadd.f32 0.0, %v1404
      %v1406 = vpop.f32.mrf.mxu0
      %1407 = vmatprep.mubr.f32.mxu0 0.0
      %1408 = vmatmul.mubr.f32.gmra.mxu0 %v1148
      %v1409 = vpop.f32.mrf.mxu0
      %v1410 = vadd.f32 0.0, %v1409
      %v1411 = vpop.f32.mrf.mxu0
      %1412 = vmatprep.mubr.f32.mxu0 0.0
      %1413 = vmatmul.mubr.f32.gmra.mxu0 %v1147
      %v1414 = vpop.f32.mrf.mxu0
      %v1415 = vadd.f32 0.0, %v1414
      %v1416 = vpop.f32.mrf.mxu0
      %1417 = vmatprep.mubr.f32.mxu0 0.0
      %1418 = vmatmul.mubr.f32.gmra.mxu0 %v1146
      %v1419 = vpop.f32.mrf.mxu0
      %v1420 = vadd.f32 0.0, %v1419
      %v1421 = vpop.f32.mrf.mxu0
      %1422 = vmatprep.mubr.f32.mxu0 0.0
      %1423 = vmatmul.mubr.f32.gmra.mxu0 %v1145
      %v1424 = vpop.f32.mrf.mxu0
      %v1425 = vadd.f32 0.0, %v1424
      %v1426 = vpop.f32.mrf.mxu0
      %1427 = vmatprep.mubr.f32.mxu0 0.0
      %1428 = vmatmul.mubr.f32.gmra.mxu0 %v1144
      %v1429 = vpop.f32.mrf.mxu0
      %v1430 = vadd.f32 0.0, %v1429
      %v1431 = vpop.f32.mrf.mxu0
      %1432 = vmatprep.mubr.f32.mxu0 0.0
      %1433 = vmatmul.mubr.f32.gmra.mxu0 %v1143
      %v1434 = vpop.f32.mrf.mxu0
      %v1435 = vadd.f32 0.0, %v1434
      %v1436 = vpop.f32.mrf.mxu0
      %1437 = vmatprep.mubr.f32.mxu0 0.0
      %1438 = vmatmul.mubr.f32.gmra.mxu0 %v1142
      %v1439 = vpop.f32.mrf.mxu0
      %v1440 = vadd.f32 0.0, %v1439
      %v1441 = vpop.f32.mrf.mxu0
      %1442 = vmatprep.mubr.f32.mxu0 0.0
      %1443 = vmatmul.mubr.f32.gmra.mxu0 %v1141
      %v1444 = vpop.f32.mrf.mxu0
      %v1445 = vadd.f32 0.0, %v1444
      %v1446 = vpop.f32.mrf.mxu0
      %1447 = vmatprep.mubr.f32.mxu0 0.0
      %1448 = vmatmul.mubr.f32.gmra.mxu0 %v1140
      %v1449 = vpop.f32.mrf.mxu0
      %v1450 = vadd.f32 0.0, %v1449
      %v1451 = vpop.f32.mrf.mxu0
      %1452 = vmatprep.mubr.f32.mxu0 0.0
      %1453 = vmatmul.mubr.f32.gmra.mxu0 %v1139
      %v1454 = vpop.f32.mrf.mxu0
      %v1455 = vadd.f32 0.0, %v1454
      %v1456 = vpop.f32.mrf.mxu0
      %1457 = vmatprep.mubr.f32.mxu0 0.0
      %1458 = vmatmul.mubr.f32.gmra.mxu0 %v1138
      %v1459 = vpop.f32.mrf.mxu0
      %v1460 = vadd.f32 0.0, %v1459
      %v1461 = vpop.f32.mrf.mxu0
      %1462 = vdwg.mxu0
      %1463 = vmatprep.subr.mxu0 0.0
      %1464 = vmatpush1.msra.mxu0 %v1093
      %1465 = vmatprep.subr.mxu0 0.0
      %1466 = vmatpush1.msra.mxu0 %v1092
      %1467 = vmatprep.subr.mxu0 0.0
      %1468 = vmatpush1.msra.mxu0 %v1091
      %1469 = vmatprep.subr.mxu0 0.0
      %1470 = vmatpush1.msra.mxu0 %v1090
      %1471 = vmatprep.subr.mxu0 0.0
      %1472 = vmatpush1.msra.mxu0 %v1089
      %1473 = vmatprep.subr.mxu0 0.0
      %1474 = vmatpush1.msra.mxu0 %v1088
      %1475 = vmatprep.subr.mxu0 0.0
      %1476 = vmatpush1.msra.mxu0 %v1087
      %1477 = vmatprep.subr.mxu0 0.0
      %1478 = vmatpush1.msra.mxu0 %v1086
      %1479 = vmatprep.subr.mxu0 0.0
      %1480 = vmatpush1.msra.mxu0 %v1085
      %1481 = vmatprep.subr.mxu0 0.0
      %1482 = vmatpush1.msra.mxu0 %v1084
      %1483 = vmatprep.subr.mxu0 0.0
      %1484 = vmatpush1.msra.mxu0 %v1083
      %1485 = vmatprep.subr.mxu0 0.0
      %1486 = vmatpush1.msra.mxu0 %v1082
      %1487 = vmatprep.subr.mxu0 0.0
      %1488 = vmatpush1.msra.mxu0 %v1081
      %1489 = vmatprep.subr.mxu0 0.0
      %1490 = vmatpush1.msra.mxu0 %v1080
      %1491 = vmatprep.subr.mxu0 0.0
      %1492 = vmatpush1.msra.mxu0 %v1079
      %1493 = vmatprep.subr.mxu0 0.0
      %1494 = vmatpush1.msra.mxu0 %v1078
      %1495 = vmatprep.subr.mxu0 0.0
      %1496 = vmatpush2.msra.mxu0 0.0
      %1497 = vmatprep.subr.mxu0 0.0
      %1498 = vmatpush2.msra.mxu0 0.0
      %1499 = vmatprep.subr.mxu0 0.0
      %1500 = vmatpush2.msra.mxu0 0.0
      %1501 = vmatprep.subr.mxu0 0.0
      %1502 = vmatpush2.msra.mxu0 0.0
      %1503 = vmatprep.subr.mxu0 0.0
      %1504 = vmatpush2.msra.mxu0 0.0
      %1505 = vmatprep.subr.mxu0 0.0
      %1506 = vmatpush2.msra.mxu0 0.0
      %1507 = vmatprep.subr.mxu0 0.0
      %1508 = vmatpush2.msra.mxu0 0.0
      %1509 = vmatprep.subr.mxu0 0.0
      %1510 = vmatpush2.msra.mxu0 0.0
      %1511 = vmatprep.subr.mxu0 0.0
      %1512 = vmatpush2.msra.mxu0 0.0
      %1513 = vmatprep.subr.mxu0 0.0
      %1514 = vmatpush2.msra.mxu0 0.0
      %1515 = vmatprep.subr.mxu0 0.0
      %1516 = vmatpush2.msra.mxu0 0.0
      %1517 = vmatprep.subr.mxu0 0.0
      %1518 = vmatpush2.msra.mxu0 0.0
      %1519 = vmatprep.subr.mxu0 0.0
      %1520 = vmatpush2.msra.mxu0 0.0
      %1521 = vmatprep.subr.mxu0 0.0
      %1522 = vmatpush2.msra.mxu0 0.0
      %1523 = vmatprep.subr.mxu0 0.0
      %1524 = vmatpush2.msra.mxu0 0.0
      %1525 = vmatprep.subr.mxu0 0.0
      %1526 = vmatpush2.msra.mxu0 0.0
      %1527 = vmatprep.mubr.f32.mxu0 0.0
      %1528 = vmatmul.mubr.f32.gmra.mxu0 %v1038
      %v1529 = vpop.f32.mrf.mxu0
      %v1530 = vadd.f32 %v1260, %v1529
      %v1531 = vpop.f32.mrf.mxu0
      %1532 = vmatprep.mubr.f32.mxu0 0.0
      %1533 = vmatmul.mubr.f32.gmra.mxu0 %v1037
      %v1534 = vpop.f32.mrf.mxu0
      %v1535 = vadd.f32 %v1265, %v1534
      %v1536 = vpop.f32.mrf.mxu0
      %1537 = vmatprep.mubr.f32.mxu0 0.0
      %1538 = vmatmul.mubr.f32.gmra.mxu0 %v1077
      %v1539 = vpop.f32.mrf.mxu0
      %v1540 = vadd.f32 %v1270, %v1539
      %v1541 = vpop.f32.mrf.mxu0
      %1542 = vmatprep.mubr.f32.mxu0 0.0
      %1543 = vmatmul.mubr.f32.gmra.mxu0 %v1076
      %v1544 = vpop.f32.mrf.mxu0
      %v1545 = vadd.f32 %v1275, %v1544
      %v1546 = vpop.f32.mrf.mxu0
      %1547 = vmatprep.mubr.f32.mxu0 0.0
      %1548 = vmatmul.mubr.f32.gmra.mxu0 %v1075
      %v1549 = vpop.f32.mrf.mxu0
      %v1550 = vadd.f32 %v1280, %v1549
      %v1551 = vpop.f32.mrf.mxu0
      %1552 = vmatprep.mubr.f32.mxu0 0.0
      %1553 = vmatmul.mubr.f32.gmra.mxu0 %v1074
      %v1554 = vpop.f32.mrf.mxu0
      %v1555 = vadd.f32 %v1285, %v1554
      %v1556 = vpop.f32.mrf.mxu0
      %1557 = vmatprep.mubr.f32.mxu0 0.0
      %1558 = vmatmul.mubr.f32.gmra.mxu0 %v1073
      %v1559 = vpop.f32.mrf.mxu0
      %v1560 = vadd.f32 %v1290, %v1559
      %v1561 = vpop.f32.mrf.mxu0
      %1562 = vmatprep.mubr.f32.mxu0 0.0
      %1563 = vmatmul.mubr.f32.gmra.mxu0 %v1072
      %v1564 = vpop.f32.mrf.mxu0
      %v1565 = vadd.f32 %v1295, %v1564
      %v1566 = vpop.f32.mrf.mxu0
      %1567 = vmatprep.mubr.f32.mxu0 0.0
      %1568 = vmatmul.mubr.f32.gmra.mxu0 %v1071
      %v1569 = vpop.f32.mrf.mxu0
      %v1570 = vadd.f32 %v1300, %v1569
      %v1571 = vpop.f32.mrf.mxu0
      %1572 = vmatprep.mubr.f32.mxu0 0.0
      %1573 = vmatmul.mubr.f32.gmra.mxu0 %v1070
      %v1574 = vpop.f32.mrf.mxu0
      %v1575 = vadd.f32 %v1305, %v1574
      %v1576 = vpop.f32.mrf.mxu0
      %1577 = vmatprep.mubr.f32.mxu0 0.0
      %1578 = vmatmul.mubr.f32.gmra.mxu0 %v1069
      %v1579 = vpop.f32.mrf.mxu0
      %v1580 = vadd.f32 %v1310, %v1579
      %v1581 = vpop.f32.mrf.mxu0
      %1582 = vmatprep.mubr.f32.mxu0 0.0
      %1583 = vmatmul.mubr.f32.gmra.mxu0 %v1068
      %v1584 = vpop.f32.mrf.mxu0
      %v1585 = vadd.f32 %v1315, %v1584
      %v1586 = vpop.f32.mrf.mxu0
      %1587 = vmatprep.mubr.f32.mxu0 0.0
      %1588 = vmatmul.mubr.f32.gmra.mxu0 %v1067
      %v1589 = vpop.f32.mrf.mxu0
      %v1590 = vadd.f32 %v1320, %v1589
      %v1591 = vpop.f32.mrf.mxu0
      %1592 = vmatprep.mubr.f32.mxu0 0.0
      %1593 = vmatmul.mubr.f32.gmra.mxu0 %v1066
      %v1594 = vpop.f32.mrf.mxu0
      %v1595 = vadd.f32 %v1325, %v1594
      %v1596 = vpop.f32.mrf.mxu0
      %1597 = vmatprep.mubr.f32.mxu0 0.0
      %1598 = vmatmul.mubr.f32.gmra.mxu0 %v1065
      %v1599 = vpop.f32.mrf.mxu0
      %v1600 = vadd.f32 %v1330, %v1599
      %v1601 = vpop.f32.mrf.mxu0
      %1602 = vmatprep.mubr.f32.mxu0 0.0
      %1603 = vmatmul.mubr.f32.gmra.mxu0 %v1064
      %v1604 = vpop.f32.mrf.mxu0
      %v1605 = vadd.f32 %v1335, %v1604
      %v1606 = vpop.f32.mrf.mxu0
      %1607 = vmatprep.mubr.f32.mxu0 0.0
      %1608 = vmatmul.mubr.f32.gmra.mxu0 %v1063
      %v1609 = vpop.f32.mrf.mxu0
      %v1610 = vadd.f32 %v1340, %v1609
      %v1611 = vpop.f32.mrf.mxu0
      %1612 = vmatprep.mubr.f32.mxu0 0.0
      %1613 = vmatmul.mubr.f32.gmra.mxu0 %v1062
      %v1614 = vpop.f32.mrf.mxu0
      %v1615 = vadd.f32 %v1345, %v1614
      %v1616 = vpop.f32.mrf.mxu0
      %1617 = vmatprep.mubr.f32.mxu0 0.0
      %1618 = vmatmul.mubr.f32.gmra.mxu0 %v1061
      %v1619 = vpop.f32.mrf.mxu0
      %v1620 = vadd.f32 %v1350, %v1619
      %v1621 = vpop.f32.mrf.mxu0
      %1622 = vmatprep.mubr.f32.mxu0 0.0
      %1623 = vmatmul.mubr.f32.gmra.mxu0 %v1060
      %v1624 = vpop.f32.mrf.mxu0
      %v1625 = vadd.f32 %v1355, %v1624
      %v1626 = vpop.f32.mrf.mxu0
      %1627 = vmatprep.mubr.f32.mxu0 0.0
      %1628 = vmatmul.mubr.f32.gmra.mxu0 %v1059
      %v1629 = vpop.f32.mrf.mxu0
      %v1630 = vadd.f32 %v1360, %v1629
      %v1631 = vpop.f32.mrf.mxu0
      %1632 = vmatprep.mubr.f32.mxu0 0.0
      %1633 = vmatmul.mubr.f32.gmra.mxu0 %v1058
      %v1634 = vpop.f32.mrf.mxu0
      %v1635 = vadd.f32 %v1365, %v1634
      %v1636 = vpop.f32.mrf.mxu0
      %1637 = vmatprep.mubr.f32.mxu0 0.0
      %1638 = vmatmul.mubr.f32.gmra.mxu0 %v1057
      %v1639 = vpop.f32.mrf.mxu0
      %v1640 = vadd.f32 %v1370, %v1639
      %v1641 = vpop.f32.mrf.mxu0
      %1642 = vmatprep.mubr.f32.mxu0 0.0
      %1643 = vmatmul.mubr.f32.gmra.mxu0 %v1056
      %v1644 = vpop.f32.mrf.mxu0
      %v1645 = vadd.f32 %v1375, %v1644
      %v1646 = vpop.f32.mrf.mxu0
      %1647 = vmatprep.mubr.f32.mxu0 0.0
      %1648 = vmatmul.mubr.f32.gmra.mxu0 %v1055
      %v1649 = vpop.f32.mrf.mxu0
      %v1650 = vadd.f32 %v1380, %v1649
      %v1651 = vpop.f32.mrf.mxu0
      %1652 = vmatprep.mubr.f32.mxu0 0.0
      %1653 = vmatmul.mubr.f32.gmra.mxu0 %v1054
      %v1654 = vpop.f32.mrf.mxu0
      %v1655 = vadd.f32 %v1385, %v1654
      %v1656 = vpop.f32.mrf.mxu0
      %1657 = vmatprep.mubr.f32.mxu0 0.0
      %1658 = vmatmul.mubr.f32.gmra.mxu0 %v1053
      %v1659 = vpop.f32.mrf.mxu0
      %v1660 = vadd.f32 %v1390, %v1659
      %v1661 = vpop.f32.mrf.mxu0
      %1662 = vmatprep.mubr.f32.mxu0 0.0
      %1663 = vmatmul.mubr.f32.gmra.mxu0 %v1052
      %v1664 = vpop.f32.mrf.mxu0
      %v1665 = vadd.f32 %v1395, %v1664
      %v1666 = vpop.f32.mrf.mxu0
      %1667 = vmatprep.mubr.f32.mxu0 0.0
      %1668 = vmatmul.mubr.f32.gmra.mxu0 %v1051
      %v1669 = vpop.f32.mrf.mxu0
      %v1670 = vadd.f32 %v1400, %v1669
      %v1671 = vpop.f32.mrf.mxu0
      %1672 = vmatprep.mubr.f32.mxu0 0.0
      %1673 = vmatmul.mubr.f32.gmra.mxu0 %v1050
      %v1674 = vpop.f32.mrf.mxu0
      %v1675 = vadd.f32 %v1405, %v1674
      %v1676 = vpop.f32.mrf.mxu0
      %1677 = vmatprep.mubr.f32.mxu0 0.0
      %1678 = vmatmul.mubr.f32.gmra.mxu0 %v1049
      %v1679 = vpop.f32.mrf.mxu0
      %v1680 = vadd.f32 %v1410, %v1679
      %v1681 = vpop.f32.mrf.mxu0
      %1682 = vmatprep.mubr.f32.mxu0 0.0
      %1683 = vmatmul.mubr.f32.gmra.mxu0 %v1048
      %v1684 = vpop.f32.mrf.mxu0
      %v1685 = vadd.f32 %v1415, %v1684
      %v1686 = vpop.f32.mrf.mxu0
      %1687 = vmatprep.mubr.f32.mxu0 0.0
      %1688 = vmatmul.mubr.f32.gmra.mxu0 %v1047
      %v1689 = vpop.f32.mrf.mxu0
      %v1690 = vadd.f32 %v1420, %v1689
      %v1691 = vpop.f32.mrf.mxu0
      %1692 = vmatprep.mubr.f32.mxu0 0.0
      %1693 = vmatmul.mubr.f32.gmra.mxu0 %v1046
      %v1694 = vpop.f32.mrf.mxu0
      %v1695 = vadd.f32 %v1425, %v1694
      %v1696 = vpop.f32.mrf.mxu0
      %1697 = vmatprep.mubr.f32.mxu0 0.0
      %1698 = vmatmul.mubr.f32.gmra.mxu0 %v1045
      %v1699 = vpop.f32.mrf.mxu0
      %v1700 = vadd.f32 %v1430, %v1699
      %v1701 = vpop.f32.mrf.mxu0
      %1702 = vmatprep.mubr.f32.mxu0 0.0
      %1703 = vmatmul.mubr.f32.gmra.mxu0 %v1044
      %v1704 = vpop.f32.mrf.mxu0
      %v1705 = vadd.f32 %v1435, %v1704
      %v1706 = vpop.f32.mrf.mxu0
      %1707 = vmatprep.mubr.f32.mxu0 0.0
      %1708 = vmatmul.mubr.f32.gmra.mxu0 %v1043
      %v1709 = vpop.f32.mrf.mxu0
      %v1710 = vadd.f32 %v1440, %v1709
      %v1711 = vpop.f32.mrf.mxu0
      %1712 = vmatprep.mubr.f32.mxu0 0.0
      %1713 = vmatmul.mubr.f32.gmra.mxu0 %v1042
      %v1714 = vpop.f32.mrf.mxu0
      %v1715 = vadd.f32 %v1445, %v1714
      %v1716 = vpop.f32.mrf.mxu0
      %1717 = vmatprep.mubr.f32.mxu0 0.0
      %1718 = vmatmul.mubr.f32.gmra.mxu0 %v1041
      %v1719 = vpop.f32.mrf.mxu0
      %v1720 = vadd.f32 %v1450, %v1719
      %v1721 = vpop.f32.mrf.mxu0
      %1722 = vmatprep.mubr.f32.mxu0 0.0
      %1723 = vmatmul.mubr.f32.gmra.mxu0 %v1040
      %v1724 = vpop.f32.mrf.mxu0
      %v1725 = vadd.f32 %v1455, %v1724
      %v1726 = vpop.f32.mrf.mxu0
      %1727 = vmatprep.mubr.f32.mxu0 0.0
      %1728 = vmatmul.mubr.f32.gmra.mxu0 %v1039
      %v1729 = vpop.f32.mrf.mxu0
      %v1730 = vadd.f32 %v1460, %v1729
      %v1731 = vpop.f32.mrf.mxu0
      %1732 = vdwg.mxu0
      %v1733 = vrot.slane %v952, 7
      %v1734 = vrot.slane %v953, 7
      %v1735 = vrot.slane %v954, 7
      %v1736 = vrot.slane %v955, 7
      %v1737 = vrot.slane %v956, 7
      %v1738 = vrot.slane %v957, 7
      %v1739 = vrot.slane %v958, 7
      %v1740 = vrot.slane %v959, 7
      %v1741 = vrot.slane %v960, 7
      %v1742 = vrot.slane %v961, 7
      %v1743 = vrot.slane %v962, 7
      %v1744 = vrot.slane %v963, 7
      %v1745 = vrot.slane %v964, 7
      %v1746 = vrot.slane %v965, 7
      %v1747 = vrot.slane %v966, 7
      %v1748 = vrot.slane %v967, 7
      %v1749 = vrot.slane %v968, 7
      %v1750 = vrot.slane %v969, 7
      %v1751 = vrot.slane %v970, 7
      %v1752 = vrot.slane %v971, 7
      %v1753 = vrot.slane %v972, 7
      %v1754 = vrot.slane %v973, 7
      %v1755 = vrot.slane %v974, 7
      %v1756 = vrot.slane %v975, 7
      %v1757 = vrot.slane %v976, 7
      %v1758 = vrot.slane %v977, 7
      %v1759 = vrot.slane %v978, 7
      %v1760 = vrot.slane %v979, 7
      %v1761 = vrot.slane %v980, 7
      %v1762 = vrot.slane %v981, 7
      %v1763 = vrot.slane %v982, 7
      %v1764 = vrot.slane %v983, 7
      %v1765 = vrot.slane %v984, 7
      %v1766 = vrot.slane %v985, 7
      %v1767 = vrot.slane %v986, 7
      %v1768 = vrot.slane %v987, 7
      %v1769 = vrot.slane %v988, 7
      %v1770 = vrot.slane %v989, 7
      %v1771 = vrot.slane %v990, 7
      %v1772 = vrot.slane %v991, 7
      %v1773 = vrot.slane %v992, 7
      %vm1774 = vcmp.lt.s32.totalorder %v1035, 1
      %v1775 = vsel %vm1774, %v1772, %v1773
      %v1776 = vsel %vm1774, %v1771, %v1772
      %v1777 = vsel %vm1774, %v1770, %v1771
      %v1778 = vsel %vm1774, %v1769, %v1770
      %v1779 = vsel %vm1774, %v1768, %v1769
      %v1780 = vsel %vm1774, %v1767, %v1768
      %v1781 = vsel %vm1774, %v1766, %v1767
      %v1782 = vsel %vm1774, %v1765, %v1766
      %v1783 = vsel %vm1774, %v1764, %v1765
      %v1784 = vsel %vm1774, %v1763, %v1764
      %v1785 = vsel %vm1774, %v1762, %v1763
      %v1786 = vsel %vm1774, %v1761, %v1762
      %v1787 = vsel %vm1774, %v1760, %v1761
      %v1788 = vsel %vm1774, %v1759, %v1760
      %v1789 = vsel %vm1774, %v1758, %v1759
      %v1790 = vsel %vm1774, %v1757, %v1758
      %v1791 = vsel %vm1774, %v1756, %v1757
      %v1792 = vsel %vm1774, %v1755, %v1756
      %v1793 = vsel %vm1774, %v1754, %v1755
      %v1794 = vsel %vm1774, %v1753, %v1754
      %v1795 = vsel %vm1774, %v1752, %v1753
      %v1796 = vsel %vm1774, %v1751, %v1752
      %v1797 = vsel %vm1774, %v1750, %v1751
      %v1798 = vsel %vm1774, %v1749, %v1750
      %v1799 = vsel %vm1774, %v1748, %v1749
      %v1800 = vsel %vm1774, %v1747, %v1748
      %v1801 = vsel %vm1774, %v1746, %v1747
      %v1802 = vsel %vm1774, %v1745, %v1746
      %v1803 = vsel %vm1774, %v1744, %v1745
      %v1804 = vsel %vm1774, %v1743, %v1744
      %v1805 = vsel %vm1774, %v1742, %v1743
      %v1806 = vsel %vm1774, %v1741, %v1742
      %v1807 = vsel %vm1774, %v1740, %v1741
      %v1808 = vsel %vm1774, %v1739, %v1740
      %v1809 = vsel %vm1774, %v1738, %v1739
      %v1810 = vsel %vm1774, %v1737, %v1738
      %v1811 = vsel %vm1774, %v1736, %v1737
      %v1812 = vsel %vm1774, %v1735, %v1736
      %v1813 = vsel %vm1774, %v1734, %v1735
      %v1814 = vsel %vm1774, %v1733, %v1734
      %v1815 = vsel %vm1774, %v1773, %v1733
      %v1816 = vld [vmem:[%s5 + $0x100] sm:$0xff]
      %v1817 = vld [vmem:[%s5 + $0x108] sm:$0xff]
      %v1818 = vld [vmem:[%s5 + $0x110] sm:$0xff]
      %v1819 = vld [vmem:[%s5 + $0x118] sm:$0xff]
      %v1820 = vld [vmem:[%s5 + $0x120] sm:$0xff]
      %v1821 = vld [vmem:[%s5 + $0x128] sm:$0xff]
      %v1822 = vld [vmem:[%s5 + $0x130] sm:$0xff]
      %v1823 = vld [vmem:[%s5 + $0x138] sm:$0xff]
      %v1824 = vld [vmem:[%s5 + $0x140] sm:$0xff]
      %v1825 = vld [vmem:[%s5 + $0x148] sm:$0xff]
      %v1826 = vld [vmem:[%s5 + $0x150] sm:$0xff]
      %v1827 = vld [vmem:[%s5 + $0x158] sm:$0xff]
      %v1828 = vld [vmem:[%s5 + $0x160] sm:$0xff]
      %v1829 = vld [vmem:[%s5 + $0x168] sm:$0xff]
      %v1830 = vld [vmem:[%s5 + $0x170] sm:$0xff]
      %v1831 = vld [vmem:[%s5 + $0x178] sm:$0xff]
      %1832 = vmatprep.subr.mxu0 0.0
      %1833 = vmatpush1.msra.mxu0 %v1831
      %1834 = vmatprep.subr.mxu0 0.0
      %1835 = vmatpush1.msra.mxu0 %v1830
      %1836 = vmatprep.subr.mxu0 0.0
      %1837 = vmatpush1.msra.mxu0 %v1829
      %1838 = vmatprep.subr.mxu0 0.0
      %1839 = vmatpush1.msra.mxu0 %v1828
      %1840 = vmatprep.subr.mxu0 0.0
      %1841 = vmatpush1.msra.mxu0 %v1827
      %1842 = vmatprep.subr.mxu0 0.0
      %1843 = vmatpush1.msra.mxu0 %v1826
      %1844 = vmatprep.subr.mxu0 0.0
      %1845 = vmatpush1.msra.mxu0 %v1825
      %1846 = vmatprep.subr.mxu0 0.0
      %1847 = vmatpush1.msra.mxu0 %v1824
      %1848 = vmatprep.subr.mxu0 0.0
      %1849 = vmatpush1.msra.mxu0 %v1823
      %1850 = vmatprep.subr.mxu0 0.0
      %1851 = vmatpush1.msra.mxu0 %v1822
      %1852 = vmatprep.subr.mxu0 0.0
      %1853 = vmatpush1.msra.mxu0 %v1821
      %1854 = vmatprep.subr.mxu0 0.0
      %1855 = vmatpush1.msra.mxu0 %v1820
      %1856 = vmatprep.subr.mxu0 0.0
      %1857 = vmatpush1.msra.mxu0 %v1819
      %1858 = vmatprep.subr.mxu0 0.0
      %1859 = vmatpush1.msra.mxu0 %v1818
      %1860 = vmatprep.subr.mxu0 0.0
      %1861 = vmatpush1.msra.mxu0 %v1817
      %1862 = vmatprep.subr.mxu0 0.0
      %1863 = vmatpush1.msra.mxu0 %v1816
      %1864 = vmatprep.subr.mxu0 0.0
      %1865 = vmatpush2.msra.mxu0 0.0
      %1866 = vmatprep.subr.mxu0 0.0
      %1867 = vmatpush2.msra.mxu0 0.0
      %1868 = vmatprep.subr.mxu0 0.0
      %1869 = vmatpush2.msra.mxu0 0.0
      %1870 = vmatprep.subr.mxu0 0.0
      %1871 = vmatpush2.msra.mxu0 0.0
      %1872 = vmatprep.subr.mxu0 0.0
      %1873 = vmatpush2.msra.mxu0 0.0
      %1874 = vmatprep.subr.mxu0 0.0
      %1875 = vmatpush2.msra.mxu0 0.0
      %1876 = vmatprep.subr.mxu0 0.0
      %1877 = vmatpush2.msra.mxu0 0.0
      %1878 = vmatprep.subr.mxu0 0.0
      %1879 = vmatpush2.msra.mxu0 0.0
      %1880 = vmatprep.subr.mxu0 0.0
      %1881 = vmatpush2.msra.mxu0 0.0
      %1882 = vmatprep.subr.mxu0 0.0
      %1883 = vmatpush2.msra.mxu0 0.0
      %1884 = vmatprep.subr.mxu0 0.0
      %1885 = vmatpush2.msra.mxu0 0.0
      %1886 = vmatprep.subr.mxu0 0.0
      %1887 = vmatpush2.msra.mxu0 0.0
      %1888 = vmatprep.subr.mxu0 0.0
      %1889 = vmatpush2.msra.mxu0 0.0
      %1890 = vmatprep.subr.mxu0 0.0
      %1891 = vmatpush2.msra.mxu0 0.0
      %1892 = vmatprep.subr.mxu0 0.0
      %1893 = vmatpush2.msra.mxu0 0.0
      %1894 = vmatprep.subr.mxu0 0.0
      %1895 = vmatpush2.msra.mxu0 0.0
      %1896 = vmatprep.mubr.f32.mxu0 0.0
      %1897 = vmatmul.mubr.f32.gmra.mxu0 %v1776
      %v1898 = vpop.f32.mrf.mxu0
      %v1899 = vadd.f32 0.0, %v1898
      %v1900 = vpop.f32.mrf.mxu0
      %1901 = vmatprep.mubr.f32.mxu0 0.0
      %1902 = vmatmul.mubr.f32.gmra.mxu0 %v1775
      %v1903 = vpop.f32.mrf.mxu0
      %v1904 = vadd.f32 0.0, %v1903
      %v1905 = vpop.f32.mrf.mxu0
      %1906 = vmatprep.mubr.f32.mxu0 0.0
      %1907 = vmatmul.mubr.f32.gmra.mxu0 %v1815
      %v1908 = vpop.f32.mrf.mxu0
      %v1909 = vadd.f32 0.0, %v1908
      %v1910 = vpop.f32.mrf.mxu0
      %1911 = vmatprep.mubr.f32.mxu0 0.0
      %1912 = vmatmul.mubr.f32.gmra.mxu0 %v1814
      %v1913 = vpop.f32.mrf.mxu0
      %v1914 = vadd.f32 0.0, %v1913
      %v1915 = vpop.f32.mrf.mxu0
      %1916 = vmatprep.mubr.f32.mxu0 0.0
      %1917 = vmatmul.mubr.f32.gmra.mxu0 %v1813
      %v1918 = vpop.f32.mrf.mxu0
      %v1919 = vadd.f32 0.0, %v1918
      %v1920 = vpop.f32.mrf.mxu0
      %1921 = vmatprep.mubr.f32.mxu0 0.0
      %1922 = vmatmul.mubr.f32.gmra.mxu0 %v1812
      %v1923 = vpop.f32.mrf.mxu0
      %v1924 = vadd.f32 0.0, %v1923
      %v1925 = vpop.f32.mrf.mxu0
      %1926 = vmatprep.mubr.f32.mxu0 0.0
      %1927 = vmatmul.mubr.f32.gmra.mxu0 %v1811
      %v1928 = vpop.f32.mrf.mxu0
      %v1929 = vadd.f32 0.0, %v1928
      %v1930 = vpop.f32.mrf.mxu0
      %1931 = vmatprep.mubr.f32.mxu0 0.0
      %1932 = vmatmul.mubr.f32.gmra.mxu0 %v1810
      %v1933 = vpop.f32.mrf.mxu0
      %v1934 = vadd.f32 0.0, %v1933
      %v1935 = vpop.f32.mrf.mxu0
      %1936 = vmatprep.mubr.f32.mxu0 0.0
      %1937 = vmatmul.mubr.f32.gmra.mxu0 %v1809
      %v1938 = vpop.f32.mrf.mxu0
      %v1939 = vadd.f32 0.0, %v1938
      %v1940 = vpop.f32.mrf.mxu0
      %1941 = vmatprep.mubr.f32.mxu0 0.0
      %1942 = vmatmul.mubr.f32.gmra.mxu0 %v1808
      %v1943 = vpop.f32.mrf.mxu0
      %v1944 = vadd.f32 0.0, %v1943
      %v1945 = vpop.f32.mrf.mxu0
      %1946 = vmatprep.mubr.f32.mxu0 0.0
      %1947 = vmatmul.mubr.f32.gmra.mxu0 %v1807
      %v1948 = vpop.f32.mrf.mxu0
      %v1949 = vadd.f32 0.0, %v1948
      %v1950 = vpop.f32.mrf.mxu0
      %1951 = vmatprep.mubr.f32.mxu0 0.0
      %1952 = vmatmul.mubr.f32.gmra.mxu0 %v1806
      %v1953 = vpop.f32.mrf.mxu0
      %v1954 = vadd.f32 0.0, %v1953
      %v1955 = vpop.f32.mrf.mxu0
      %1956 = vmatprep.mubr.f32.mxu0 0.0
      %1957 = vmatmul.mubr.f32.gmra.mxu0 %v1805
      %v1958 = vpop.f32.mrf.mxu0
      %v1959 = vadd.f32 0.0, %v1958
      %v1960 = vpop.f32.mrf.mxu0
      %1961 = vmatprep.mubr.f32.mxu0 0.0
      %1962 = vmatmul.mubr.f32.gmra.mxu0 %v1804
      %v1963 = vpop.f32.mrf.mxu0
      %v1964 = vadd.f32 0.0, %v1963
      %v1965 = vpop.f32.mrf.mxu0
      %1966 = vmatprep.mubr.f32.mxu0 0.0
      %1967 = vmatmul.mubr.f32.gmra.mxu0 %v1803
      %v1968 = vpop.f32.mrf.mxu0
      %v1969 = vadd.f32 0.0, %v1968
      %v1970 = vpop.f32.mrf.mxu0
      %1971 = vmatprep.mubr.f32.mxu0 0.0
      %1972 = vmatmul.mubr.f32.gmra.mxu0 %v1802
      %v1973 = vpop.f32.mrf.mxu0
      %v1974 = vadd.f32 0.0, %v1973
      %v1975 = vpop.f32.mrf.mxu0
      %1976 = vmatprep.mubr.f32.mxu0 0.0
      %1977 = vmatmul.mubr.f32.gmra.mxu0 %v1801
      %v1978 = vpop.f32.mrf.mxu0
      %v1979 = vadd.f32 0.0, %v1978
      %v1980 = vpop.f32.mrf.mxu0
      %1981 = vmatprep.mubr.f32.mxu0 0.0
      %1982 = vmatmul.mubr.f32.gmra.mxu0 %v1800
      %v1983 = vpop.f32.mrf.mxu0
      %v1984 = vadd.f32 0.0, %v1983
      %v1985 = vpop.f32.mrf.mxu0
      %1986 = vmatprep.mubr.f32.mxu0 0.0
      %1987 = vmatmul.mubr.f32.gmra.mxu0 %v1799
      %v1988 = vpop.f32.mrf.mxu0
      %v1989 = vadd.f32 0.0, %v1988
      %v1990 = vpop.f32.mrf.mxu0
      %1991 = vmatprep.mubr.f32.mxu0 0.0
      %1992 = vmatmul.mubr.f32.gmra.mxu0 %v1798
      %v1993 = vpop.f32.mrf.mxu0
      %v1994 = vadd.f32 0.0, %v1993
      %v1995 = vpop.f32.mrf.mxu0
      %1996 = vmatprep.mubr.f32.mxu0 0.0
      %1997 = vmatmul.mubr.f32.gmra.mxu0 %v1797
      %v1998 = vpop.f32.mrf.mxu0
      %v1999 = vadd.f32 0.0, %v1998
      %v2000 = vpop.f32.mrf.mxu0
      %2001 = vmatprep.mubr.f32.mxu0 0.0
      %2002 = vmatmul.mubr.f32.gmra.mxu0 %v1796
      %v2003 = vpop.f32.mrf.mxu0
      %v2004 = vadd.f32 0.0, %v2003
      %v2005 = vpop.f32.mrf.mxu0
      %2006 = vmatprep.mubr.f32.mxu0 0.0
      %2007 = vmatmul.mubr.f32.gmra.mxu0 %v1795
      %v2008 = vpop.f32.mrf.mxu0
      %v2009 = vadd.f32 0.0, %v2008
      %v2010 = vpop.f32.mrf.mxu0
      %2011 = vmatprep.mubr.f32.mxu0 0.0
      %2012 = vmatmul.mubr.f32.gmra.mxu0 %v1794
      %v2013 = vpop.f32.mrf.mxu0
      %v2014 = vadd.f32 0.0, %v2013
      %v2015 = vpop.f32.mrf.mxu0
      %2016 = vmatprep.mubr.f32.mxu0 0.0
      %2017 = vmatmul.mubr.f32.gmra.mxu0 %v1793
      %v2018 = vpop.f32.mrf.mxu0
      %v2019 = vadd.f32 0.0, %v2018
      %v2020 = vpop.f32.mrf.mxu0
      %2021 = vmatprep.mubr.f32.mxu0 0.0
      %2022 = vmatmul.mubr.f32.gmra.mxu0 %v1792
      %v2023 = vpop.f32.mrf.mxu0
      %v2024 = vadd.f32 0.0, %v2023
      %v2025 = vpop.f32.mrf.mxu0
      %2026 = vmatprep.mubr.f32.mxu0 0.0
      %2027 = vmatmul.mubr.f32.gmra.mxu0 %v1791
      %v2028 = vpop.f32.mrf.mxu0
      %v2029 = vadd.f32 0.0, %v2028
      %v2030 = vpop.f32.mrf.mxu0
      %2031 = vmatprep.mubr.f32.mxu0 0.0
      %2032 = vmatmul.mubr.f32.gmra.mxu0 %v1790
      %v2033 = vpop.f32.mrf.mxu0
      %v2034 = vadd.f32 0.0, %v2033
      %v2035 = vpop.f32.mrf.mxu0
      %2036 = vmatprep.mubr.f32.mxu0 0.0
      %2037 = vmatmul.mubr.f32.gmra.mxu0 %v1789
      %v2038 = vpop.f32.mrf.mxu0
      %v2039 = vadd.f32 0.0, %v2038
      %v2040 = vpop.f32.mrf.mxu0
      %2041 = vmatprep.mubr.f32.mxu0 0.0
      %2042 = vmatmul.mubr.f32.gmra.mxu0 %v1788
      %v2043 = vpop.f32.mrf.mxu0
      %v2044 = vadd.f32 0.0, %v2043
      %v2045 = vpop.f32.mrf.mxu0
      %2046 = vmatprep.mubr.f32.mxu0 0.0
      %2047 = vmatmul.mubr.f32.gmra.mxu0 %v1787
      %v2048 = vpop.f32.mrf.mxu0
      %v2049 = vadd.f32 0.0, %v2048
      %v2050 = vpop.f32.mrf.mxu0
      %2051 = vmatprep.mubr.f32.mxu0 0.0
      %2052 = vmatmul.mubr.f32.gmra.mxu0 %v1786
      %v2053 = vpop.f32.mrf.mxu0
      %v2054 = vadd.f32 0.0, %v2053
      %v2055 = vpop.f32.mrf.mxu0
      %2056 = vmatprep.mubr.f32.mxu0 0.0
      %2057 = vmatmul.mubr.f32.gmra.mxu0 %v1785
      %v2058 = vpop.f32.mrf.mxu0
      %v2059 = vadd.f32 0.0, %v2058
      %v2060 = vpop.f32.mrf.mxu0
      %2061 = vmatprep.mubr.f32.mxu0 0.0
      %2062 = vmatmul.mubr.f32.gmra.mxu0 %v1784
      %v2063 = vpop.f32.mrf.mxu0
      %v2064 = vadd.f32 0.0, %v2063
      %v2065 = vpop.f32.mrf.mxu0
      %2066 = vmatprep.mubr.f32.mxu0 0.0
      %2067 = vmatmul.mubr.f32.gmra.mxu0 %v1783
      %v2068 = vpop.f32.mrf.mxu0
      %v2069 = vadd.f32 0.0, %v2068
      %v2070 = vpop.f32.mrf.mxu0
      %2071 = vmatprep.mubr.f32.mxu0 0.0
      %2072 = vmatmul.mubr.f32.gmra.mxu0 %v1782
      %v2073 = vpop.f32.mrf.mxu0
      %v2074 = vadd.f32 0.0, %v2073
      %v2075 = vpop.f32.mrf.mxu0
      %2076 = vmatprep.mubr.f32.mxu0 0.0
      %2077 = vmatmul.mubr.f32.gmra.mxu0 %v1781
      %v2078 = vpop.f32.mrf.mxu0
      %v2079 = vadd.f32 0.0, %v2078
      %v2080 = vpop.f32.mrf.mxu0
      %2081 = vmatprep.mubr.f32.mxu0 0.0
      %2082 = vmatmul.mubr.f32.gmra.mxu0 %v1780
      %v2083 = vpop.f32.mrf.mxu0
      %v2084 = vadd.f32 0.0, %v2083
      %v2085 = vpop.f32.mrf.mxu0
      %2086 = vmatprep.mubr.f32.mxu0 0.0
      %2087 = vmatmul.mubr.f32.gmra.mxu0 %v1779
      %v2088 = vpop.f32.mrf.mxu0
      %v2089 = vadd.f32 0.0, %v2088
      %v2090 = vpop.f32.mrf.mxu0
      %2091 = vmatprep.mubr.f32.mxu0 0.0
      %2092 = vmatmul.mubr.f32.gmra.mxu0 %v1778
      %v2093 = vpop.f32.mrf.mxu0
      %v2094 = vadd.f32 0.0, %v2093
      %v2095 = vpop.f32.mrf.mxu0
      %2096 = vmatprep.mubr.f32.mxu0 0.0
      %2097 = vmatmul.mubr.f32.gmra.mxu0 %v1777
      %v2098 = vpop.f32.mrf.mxu0
      %v2099 = vadd.f32 0.0, %v2098
      %v2100 = vpop.f32.mrf.mxu0
      %2101 = vdwg.mxu0
      %v2102 = vadd.f32 %v1530, %v1899
      %v2103 = vadd.f32 %v1535, %v1904
      %v2104 = vadd.f32 %v1540, %v1909
      %v2105 = vadd.f32 %v1545, %v1914
      %v2106 = vadd.f32 %v1550, %v1919
      %v2107 = vadd.f32 %v1555, %v1924
      %v2108 = vadd.f32 %v1560, %v1929
      %v2109 = vadd.f32 %v1565, %v1934
      %v2110 = vadd.f32 %v1570, %v1939
      %v2111 = vadd.f32 %v1575, %v1944
      %v2112 = vadd.f32 %v1580, %v1949
      %v2113 = vadd.f32 %v1585, %v1954
      %v2114 = vadd.f32 %v1590, %v1959
      %v2115 = vadd.f32 %v1595, %v1964
      %v2116 = vadd.f32 %v1600, %v1969
      %v2117 = vadd.f32 %v1605, %v1974
      %v2118 = vadd.f32 %v1610, %v1979
      %v2119 = vadd.f32 %v1615, %v1984
      %v2120 = vadd.f32 %v1620, %v1989
      %v2121 = vadd.f32 %v1625, %v1994
      %v2122 = vadd.f32 %v1630, %v1999
      %v2123 = vadd.f32 %v1635, %v2004
      %v2124 = vadd.f32 %v1640, %v2009
      %v2125 = vadd.f32 %v1645, %v2014
      %v2126 = vadd.f32 %v1650, %v2019
      %v2127 = vadd.f32 %v1655, %v2024
      %v2128 = vadd.f32 %v1660, %v2029
      %v2129 = vadd.f32 %v1665, %v2034
      %v2130 = vadd.f32 %v1670, %v2039
      %v2131 = vadd.f32 %v1675, %v2044
      %v2132 = vadd.f32 %v1680, %v2049
      %v2133 = vadd.f32 %v1685, %v2054
      %v2134 = vadd.f32 %v1690, %v2059
      %v2135 = vadd.f32 %v1695, %v2064
      %v2136 = vadd.f32 %v1700, %v2069
      %v2137 = vadd.f32 %v1705, %v2074
      %v2138 = vadd.f32 %v1710, %v2079
      %v2139 = vadd.f32 %v1715, %v2084
      %v2140 = vadd.f32 %v1720, %v2089
      %v2141 = vadd.f32 %v1725, %v2094
      %v2142 = vadd.f32 %v1730, %v2099
      %v2143 = vld [vmem:[%s5 + $0x180] sm:$0xff]
      %v2144 = vld [vmem:[%s5 + $0x188] sm:$0xff]
      %v2145 = vld [vmem:[%s5 + $0x190] sm:$0xff]
      %v2146 = vld [vmem:[%s5 + $0x198] sm:$0xff]
      %v2147 = vld [vmem:[%s5 + $0x1a0] sm:$0xff]
      %v2148 = vld [vmem:[%s5 + $0x1a8] sm:$0xff]
      %v2149 = vld [vmem:[%s5 + $0x1b0] sm:$0xff]
      %v2150 = vld [vmem:[%s5 + $0x1b8] sm:$0xff]
      %v2151 = vld [vmem:[%s5 + $0x1c0] sm:$0xff]
      %v2152 = vld [vmem:[%s5 + $0x1c8] sm:$0xff]
      %v2153 = vld [vmem:[%s5 + $0x1d0] sm:$0xff]
      %v2154 = vld [vmem:[%s5 + $0x1d8] sm:$0xff]
      %v2155 = vld [vmem:[%s5 + $0x1e0] sm:$0xff]
      %v2156 = vld [vmem:[%s5 + $0x1e8] sm:$0xff]
      %v2157 = vld [vmem:[%s5 + $0x1f0] sm:$0xff]
      %v2158 = vld [vmem:[%s5 + $0x1f8] sm:$0xff]
      %2159 = vmatprep.subr.mxu0 0.0
      %2160 = vmatpush1.msra.mxu0 %v2158
      %2161 = vmatprep.subr.mxu0 0.0
      %2162 = vmatpush1.msra.mxu0 %v2157
      %2163 = vmatprep.subr.mxu0 0.0
      %2164 = vmatpush1.msra.mxu0 %v2156
      %2165 = vmatprep.subr.mxu0 0.0
      %2166 = vmatpush1.msra.mxu0 %v2155
      %2167 = vmatprep.subr.mxu0 0.0
      %2168 = vmatpush1.msra.mxu0 %v2154
      %2169 = vmatprep.subr.mxu0 0.0
      %2170 = vmatpush1.msra.mxu0 %v2153
      %2171 = vmatprep.subr.mxu0 0.0
      %2172 = vmatpush1.msra.mxu0 %v2152
      %2173 = vmatprep.subr.mxu0 0.0
      %2174 = vmatpush1.msra.mxu0 %v2151
      %2175 = vmatprep.subr.mxu0 0.0
      %2176 = vmatpush1.msra.mxu0 %v2150
      %2177 = vmatprep.subr.mxu0 0.0
      %2178 = vmatpush1.msra.mxu0 %v2149
      %2179 = vmatprep.subr.mxu0 0.0
      %2180 = vmatpush1.msra.mxu0 %v2148
      %2181 = vmatprep.subr.mxu0 0.0
      %2182 = vmatpush1.msra.mxu0 %v2147
      %2183 = vmatprep.subr.mxu0 0.0
      %2184 = vmatpush1.msra.mxu0 %v2146
      %2185 = vmatprep.subr.mxu0 0.0
      %2186 = vmatpush1.msra.mxu0 %v2145
      %2187 = vmatprep.subr.mxu0 0.0
      %2188 = vmatpush1.msra.mxu0 %v2144
      %2189 = vmatprep.subr.mxu0 0.0
      %2190 = vmatpush1.msra.mxu0 %v2143
      %2191 = vmatprep.subr.mxu0 0.0
      %2192 = vmatpush2.msra.mxu0 0.0
      %2193 = vmatprep.subr.mxu0 0.0
      %2194 = vmatpush2.msra.mxu0 0.0
      %2195 = vmatprep.subr.mxu0 0.0
      %2196 = vmatpush2.msra.mxu0 0.0
      %2197 = vmatprep.subr.mxu0 0.0
      %2198 = vmatpush2.msra.mxu0 0.0
      %2199 = vmatprep.subr.mxu0 0.0
      %2200 = vmatpush2.msra.mxu0 0.0
      %2201 = vmatprep.subr.mxu0 0.0
      %2202 = vmatpush2.msra.mxu0 0.0
      %2203 = vmatprep.subr.mxu0 0.0
      %2204 = vmatpush2.msra.mxu0 0.0
      %2205 = vmatprep.subr.mxu0 0.0
      %2206 = vmatpush2.msra.mxu0 0.0
      %2207 = vmatprep.subr.mxu0 0.0
      %2208 = vmatpush2.msra.mxu0 0.0
      %2209 = vmatprep.subr.mxu0 0.0
      %2210 = vmatpush2.msra.mxu0 0.0
      %2211 = vmatprep.subr.mxu0 0.0
      %2212 = vmatpush2.msra.mxu0 0.0
      %2213 = vmatprep.subr.mxu0 0.0
      %2214 = vmatpush2.msra.mxu0 0.0
      %2215 = vmatprep.subr.mxu0 0.0
      %2216 = vmatpush2.msra.mxu0 0.0
      %2217 = vmatprep.subr.mxu0 0.0
      %2218 = vmatpush2.msra.mxu0 0.0
      %2219 = vmatprep.subr.mxu0 0.0
      %2220 = vmatpush2.msra.mxu0 0.0
      %2221 = vmatprep.subr.mxu0 0.0
      %2222 = vmatpush2.msra.mxu0 0.0
      %2223 = vmatprep.mubr.f32.mxu0 0.0
      %2224 = vmatmul.mubr.f32.gmra.mxu0 %v1815
      %v2225 = vpop.f32.mrf.mxu0
      %v2226 = vadd.f32 0.0, %v2225
      %v2227 = vpop.f32.mrf.mxu0
      %2228 = vmatprep.mubr.f32.mxu0 0.0
      %2229 = vmatmul.mubr.f32.gmra.mxu0 %v1814
      %v2230 = vpop.f32.mrf.mxu0
      %v2231 = vadd.f32 0.0, %v2230
      %v2232 = vpop.f32.mrf.mxu0
      %2233 = vmatprep.mubr.f32.mxu0 0.0
      %2234 = vmatmul.mubr.f32.gmra.mxu0 %v1813
      %v2235 = vpop.f32.mrf.mxu0
      %v2236 = vadd.f32 0.0, %v2235
      %v2237 = vpop.f32.mrf.mxu0
      %2238 = vmatprep.mubr.f32.mxu0 0.0
      %2239 = vmatmul.mubr.f32.gmra.mxu0 %v1812
      %v2240 = vpop.f32.mrf.mxu0
      %v2241 = vadd.f32 0.0, %v2240
      %v2242 = vpop.f32.mrf.mxu0
      %2243 = vmatprep.mubr.f32.mxu0 0.0
      %2244 = vmatmul.mubr.f32.gmra.mxu0 %v1811
      %v2245 = vpop.f32.mrf.mxu0
      %v2246 = vadd.f32 0.0, %v2245
      %v2247 = vpop.f32.mrf.mxu0
      %2248 = vmatprep.mubr.f32.mxu0 0.0
      %2249 = vmatmul.mubr.f32.gmra.mxu0 %v1810
      %v2250 = vpop.f32.mrf.mxu0
      %v2251 = vadd.f32 0.0, %v2250
      %v2252 = vpop.f32.mrf.mxu0
      %2253 = vmatprep.mubr.f32.mxu0 0.0
      %2254 = vmatmul.mubr.f32.gmra.mxu0 %v1809
      %v2255 = vpop.f32.mrf.mxu0
      %v2256 = vadd.f32 0.0, %v2255
      %v2257 = vpop.f32.mrf.mxu0
      %2258 = vmatprep.mubr.f32.mxu0 0.0
      %2259 = vmatmul.mubr.f32.gmra.mxu0 %v1808
      %v2260 = vpop.f32.mrf.mxu0
      %v2261 = vadd.f32 0.0, %v2260
      %v2262 = vpop.f32.mrf.mxu0
      %2263 = vmatprep.mubr.f32.mxu0 0.0
      %2264 = vmatmul.mubr.f32.gmra.mxu0 %v1807
      %v2265 = vpop.f32.mrf.mxu0
      %v2266 = vadd.f32 0.0, %v2265
      %v2267 = vpop.f32.mrf.mxu0
      %2268 = vmatprep.mubr.f32.mxu0 0.0
      %2269 = vmatmul.mubr.f32.gmra.mxu0 %v1806
      %v2270 = vpop.f32.mrf.mxu0
      %v2271 = vadd.f32 0.0, %v2270
      %v2272 = vpop.f32.mrf.mxu0
      %2273 = vmatprep.mubr.f32.mxu0 0.0
      %2274 = vmatmul.mubr.f32.gmra.mxu0 %v1805
      %v2275 = vpop.f32.mrf.mxu0
      %v2276 = vadd.f32 0.0, %v2275
      %v2277 = vpop.f32.mrf.mxu0
      %2278 = vmatprep.mubr.f32.mxu0 0.0
      %2279 = vmatmul.mubr.f32.gmra.mxu0 %v1804
      %v2280 = vpop.f32.mrf.mxu0
      %v2281 = vadd.f32 0.0, %v2280
      %v2282 = vpop.f32.mrf.mxu0
      %2283 = vmatprep.mubr.f32.mxu0 0.0
      %2284 = vmatmul.mubr.f32.gmra.mxu0 %v1803
      %v2285 = vpop.f32.mrf.mxu0
      %v2286 = vadd.f32 0.0, %v2285
      %v2287 = vpop.f32.mrf.mxu0
      %2288 = vmatprep.mubr.f32.mxu0 0.0
      %2289 = vmatmul.mubr.f32.gmra.mxu0 %v1802
      %v2290 = vpop.f32.mrf.mxu0
      %v2291 = vadd.f32 0.0, %v2290
      %v2292 = vpop.f32.mrf.mxu0
      %2293 = vmatprep.mubr.f32.mxu0 0.0
      %2294 = vmatmul.mubr.f32.gmra.mxu0 %v1801
      %v2295 = vpop.f32.mrf.mxu0
      %v2296 = vadd.f32 0.0, %v2295
      %v2297 = vpop.f32.mrf.mxu0
      %2298 = vmatprep.mubr.f32.mxu0 0.0
      %2299 = vmatmul.mubr.f32.gmra.mxu0 %v1800
      %v2300 = vpop.f32.mrf.mxu0
      %v2301 = vadd.f32 0.0, %v2300
      %v2302 = vpop.f32.mrf.mxu0
      %2303 = vmatprep.mubr.f32.mxu0 0.0
      %2304 = vmatmul.mubr.f32.gmra.mxu0 %v1799
      %v2305 = vpop.f32.mrf.mxu0
      %v2306 = vadd.f32 0.0, %v2305
      %v2307 = vpop.f32.mrf.mxu0
      %2308 = vmatprep.mubr.f32.mxu0 0.0
      %2309 = vmatmul.mubr.f32.gmra.mxu0 %v1798
      %v2310 = vpop.f32.mrf.mxu0
      %v2311 = vadd.f32 0.0, %v2310
      %v2312 = vpop.f32.mrf.mxu0
      %2313 = vmatprep.mubr.f32.mxu0 0.0
      %2314 = vmatmul.mubr.f32.gmra.mxu0 %v1797
      %v2315 = vpop.f32.mrf.mxu0
      %v2316 = vadd.f32 0.0, %v2315
      %v2317 = vpop.f32.mrf.mxu0
      %2318 = vmatprep.mubr.f32.mxu0 0.0
      %2319 = vmatmul.mubr.f32.gmra.mxu0 %v1796
      %v2320 = vpop.f32.mrf.mxu0
      %v2321 = vadd.f32 0.0, %v2320
      %v2322 = vpop.f32.mrf.mxu0
      %2323 = vmatprep.mubr.f32.mxu0 0.0
      %2324 = vmatmul.mubr.f32.gmra.mxu0 %v1795
      %v2325 = vpop.f32.mrf.mxu0
      %v2326 = vadd.f32 0.0, %v2325
      %v2327 = vpop.f32.mrf.mxu0
      %2328 = vmatprep.mubr.f32.mxu0 0.0
      %2329 = vmatmul.mubr.f32.gmra.mxu0 %v1794
      %v2330 = vpop.f32.mrf.mxu0
      %v2331 = vadd.f32 0.0, %v2330
      %v2332 = vpop.f32.mrf.mxu0
      %2333 = vmatprep.mubr.f32.mxu0 0.0
      %2334 = vmatmul.mubr.f32.gmra.mxu0 %v1793
      %v2335 = vpop.f32.mrf.mxu0
      %v2336 = vadd.f32 0.0, %v2335
      %v2337 = vpop.f32.mrf.mxu0
      %2338 = vmatprep.mubr.f32.mxu0 0.0
      %2339 = vmatmul.mubr.f32.gmra.mxu0 %v1792
      %v2340 = vpop.f32.mrf.mxu0
      %v2341 = vadd.f32 0.0, %v2340
      %v2342 = vpop.f32.mrf.mxu0
      %2343 = vmatprep.mubr.f32.mxu0 0.0
      %2344 = vmatmul.mubr.f32.gmra.mxu0 %v1791
      %v2345 = vpop.f32.mrf.mxu0
      %v2346 = vadd.f32 0.0, %v2345
      %v2347 = vpop.f32.mrf.mxu0
      %2348 = vmatprep.mubr.f32.mxu0 0.0
      %2349 = vmatmul.mubr.f32.gmra.mxu0 %v1790
      %v2350 = vpop.f32.mrf.mxu0
      %v2351 = vadd.f32 0.0, %v2350
      %v2352 = vpop.f32.mrf.mxu0
      %2353 = vmatprep.mubr.f32.mxu0 0.0
      %2354 = vmatmul.mubr.f32.gmra.mxu0 %v1789
      %v2355 = vpop.f32.mrf.mxu0
      %v2356 = vadd.f32 0.0, %v2355
      %v2357 = vpop.f32.mrf.mxu0
      %2358 = vmatprep.mubr.f32.mxu0 0.0
      %2359 = vmatmul.mubr.f32.gmra.mxu0 %v1788
      %v2360 = vpop.f32.mrf.mxu0
      %v2361 = vadd.f32 0.0, %v2360
      %v2362 = vpop.f32.mrf.mxu0
      %2363 = vmatprep.mubr.f32.mxu0 0.0
      %2364 = vmatmul.mubr.f32.gmra.mxu0 %v1787
      %v2365 = vpop.f32.mrf.mxu0
      %v2366 = vadd.f32 0.0, %v2365
      %v2367 = vpop.f32.mrf.mxu0
      %2368 = vmatprep.mubr.f32.mxu0 0.0
      %2369 = vmatmul.mubr.f32.gmra.mxu0 %v1786
      %v2370 = vpop.f32.mrf.mxu0
      %v2371 = vadd.f32 0.0, %v2370
      %v2372 = vpop.f32.mrf.mxu0
      %2373 = vmatprep.mubr.f32.mxu0 0.0
      %2374 = vmatmul.mubr.f32.gmra.mxu0 %v1785
      %v2375 = vpop.f32.mrf.mxu0
      %v2376 = vadd.f32 0.0, %v2375
      %v2377 = vpop.f32.mrf.mxu0
      %2378 = vmatprep.mubr.f32.mxu0 0.0
      %2379 = vmatmul.mubr.f32.gmra.mxu0 %v1784
      %v2380 = vpop.f32.mrf.mxu0
      %v2381 = vadd.f32 0.0, %v2380
      %v2382 = vpop.f32.mrf.mxu0
      %2383 = vmatprep.mubr.f32.mxu0 0.0
      %2384 = vmatmul.mubr.f32.gmra.mxu0 %v1783
      %v2385 = vpop.f32.mrf.mxu0
      %v2386 = vadd.f32 0.0, %v2385
      %v2387 = vpop.f32.mrf.mxu0
      %2388 = vmatprep.mubr.f32.mxu0 0.0
      %2389 = vmatmul.mubr.f32.gmra.mxu0 %v1782
      %v2390 = vpop.f32.mrf.mxu0
      %v2391 = vadd.f32 0.0, %v2390
      %v2392 = vpop.f32.mrf.mxu0
      %2393 = vmatprep.mubr.f32.mxu0 0.0
      %2394 = vmatmul.mubr.f32.gmra.mxu0 %v1781
      %v2395 = vpop.f32.mrf.mxu0
      %v2396 = vadd.f32 0.0, %v2395
      %v2397 = vpop.f32.mrf.mxu0
      %2398 = vmatprep.mubr.f32.mxu0 0.0
      %2399 = vmatmul.mubr.f32.gmra.mxu0 %v1780
      %v2400 = vpop.f32.mrf.mxu0
      %v2401 = vadd.f32 0.0, %v2400
      %v2402 = vpop.f32.mrf.mxu0
      %2403 = vmatprep.mubr.f32.mxu0 0.0
      %2404 = vmatmul.mubr.f32.gmra.mxu0 %v1779
      %v2405 = vpop.f32.mrf.mxu0
      %v2406 = vadd.f32 0.0, %v2405
      %v2407 = vpop.f32.mrf.mxu0
      %2408 = vmatprep.mubr.f32.mxu0 0.0
      %2409 = vmatmul.mubr.f32.gmra.mxu0 %v1778
      %v2410 = vpop.f32.mrf.mxu0
      %v2411 = vadd.f32 0.0, %v2410
      %v2412 = vpop.f32.mrf.mxu0
      %2413 = vmatprep.mubr.f32.mxu0 0.0
      %2414 = vmatmul.mubr.f32.gmra.mxu0 %v1777
      %v2415 = vpop.f32.mrf.mxu0
      %v2416 = vadd.f32 0.0, %v2415
      %v2417 = vpop.f32.mrf.mxu0
      %2418 = vmatprep.mubr.f32.mxu0 0.0
      %2419 = vmatmul.mubr.f32.gmra.mxu0 %v1776
      %v2420 = vpop.f32.mrf.mxu0
      %v2421 = vadd.f32 0.0, %v2420
      %v2422 = vpop.f32.mrf.mxu0
      %2423 = vmatprep.mubr.f32.mxu0 0.0
      %2424 = vmatmul.mubr.f32.gmra.mxu0 %v1775
      %v2425 = vpop.f32.mrf.mxu0
      %v2426 = vadd.f32 0.0, %v2425
      %v2427 = vpop.f32.mrf.mxu0
      %2428 = vdwg.mxu0
      %v2429 = vadd.f32 %v2102, %v2226
      %v2430 = vadd.f32 %v2103, %v2231
      %v2431 = vadd.f32 %v2104, %v2236
      %v2432 = vadd.f32 %v2105, %v2241
      %v2433 = vadd.f32 %v2106, %v2246
      %v2434 = vadd.f32 %v2107, %v2251
      %v2435 = vadd.f32 %v2108, %v2256
      %v2436 = vadd.f32 %v2109, %v2261
      %v2437 = vadd.f32 %v2110, %v2266
      %v2438 = vadd.f32 %v2111, %v2271
      %v2439 = vadd.f32 %v2112, %v2276
      %v2440 = vadd.f32 %v2113, %v2281
      %v2441 = vadd.f32 %v2114, %v2286
      %v2442 = vadd.f32 %v2115, %v2291
      %v2443 = vadd.f32 %v2116, %v2296
      %v2444 = vadd.f32 %v2117, %v2301
      %v2445 = vadd.f32 %v2118, %v2306
      %v2446 = vadd.f32 %v2119, %v2311
      %v2447 = vadd.f32 %v2120, %v2316
      %v2448 = vadd.f32 %v2121, %v2321
      %v2449 = vadd.f32 %v2122, %v2326
      %v2450 = vadd.f32 %v2123, %v2331
      %v2451 = vadd.f32 %v2124, %v2336
      %v2452 = vadd.f32 %v2125, %v2341
      %v2453 = vadd.f32 %v2126, %v2346
      %v2454 = vadd.f32 %v2127, %v2351
      %v2455 = vadd.f32 %v2128, %v2356
      %v2456 = vadd.f32 %v2129, %v2361
      %v2457 = vadd.f32 %v2130, %v2366
      %v2458 = vadd.f32 %v2131, %v2371
      %v2459 = vadd.f32 %v2132, %v2376
      %v2460 = vadd.f32 %v2133, %v2381
      %v2461 = vadd.f32 %v2134, %v2386
      %v2462 = vadd.f32 %v2135, %v2391
      %v2463 = vadd.f32 %v2136, %v2396
      %v2464 = vadd.f32 %v2137, %v2401
      %v2465 = vadd.f32 %v2138, %v2406
      %v2466 = vadd.f32 %v2139, %v2411
      %v2467 = vadd.f32 %v2140, %v2416
      %v2468 = vadd.f32 %v2141, %v2421
      %v2469 = vadd.f32 %v2142, %v2426
      %v2470 = vld [vmem:[%s5 + $0x200] sm:$0xff]
      %v2471 = vld [vmem:[%s5 + $0x208] sm:$0xff]
      %v2472 = vld [vmem:[%s5 + $0x210] sm:$0xff]
      %v2473 = vld [vmem:[%s5 + $0x218] sm:$0xff]
      %v2474 = vld [vmem:[%s5 + $0x220] sm:$0xff]
      %v2475 = vld [vmem:[%s5 + $0x228] sm:$0xff]
      %v2476 = vld [vmem:[%s5 + $0x230] sm:$0xff]
      %v2477 = vld [vmem:[%s5 + $0x238] sm:$0xff]
      %v2478 = vld [vmem:[%s5 + $0x240] sm:$0xff]
      %v2479 = vld [vmem:[%s5 + $0x248] sm:$0xff]
      %v2480 = vld [vmem:[%s5 + $0x250] sm:$0xff]
      %v2481 = vld [vmem:[%s5 + $0x258] sm:$0xff]
      %v2482 = vld [vmem:[%s5 + $0x260] sm:$0xff]
      %v2483 = vld [vmem:[%s5 + $0x268] sm:$0xff]
      %v2484 = vld [vmem:[%s5 + $0x270] sm:$0xff]
      %v2485 = vld [vmem:[%s5 + $0x278] sm:$0xff]
      %2486 = vmatprep.subr.mxu0 0.0
      %2487 = vmatpush1.msra.mxu0 %v2485
      %2488 = vmatprep.subr.mxu0 0.0
      %2489 = vmatpush1.msra.mxu0 %v2484
      %2490 = vmatprep.subr.mxu0 0.0
      %2491 = vmatpush1.msra.mxu0 %v2483
      %2492 = vmatprep.subr.mxu0 0.0
      %2493 = vmatpush1.msra.mxu0 %v2482
      %2494 = vmatprep.subr.mxu0 0.0
      %2495 = vmatpush1.msra.mxu0 %v2481
      %2496 = vmatprep.subr.mxu0 0.0
      %2497 = vmatpush1.msra.mxu0 %v2480
      %2498 = vmatprep.subr.mxu0 0.0
      %2499 = vmatpush1.msra.mxu0 %v2479
      %2500 = vmatprep.subr.mxu0 0.0
      %2501 = vmatpush1.msra.mxu0 %v2478
      %2502 = vmatprep.subr.mxu0 0.0
      %2503 = vmatpush1.msra.mxu0 %v2477
      %2504 = vmatprep.subr.mxu0 0.0
      %2505 = vmatpush1.msra.mxu0 %v2476
      %2506 = vmatprep.subr.mxu0 0.0
      %2507 = vmatpush1.msra.mxu0 %v2475
      %2508 = vmatprep.subr.mxu0 0.0
      %2509 = vmatpush1.msra.mxu0 %v2474
      %2510 = vmatprep.subr.mxu0 0.0
      %2511 = vmatpush1.msra.mxu0 %v2473
      %2512 = vmatprep.subr.mxu0 0.0
      %2513 = vmatpush1.msra.mxu0 %v2472
      %2514 = vmatprep.subr.mxu0 0.0
      %2515 = vmatpush1.msra.mxu0 %v2471
      %2516 = vmatprep.subr.mxu0 0.0
      %2517 = vmatpush1.msra.mxu0 %v2470
      %2518 = vmatprep.subr.mxu0 0.0
      %2519 = vmatpush2.msra.mxu0 0.0
      %2520 = vmatprep.subr.mxu0 0.0
      %2521 = vmatpush2.msra.mxu0 0.0
      %2522 = vmatprep.subr.mxu0 0.0
      %2523 = vmatpush2.msra.mxu0 0.0
      %2524 = vmatprep.subr.mxu0 0.0
      %2525 = vmatpush2.msra.mxu0 0.0
      %2526 = vmatprep.subr.mxu0 0.0
      %2527 = vmatpush2.msra.mxu0 0.0
      %2528 = vmatprep.subr.mxu0 0.0
      %2529 = vmatpush2.msra.mxu0 0.0
      %2530 = vmatprep.subr.mxu0 0.0
      %2531 = vmatpush2.msra.mxu0 0.0
      %2532 = vmatprep.subr.mxu0 0.0
      %2533 = vmatpush2.msra.mxu0 0.0
      %2534 = vmatprep.subr.mxu0 0.0
      %2535 = vmatpush2.msra.mxu0 0.0
      %2536 = vmatprep.subr.mxu0 0.0
      %2537 = vmatpush2.msra.mxu0 0.0
      %2538 = vmatprep.subr.mxu0 0.0
      %2539 = vmatpush2.msra.mxu0 0.0
      %2540 = vmatprep.subr.mxu0 0.0
      %2541 = vmatpush2.msra.mxu0 0.0
      %2542 = vmatprep.subr.mxu0 0.0
      %2543 = vmatpush2.msra.mxu0 0.0
      %2544 = vmatprep.subr.mxu0 0.0
      %2545 = vmatpush2.msra.mxu0 0.0
      %2546 = vmatprep.subr.mxu0 0.0
      %2547 = vmatpush2.msra.mxu0 0.0
      %2548 = vmatprep.subr.mxu0 0.0
      %2549 = vmatpush2.msra.mxu0 0.0
      %2550 = vmatprep.mubr.f32.mxu0 0.0
      %2551 = vmatmul.mubr.f32.gmra.mxu0 %v952
      %v2552 = vpop.f32.mrf.mxu0
      %v2553 = vadd.f32 0.0, %v2552
      %v2554 = vpop.f32.mrf.mxu0
      %2555 = vmatprep.mubr.f32.mxu0 0.0
      %2556 = vmatmul.mubr.f32.gmra.mxu0 %v953
      %v2557 = vpop.f32.mrf.mxu0
      %v2558 = vadd.f32 0.0, %v2557
      %v2559 = vpop.f32.mrf.mxu0
      %2560 = vmatprep.mubr.f32.mxu0 0.0
      %2561 = vmatmul.mubr.f32.gmra.mxu0 %v954
      %v2562 = vpop.f32.mrf.mxu0
      %v2563 = vadd.f32 0.0, %v2562
      %v2564 = vpop.f32.mrf.mxu0
      %2565 = vmatprep.mubr.f32.mxu0 0.0
      %2566 = vmatmul.mubr.f32.gmra.mxu0 %v955
      %v2567 = vpop.f32.mrf.mxu0
      %v2568 = vadd.f32 0.0, %v2567
      %v2569 = vpop.f32.mrf.mxu0
      %2570 = vmatprep.mubr.f32.mxu0 0.0
      %2571 = vmatmul.mubr.f32.gmra.mxu0 %v956
      %v2572 = vpop.f32.mrf.mxu0
      %v2573 = vadd.f32 0.0, %v2572
      %v2574 = vpop.f32.mrf.mxu0
      %2575 = vmatprep.mubr.f32.mxu0 0.0
      %2576 = vmatmul.mubr.f32.gmra.mxu0 %v957
      %v2577 = vpop.f32.mrf.mxu0
      %v2578 = vadd.f32 0.0, %v2577
      %v2579 = vpop.f32.mrf.mxu0
      %2580 = vmatprep.mubr.f32.mxu0 0.0
      %2581 = vmatmul.mubr.f32.gmra.mxu0 %v958
      %v2582 = vpop.f32.mrf.mxu0
      %v2583 = vadd.f32 0.0, %v2582
      %v2584 = vpop.f32.mrf.mxu0
      %2585 = vmatprep.mubr.f32.mxu0 0.0
      %2586 = vmatmul.mubr.f32.gmra.mxu0 %v959
      %v2587 = vpop.f32.mrf.mxu0
      %v2588 = vadd.f32 0.0, %v2587
      %v2589 = vpop.f32.mrf.mxu0
      %2590 = vmatprep.mubr.f32.mxu0 0.0
      %2591 = vmatmul.mubr.f32.gmra.mxu0 %v960
      %v2592 = vpop.f32.mrf.mxu0
      %v2593 = vadd.f32 0.0, %v2592
      %v2594 = vpop.f32.mrf.mxu0
      %2595 = vmatprep.mubr.f32.mxu0 0.0
      %2596 = vmatmul.mubr.f32.gmra.mxu0 %v961
      %v2597 = vpop.f32.mrf.mxu0
      %v2598 = vadd.f32 0.0, %v2597
      %v2599 = vpop.f32.mrf.mxu0
      %2600 = vmatprep.mubr.f32.mxu0 0.0
      %2601 = vmatmul.mubr.f32.gmra.mxu0 %v962
      %v2602 = vpop.f32.mrf.mxu0
      %v2603 = vadd.f32 0.0, %v2602
      %v2604 = vpop.f32.mrf.mxu0
      %2605 = vmatprep.mubr.f32.mxu0 0.0
      %2606 = vmatmul.mubr.f32.gmra.mxu0 %v963
      %v2607 = vpop.f32.mrf.mxu0
      %v2608 = vadd.f32 0.0, %v2607
      %v2609 = vpop.f32.mrf.mxu0
      %2610 = vmatprep.mubr.f32.mxu0 0.0
      %2611 = vmatmul.mubr.f32.gmra.mxu0 %v964
      %v2612 = vpop.f32.mrf.mxu0
      %v2613 = vadd.f32 0.0, %v2612
      %v2614 = vpop.f32.mrf.mxu0
      %2615 = vmatprep.mubr.f32.mxu0 0.0
      %2616 = vmatmul.mubr.f32.gmra.mxu0 %v965
      %v2617 = vpop.f32.mrf.mxu0
      %v2618 = vadd.f32 0.0, %v2617
      %v2619 = vpop.f32.mrf.mxu0
      %2620 = vmatprep.mubr.f32.mxu0 0.0
      %2621 = vmatmul.mubr.f32.gmra.mxu0 %v966
      %v2622 = vpop.f32.mrf.mxu0
      %v2623 = vadd.f32 0.0, %v2622
      %v2624 = vpop.f32.mrf.mxu0
      %2625 = vmatprep.mubr.f32.mxu0 0.0
      %2626 = vmatmul.mubr.f32.gmra.mxu0 %v967
      %v2627 = vpop.f32.mrf.mxu0
      %v2628 = vadd.f32 0.0, %v2627
      %v2629 = vpop.f32.mrf.mxu0
      %2630 = vmatprep.mubr.f32.mxu0 0.0
      %2631 = vmatmul.mubr.f32.gmra.mxu0 %v968
      %v2632 = vpop.f32.mrf.mxu0
      %v2633 = vadd.f32 0.0, %v2632
      %v2634 = vpop.f32.mrf.mxu0
      %2635 = vmatprep.mubr.f32.mxu0 0.0
      %2636 = vmatmul.mubr.f32.gmra.mxu0 %v969
      %v2637 = vpop.f32.mrf.mxu0
      %v2638 = vadd.f32 0.0, %v2637
      %v2639 = vpop.f32.mrf.mxu0
      %2640 = vmatprep.mubr.f32.mxu0 0.0
      %2641 = vmatmul.mubr.f32.gmra.mxu0 %v970
      %v2642 = vpop.f32.mrf.mxu0
      %v2643 = vadd.f32 0.0, %v2642
      %v2644 = vpop.f32.mrf.mxu0
      %2645 = vmatprep.mubr.f32.mxu0 0.0
      %2646 = vmatmul.mubr.f32.gmra.mxu0 %v971
      %v2647 = vpop.f32.mrf.mxu0
      %v2648 = vadd.f32 0.0, %v2647
      %v2649 = vpop.f32.mrf.mxu0
      %2650 = vmatprep.mubr.f32.mxu0 0.0
      %2651 = vmatmul.mubr.f32.gmra.mxu0 %v972
      %v2652 = vpop.f32.mrf.mxu0
      %v2653 = vadd.f32 0.0, %v2652
      %v2654 = vpop.f32.mrf.mxu0
      %2655 = vmatprep.mubr.f32.mxu0 0.0
      %2656 = vmatmul.mubr.f32.gmra.mxu0 %v973
      %v2657 = vpop.f32.mrf.mxu0
      %v2658 = vadd.f32 0.0, %v2657
      %v2659 = vpop.f32.mrf.mxu0
      %2660 = vmatprep.mubr.f32.mxu0 0.0
      %2661 = vmatmul.mubr.f32.gmra.mxu0 %v974
      %v2662 = vpop.f32.mrf.mxu0
      %v2663 = vadd.f32 0.0, %v2662
      %v2664 = vpop.f32.mrf.mxu0
      %2665 = vmatprep.mubr.f32.mxu0 0.0
      %2666 = vmatmul.mubr.f32.gmra.mxu0 %v975
      %v2667 = vpop.f32.mrf.mxu0
      %v2668 = vadd.f32 0.0, %v2667
      %v2669 = vpop.f32.mrf.mxu0
      %2670 = vmatprep.mubr.f32.mxu0 0.0
      %2671 = vmatmul.mubr.f32.gmra.mxu0 %v976
      %v2672 = vpop.f32.mrf.mxu0
      %v2673 = vadd.f32 0.0, %v2672
      %v2674 = vpop.f32.mrf.mxu0
      %2675 = vmatprep.mubr.f32.mxu0 0.0
      %2676 = vmatmul.mubr.f32.gmra.mxu0 %v977
      %v2677 = vpop.f32.mrf.mxu0
      %v2678 = vadd.f32 0.0, %v2677
      %v2679 = vpop.f32.mrf.mxu0
      %2680 = vmatprep.mubr.f32.mxu0 0.0
      %2681 = vmatmul.mubr.f32.gmra.mxu0 %v978
      %v2682 = vpop.f32.mrf.mxu0
      %v2683 = vadd.f32 0.0, %v2682
      %v2684 = vpop.f32.mrf.mxu0
      %2685 = vmatprep.mubr.f32.mxu0 0.0
      %2686 = vmatmul.mubr.f32.gmra.mxu0 %v979
      %v2687 = vpop.f32.mrf.mxu0
      %v2688 = vadd.f32 0.0, %v2687
      %v2689 = vpop.f32.mrf.mxu0
      %2690 = vmatprep.mubr.f32.mxu0 0.0
      %2691 = vmatmul.mubr.f32.gmra.mxu0 %v980
      %v2692 = vpop.f32.mrf.mxu0
      %v2693 = vadd.f32 0.0, %v2692
      %v2694 = vpop.f32.mrf.mxu0
      %2695 = vmatprep.mubr.f32.mxu0 0.0
      %2696 = vmatmul.mubr.f32.gmra.mxu0 %v981
      %v2697 = vpop.f32.mrf.mxu0
      %v2698 = vadd.f32 0.0, %v2697
      %v2699 = vpop.f32.mrf.mxu0
      %2700 = vmatprep.mubr.f32.mxu0 0.0
      %2701 = vmatmul.mubr.f32.gmra.mxu0 %v982
      %v2702 = vpop.f32.mrf.mxu0
      %v2703 = vadd.f32 0.0, %v2702
      %v2704 = vpop.f32.mrf.mxu0
      %2705 = vmatprep.mubr.f32.mxu0 0.0
      %2706 = vmatmul.mubr.f32.gmra.mxu0 %v983
      %v2707 = vpop.f32.mrf.mxu0
      %v2708 = vadd.f32 0.0, %v2707
      %v2709 = vpop.f32.mrf.mxu0
      %2710 = vmatprep.mubr.f32.mxu0 0.0
      %2711 = vmatmul.mubr.f32.gmra.mxu0 %v984
      %v2712 = vpop.f32.mrf.mxu0
      %v2713 = vadd.f32 0.0, %v2712
      %v2714 = vpop.f32.mrf.mxu0
      %2715 = vmatprep.mubr.f32.mxu0 0.0
      %2716 = vmatmul.mubr.f32.gmra.mxu0 %v985
      %v2717 = vpop.f32.mrf.mxu0
      %v2718 = vadd.f32 0.0, %v2717
      %v2719 = vpop.f32.mrf.mxu0
      %2720 = vmatprep.mubr.f32.mxu0 0.0
      %2721 = vmatmul.mubr.f32.gmra.mxu0 %v986
      %v2722 = vpop.f32.mrf.mxu0
      %v2723 = vadd.f32 0.0, %v2722
      %v2724 = vpop.f32.mrf.mxu0
      %2725 = vmatprep.mubr.f32.mxu0 0.0
      %2726 = vmatmul.mubr.f32.gmra.mxu0 %v987
      %v2727 = vpop.f32.mrf.mxu0
      %v2728 = vadd.f32 0.0, %v2727
      %v2729 = vpop.f32.mrf.mxu0
      %2730 = vmatprep.mubr.f32.mxu0 0.0
      %2731 = vmatmul.mubr.f32.gmra.mxu0 %v988
      %v2732 = vpop.f32.mrf.mxu0
      %v2733 = vadd.f32 0.0, %v2732
      %v2734 = vpop.f32.mrf.mxu0
      %2735 = vmatprep.mubr.f32.mxu0 0.0
      %2736 = vmatmul.mubr.f32.gmra.mxu0 %v989
      %v2737 = vpop.f32.mrf.mxu0
      %v2738 = vadd.f32 0.0, %v2737
      %v2739 = vpop.f32.mrf.mxu0
      %2740 = vmatprep.mubr.f32.mxu0 0.0
      %2741 = vmatmul.mubr.f32.gmra.mxu0 %v990
      %v2742 = vpop.f32.mrf.mxu0
      %v2743 = vadd.f32 0.0, %v2742
      %v2744 = vpop.f32.mrf.mxu0
      %2745 = vmatprep.mubr.f32.mxu0 0.0
      %2746 = vmatmul.mubr.f32.gmra.mxu0 %v991
      %v2747 = vpop.f32.mrf.mxu0
      %v2748 = vadd.f32 0.0, %v2747
      %v2749 = vpop.f32.mrf.mxu0
      %2750 = vmatprep.mubr.f32.mxu0 0.0
      %2751 = vmatmul.mubr.f32.gmra.mxu0 %v992
      %v2752 = vpop.f32.mrf.mxu0
      %v2753 = vadd.f32 0.0, %v2752
      %v2754 = vpop.f32.mrf.mxu0
      %2755 = vdwg.mxu0
      %v2756 = vadd.f32 %v2429, %v2553
      %v2757 = vadd.f32 %v2430, %v2558
      %v2758 = vadd.f32 %v2431, %v2563
      %v2759 = vadd.f32 %v2432, %v2568
      %v2760 = vadd.f32 %v2433, %v2573
      %v2761 = vadd.f32 %v2434, %v2578
      %v2762 = vadd.f32 %v2435, %v2583
      %v2763 = vadd.f32 %v2436, %v2588
      %v2764 = vadd.f32 %v2437, %v2593
      %v2765 = vadd.f32 %v2438, %v2598
      %v2766 = vadd.f32 %v2439, %v2603
      %v2767 = vadd.f32 %v2440, %v2608
      %v2768 = vadd.f32 %v2441, %v2613
      %v2769 = vadd.f32 %v2442, %v2618
      %v2770 = vadd.f32 %v2443, %v2623
      %v2771 = vadd.f32 %v2444, %v2628
      %v2772 = vadd.f32 %v2445, %v2633
      %v2773 = vadd.f32 %v2446, %v2638
      %v2774 = vadd.f32 %v2447, %v2643
      %v2775 = vadd.f32 %v2448, %v2648
      %v2776 = vadd.f32 %v2449, %v2653
      %v2777 = vadd.f32 %v2450, %v2658
      %v2778 = vadd.f32 %v2451, %v2663
      %v2779 = vadd.f32 %v2452, %v2668
      %v2780 = vadd.f32 %v2453, %v2673
      %v2781 = vadd.f32 %v2454, %v2678
      %v2782 = vadd.f32 %v2455, %v2683
      %v2783 = vadd.f32 %v2456, %v2688
      %v2784 = vadd.f32 %v2457, %v2693
      %v2785 = vadd.f32 %v2458, %v2698
      %v2786 = vadd.f32 %v2459, %v2703
      %v2787 = vadd.f32 %v2460, %v2708
      %v2788 = vadd.f32 %v2461, %v2713
      %v2789 = vadd.f32 %v2462, %v2718
      %v2790 = vadd.f32 %v2463, %v2723
      %v2791 = vadd.f32 %v2464, %v2728
      %v2792 = vadd.f32 %v2465, %v2733
      %v2793 = vadd.f32 %v2466, %v2738
      %v2794 = vadd.f32 %v2467, %v2743
      %v2795 = vadd.f32 %v2468, %v2748
      %v2796 = vadd.f32 %v2469, %v2753
      %v2797 = vrot.slane %v952, 1
      %v2798 = vrot.slane %v953, 1
      %v2799 = vrot.slane %v954, 1
      %v2800 = vrot.slane %v955, 1
      %v2801 = vrot.slane %v956, 1
      %v2802 = vrot.slane %v957, 1
      %v2803 = vrot.slane %v958, 1
      %v2804 = vrot.slane %v959, 1
      %v2805 = vrot.slane %v960, 1
      %v2806 = vrot.slane %v961, 1
      %v2807 = vrot.slane %v962, 1
      %v2808 = vrot.slane %v963, 1
      %v2809 = vrot.slane %v964, 1
      %v2810 = vrot.slane %v965, 1
      %v2811 = vrot.slane %v966, 1
      %v2812 = vrot.slane %v967, 1
      %v2813 = vrot.slane %v968, 1
      %v2814 = vrot.slane %v969, 1
      %v2815 = vrot.slane %v970, 1
      %v2816 = vrot.slane %v971, 1
      %v2817 = vrot.slane %v972, 1
      %v2818 = vrot.slane %v973, 1
      %v2819 = vrot.slane %v974, 1
      %v2820 = vrot.slane %v975, 1
      %v2821 = vrot.slane %v976, 1
      %v2822 = vrot.slane %v977, 1
      %v2823 = vrot.slane %v978, 1
      %v2824 = vrot.slane %v979, 1
      %v2825 = vrot.slane %v980, 1
      %v2826 = vrot.slane %v981, 1
      %v2827 = vrot.slane %v982, 1
      %v2828 = vrot.slane %v983, 1
      %v2829 = vrot.slane %v984, 1
      %v2830 = vrot.slane %v985, 1
      %v2831 = vrot.slane %v986, 1
      %v2832 = vrot.slane %v987, 1
      %v2833 = vrot.slane %v988, 1
      %v2834 = vrot.slane %v989, 1
      %v2835 = vrot.slane %v990, 1
      %v2836 = vrot.slane %v991, 1
      %v2837 = vrot.slane %v992, 1
      %vm2838 = vcmp.lt.s32.totalorder %v1035, 7
      %v2839 = vsel %vm2838, %v2836, %v2837
      %v2840 = vsel %vm2838, %v2835, %v2836
      %v2841 = vsel %vm2838, %v2834, %v2835
      %v2842 = vsel %vm2838, %v2833, %v2834
      %v2843 = vsel %vm2838, %v2832, %v2833
      %v2844 = vsel %vm2838, %v2831, %v2832
      %v2845 = vsel %vm2838, %v2830, %v2831
      %v2846 = vsel %vm2838, %v2829, %v2830
      %v2847 = vsel %vm2838, %v2828, %v2829
      %v2848 = vsel %vm2838, %v2827, %v2828
      %v2849 = vsel %vm2838, %v2826, %v2827
      %v2850 = vsel %vm2838, %v2825, %v2826
      %v2851 = vsel %vm2838, %v2824, %v2825
      %v2852 = vsel %vm2838, %v2823, %v2824
      %v2853 = vsel %vm2838, %v2822, %v2823
      %v2854 = vsel %vm2838, %v2821, %v2822
      %v2855 = vsel %vm2838, %v2820, %v2821
      %v2856 = vsel %vm2838, %v2819, %v2820
      %v2857 = vsel %vm2838, %v2818, %v2819
      %v2858 = vsel %vm2838, %v2817, %v2818
      %v2859 = vsel %vm2838, %v2816, %v2817
      %v2860 = vsel %vm2838, %v2815, %v2816
      %v2861 = vsel %vm2838, %v2814, %v2815
      %v2862 = vsel %vm2838, %v2813, %v2814
      %v2863 = vsel %vm2838, %v2812, %v2813
      %v2864 = vsel %vm2838, %v2811, %v2812
      %v2865 = vsel %vm2838, %v2810, %v2811
      %v2866 = vsel %vm2838, %v2809, %v2810
      %v2867 = vsel %vm2838, %v2808, %v2809
      %v2868 = vsel %vm2838, %v2807, %v2808
      %v2869 = vsel %vm2838, %v2806, %v2807
      %v2870 = vsel %vm2838, %v2805, %v2806
      %v2871 = vsel %vm2838, %v2804, %v2805
      %v2872 = vsel %vm2838, %v2803, %v2804
      %v2873 = vsel %vm2838, %v2802, %v2803
      %v2874 = vsel %vm2838, %v2801, %v2802
      %v2875 = vsel %vm2838, %v2800, %v2801
      %v2876 = vsel %vm2838, %v2799, %v2800
      %v2877 = vsel %vm2838, %v2798, %v2799
      %v2878 = vsel %vm2838, %v2797, %v2798
      %v2879 = vsel %vm2838, %v2837, %v2797
      %v2880 = vld [vmem:[%s5 + $0x280] sm:$0xff]
      %v2881 = vld [vmem:[%s5 + $0x288] sm:$0xff]
      %v2882 = vld [vmem:[%s5 + $0x290] sm:$0xff]
      %v2883 = vld [vmem:[%s5 + $0x298] sm:$0xff]
      %v2884 = vld [vmem:[%s5 + $0x2a0] sm:$0xff]
      %v2885 = vld [vmem:[%s5 + $0x2a8] sm:$0xff]
      %v2886 = vld [vmem:[%s5 + $0x2b0] sm:$0xff]
      %v2887 = vld [vmem:[%s5 + $0x2b8] sm:$0xff]
      %v2888 = vld [vmem:[%s5 + $0x2c0] sm:$0xff]
      %v2889 = vld [vmem:[%s5 + $0x2c8] sm:$0xff]
      %v2890 = vld [vmem:[%s5 + $0x2d0] sm:$0xff]
      %v2891 = vld [vmem:[%s5 + $0x2d8] sm:$0xff]
      %v2892 = vld [vmem:[%s5 + $0x2e0] sm:$0xff]
      %v2893 = vld [vmem:[%s5 + $0x2e8] sm:$0xff]
      %v2894 = vld [vmem:[%s5 + $0x2f0] sm:$0xff]
      %v2895 = vld [vmem:[%s5 + $0x2f8] sm:$0xff]
      %2896 = vmatprep.subr.mxu0 0.0
      %2897 = vmatpush1.msra.mxu0 %v2895
      %2898 = vmatprep.subr.mxu0 0.0
      %2899 = vmatpush1.msra.mxu0 %v2894
      %2900 = vmatprep.subr.mxu0 0.0
      %2901 = vmatpush1.msra.mxu0 %v2893
      %2902 = vmatprep.subr.mxu0 0.0
      %2903 = vmatpush1.msra.mxu0 %v2892
      %2904 = vmatprep.subr.mxu0 0.0
      %2905 = vmatpush1.msra.mxu0 %v2891
      %2906 = vmatprep.subr.mxu0 0.0
      %2907 = vmatpush1.msra.mxu0 %v2890
      %2908 = vmatprep.subr.mxu0 0.0
      %2909 = vmatpush1.msra.mxu0 %v2889
      %2910 = vmatprep.subr.mxu0 0.0
      %2911 = vmatpush1.msra.mxu0 %v2888
      %2912 = vmatprep.subr.mxu0 0.0
      %2913 = vmatpush1.msra.mxu0 %v2887
      %2914 = vmatprep.subr.mxu0 0.0
      %2915 = vmatpush1.msra.mxu0 %v2886
      %2916 = vmatprep.subr.mxu0 0.0
      %2917 = vmatpush1.msra.mxu0 %v2885
      %2918 = vmatprep.subr.mxu0 0.0
      %2919 = vmatpush1.msra.mxu0 %v2884
      %2920 = vmatprep.subr.mxu0 0.0
      %2921 = vmatpush1.msra.mxu0 %v2883
      %2922 = vmatprep.subr.mxu0 0.0
      %2923 = vmatpush1.msra.mxu0 %v2882
      %2924 = vmatprep.subr.mxu0 0.0
      %2925 = vmatpush1.msra.mxu0 %v2881
      %2926 = vmatprep.subr.mxu0 0.0
      %2927 = vmatpush1.msra.mxu0 %v2880
      %2928 = vmatprep.subr.mxu0 0.0
      %2929 = vmatpush2.msra.mxu0 0.0
      %2930 = vmatprep.subr.mxu0 0.0
      %2931 = vmatpush2.msra.mxu0 0.0
      %2932 = vmatprep.subr.mxu0 0.0
      %2933 = vmatpush2.msra.mxu0 0.0
      %2934 = vmatprep.subr.mxu0 0.0
      %2935 = vmatpush2.msra.mxu0 0.0
      %2936 = vmatprep.subr.mxu0 0.0
      %2937 = vmatpush2.msra.mxu0 0.0
      %2938 = vmatprep.subr.mxu0 0.0
      %2939 = vmatpush2.msra.mxu0 0.0
      %2940 = vmatprep.subr.mxu0 0.0
      %2941 = vmatpush2.msra.mxu0 0.0
      %2942 = vmatprep.subr.mxu0 0.0
      %2943 = vmatpush2.msra.mxu0 0.0
      %2944 = vmatprep.subr.mxu0 0.0
      %2945 = vmatpush2.msra.mxu0 0.0
      %2946 = vmatprep.subr.mxu0 0.0
      %2947 = vmatpush2.msra.mxu0 0.0
      %2948 = vmatprep.subr.mxu0 0.0
      %2949 = vmatpush2.msra.mxu0 0.0
      %2950 = vmatprep.subr.mxu0 0.0
      %2951 = vmatpush2.msra.mxu0 0.0
      %2952 = vmatprep.subr.mxu0 0.0
      %2953 = vmatpush2.msra.mxu0 0.0
      %2954 = vmatprep.subr.mxu0 0.0
      %2955 = vmatpush2.msra.mxu0 0.0
      %2956 = vmatprep.subr.mxu0 0.0
      %2957 = vmatpush2.msra.mxu0 0.0
      %2958 = vmatprep.subr.mxu0 0.0
      %2959 = vmatpush2.msra.mxu0 0.0
      %2960 = vmatprep.mubr.f32.mxu0 0.0
      %2961 = vmatmul.mubr.f32.gmra.mxu0 %v2878
      %v2962 = vpop.f32.mrf.mxu0
      %v2963 = vadd.f32 0.0, %v2962
      %v2964 = vpop.f32.mrf.mxu0
      %2965 = vmatprep.mubr.f32.mxu0 0.0
      %2966 = vmatmul.mubr.f32.gmra.mxu0 %v2877
      %v2967 = vpop.f32.mrf.mxu0
      %v2968 = vadd.f32 0.0, %v2967
      %v2969 = vpop.f32.mrf.mxu0
      %2970 = vmatprep.mubr.f32.mxu0 0.0
      %2971 = vmatmul.mubr.f32.gmra.mxu0 %v2876
      %v2972 = vpop.f32.mrf.mxu0
      %v2973 = vadd.f32 0.0, %v2972
      %v2974 = vpop.f32.mrf.mxu0
      %2975 = vmatprep.mubr.f32.mxu0 0.0
      %2976 = vmatmul.mubr.f32.gmra.mxu0 %v2875
      %v2977 = vpop.f32.mrf.mxu0
      %v2978 = vadd.f32 0.0, %v2977
      %v2979 = vpop.f32.mrf.mxu0
      %2980 = vmatprep.mubr.f32.mxu0 0.0
      %2981 = vmatmul.mubr.f32.gmra.mxu0 %v2874
      %v2982 = vpop.f32.mrf.mxu0
      %v2983 = vadd.f32 0.0, %v2982
      %v2984 = vpop.f32.mrf.mxu0
      %2985 = vmatprep.mubr.f32.mxu0 0.0
      %2986 = vmatmul.mubr.f32.gmra.mxu0 %v2873
      %v2987 = vpop.f32.mrf.mxu0
      %v2988 = vadd.f32 0.0, %v2987
      %v2989 = vpop.f32.mrf.mxu0
      %2990 = vmatprep.mubr.f32.mxu0 0.0
      %2991 = vmatmul.mubr.f32.gmra.mxu0 %v2872
      %v2992 = vpop.f32.mrf.mxu0
      %v2993 = vadd.f32 0.0, %v2992
      %v2994 = vpop.f32.mrf.mxu0
      %2995 = vmatprep.mubr.f32.mxu0 0.0
      %2996 = vmatmul.mubr.f32.gmra.mxu0 %v2871
      %v2997 = vpop.f32.mrf.mxu0
      %v2998 = vadd.f32 0.0, %v2997
      %v2999 = vpop.f32.mrf.mxu0
      %3000 = vmatprep.mubr.f32.mxu0 0.0
      %3001 = vmatmul.mubr.f32.gmra.mxu0 %v2870
      %v3002 = vpop.f32.mrf.mxu0
      %v3003 = vadd.f32 0.0, %v3002
      %v3004 = vpop.f32.mrf.mxu0
      %3005 = vmatprep.mubr.f32.mxu0 0.0
      %3006 = vmatmul.mubr.f32.gmra.mxu0 %v2869
      %v3007 = vpop.f32.mrf.mxu0
      %v3008 = vadd.f32 0.0, %v3007
      %v3009 = vpop.f32.mrf.mxu0
      %3010 = vmatprep.mubr.f32.mxu0 0.0
      %3011 = vmatmul.mubr.f32.gmra.mxu0 %v2868
      %v3012 = vpop.f32.mrf.mxu0
      %v3013 = vadd.f32 0.0, %v3012
      %v3014 = vpop.f32.mrf.mxu0
      %3015 = vmatprep.mubr.f32.mxu0 0.0
      %3016 = vmatmul.mubr.f32.gmra.mxu0 %v2867
      %v3017 = vpop.f32.mrf.mxu0
      %v3018 = vadd.f32 0.0, %v3017
      %v3019 = vpop.f32.mrf.mxu0
      %3020 = vmatprep.mubr.f32.mxu0 0.0
      %3021 = vmatmul.mubr.f32.gmra.mxu0 %v2866
      %v3022 = vpop.f32.mrf.mxu0
      %v3023 = vadd.f32 0.0, %v3022
      %v3024 = vpop.f32.mrf.mxu0
      %3025 = vmatprep.mubr.f32.mxu0 0.0
      %3026 = vmatmul.mubr.f32.gmra.mxu0 %v2865
      %v3027 = vpop.f32.mrf.mxu0
      %v3028 = vadd.f32 0.0, %v3027
      %v3029 = vpop.f32.mrf.mxu0
      %3030 = vmatprep.mubr.f32.mxu0 0.0
      %3031 = vmatmul.mubr.f32.gmra.mxu0 %v2864
      %v3032 = vpop.f32.mrf.mxu0
      %v3033 = vadd.f32 0.0, %v3032
      %v3034 = vpop.f32.mrf.mxu0
      %3035 = vmatprep.mubr.f32.mxu0 0.0
      %3036 = vmatmul.mubr.f32.gmra.mxu0 %v2863
      %v3037 = vpop.f32.mrf.mxu0
      %v3038 = vadd.f32 0.0, %v3037
      %v3039 = vpop.f32.mrf.mxu0
      %3040 = vmatprep.mubr.f32.mxu0 0.0
      %3041 = vmatmul.mubr.f32.gmra.mxu0 %v2862
      %v3042 = vpop.f32.mrf.mxu0
      %v3043 = vadd.f32 0.0, %v3042
      %v3044 = vpop.f32.mrf.mxu0
      %3045 = vmatprep.mubr.f32.mxu0 0.0
      %3046 = vmatmul.mubr.f32.gmra.mxu0 %v2861
      %v3047 = vpop.f32.mrf.mxu0
      %v3048 = vadd.f32 0.0, %v3047
      %v3049 = vpop.f32.mrf.mxu0
      %3050 = vmatprep.mubr.f32.mxu0 0.0
      %3051 = vmatmul.mubr.f32.gmra.mxu0 %v2860
      %v3052 = vpop.f32.mrf.mxu0
      %v3053 = vadd.f32 0.0, %v3052
      %v3054 = vpop.f32.mrf.mxu0
      %3055 = vmatprep.mubr.f32.mxu0 0.0
      %3056 = vmatmul.mubr.f32.gmra.mxu0 %v2859
      %v3057 = vpop.f32.mrf.mxu0
      %v3058 = vadd.f32 0.0, %v3057
      %v3059 = vpop.f32.mrf.mxu0
      %3060 = vmatprep.mubr.f32.mxu0 0.0
      %3061 = vmatmul.mubr.f32.gmra.mxu0 %v2858
      %v3062 = vpop.f32.mrf.mxu0
      %v3063 = vadd.f32 0.0, %v3062
      %v3064 = vpop.f32.mrf.mxu0
      %3065 = vmatprep.mubr.f32.mxu0 0.0
      %3066 = vmatmul.mubr.f32.gmra.mxu0 %v2857
      %v3067 = vpop.f32.mrf.mxu0
      %v3068 = vadd.f32 0.0, %v3067
      %v3069 = vpop.f32.mrf.mxu0
      %3070 = vmatprep.mubr.f32.mxu0 0.0
      %3071 = vmatmul.mubr.f32.gmra.mxu0 %v2856
      %v3072 = vpop.f32.mrf.mxu0
      %v3073 = vadd.f32 0.0, %v3072
      %v3074 = vpop.f32.mrf.mxu0
      %3075 = vmatprep.mubr.f32.mxu0 0.0
      %3076 = vmatmul.mubr.f32.gmra.mxu0 %v2855
      %v3077 = vpop.f32.mrf.mxu0
      %v3078 = vadd.f32 0.0, %v3077
      %v3079 = vpop.f32.mrf.mxu0
      %3080 = vmatprep.mubr.f32.mxu0 0.0
      %3081 = vmatmul.mubr.f32.gmra.mxu0 %v2854
      %v3082 = vpop.f32.mrf.mxu0
      %v3083 = vadd.f32 0.0, %v3082
      %v3084 = vpop.f32.mrf.mxu0
      %3085 = vmatprep.mubr.f32.mxu0 0.0
      %3086 = vmatmul.mubr.f32.gmra.mxu0 %v2853
      %v3087 = vpop.f32.mrf.mxu0
      %v3088 = vadd.f32 0.0, %v3087
      %v3089 = vpop.f32.mrf.mxu0
      %3090 = vmatprep.mubr.f32.mxu0 0.0
      %3091 = vmatmul.mubr.f32.gmra.mxu0 %v2852
      %v3092 = vpop.f32.mrf.mxu0
      %v3093 = vadd.f32 0.0, %v3092
      %v3094 = vpop.f32.mrf.mxu0
      %3095 = vmatprep.mubr.f32.mxu0 0.0
      %3096 = vmatmul.mubr.f32.gmra.mxu0 %v2851
      %v3097 = vpop.f32.mrf.mxu0
      %v3098 = vadd.f32 0.0, %v3097
      %v3099 = vpop.f32.mrf.mxu0
      %3100 = vmatprep.mubr.f32.mxu0 0.0
      %3101 = vmatmul.mubr.f32.gmra.mxu0 %v2850
      %v3102 = vpop.f32.mrf.mxu0
      %v3103 = vadd.f32 0.0, %v3102
      %v3104 = vpop.f32.mrf.mxu0
      %3105 = vmatprep.mubr.f32.mxu0 0.0
      %3106 = vmatmul.mubr.f32.gmra.mxu0 %v2849
      %v3107 = vpop.f32.mrf.mxu0
      %v3108 = vadd.f32 0.0, %v3107
      %v3109 = vpop.f32.mrf.mxu0
      %3110 = vmatprep.mubr.f32.mxu0 0.0
      %3111 = vmatmul.mubr.f32.gmra.mxu0 %v2848
      %v3112 = vpop.f32.mrf.mxu0
      %v3113 = vadd.f32 0.0, %v3112
      %v3114 = vpop.f32.mrf.mxu0
      %3115 = vmatprep.mubr.f32.mxu0 0.0
      %3116 = vmatmul.mubr.f32.gmra.mxu0 %v2847
      %v3117 = vpop.f32.mrf.mxu0
      %v3118 = vadd.f32 0.0, %v3117
      %v3119 = vpop.f32.mrf.mxu0
      %3120 = vmatprep.mubr.f32.mxu0 0.0
      %3121 = vmatmul.mubr.f32.gmra.mxu0 %v2846
      %v3122 = vpop.f32.mrf.mxu0
      %v3123 = vadd.f32 0.0, %v3122
      %v3124 = vpop.f32.mrf.mxu0
      %3125 = vmatprep.mubr.f32.mxu0 0.0
      %3126 = vmatmul.mubr.f32.gmra.mxu0 %v2845
      %v3127 = vpop.f32.mrf.mxu0
      %v3128 = vadd.f32 0.0, %v3127
      %v3129 = vpop.f32.mrf.mxu0
      %3130 = vmatprep.mubr.f32.mxu0 0.0
      %3131 = vmatmul.mubr.f32.gmra.mxu0 %v2844
      %v3132 = vpop.f32.mrf.mxu0
      %v3133 = vadd.f32 0.0, %v3132
      %v3134 = vpop.f32.mrf.mxu0
      %3135 = vmatprep.mubr.f32.mxu0 0.0
      %3136 = vmatmul.mubr.f32.gmra.mxu0 %v2843
      %v3137 = vpop.f32.mrf.mxu0
      %v3138 = vadd.f32 0.0, %v3137
      %v3139 = vpop.f32.mrf.mxu0
      %3140 = vmatprep.mubr.f32.mxu0 0.0
      %3141 = vmatmul.mubr.f32.gmra.mxu0 %v2842
      %v3142 = vpop.f32.mrf.mxu0
      %v3143 = vadd.f32 0.0, %v3142
      %v3144 = vpop.f32.mrf.mxu0
      %3145 = vmatprep.mubr.f32.mxu0 0.0
      %3146 = vmatmul.mubr.f32.gmra.mxu0 %v2841
      %v3147 = vpop.f32.mrf.mxu0
      %v3148 = vadd.f32 0.0, %v3147
      %v3149 = vpop.f32.mrf.mxu0
      %3150 = vmatprep.mubr.f32.mxu0 0.0
      %3151 = vmatmul.mubr.f32.gmra.mxu0 %v2840
      %v3152 = vpop.f32.mrf.mxu0
      %v3153 = vadd.f32 0.0, %v3152
      %v3154 = vpop.f32.mrf.mxu0
      %3155 = vmatprep.mubr.f32.mxu0 0.0
      %3156 = vmatmul.mubr.f32.gmra.mxu0 %v2839
      %v3157 = vpop.f32.mrf.mxu0
      %v3158 = vadd.f32 0.0, %v3157
      %v3159 = vpop.f32.mrf.mxu0
      %3160 = vmatprep.mubr.f32.mxu0 0.0
      %3161 = vmatmul.mubr.f32.gmra.mxu0 %v2879
      %v3162 = vpop.f32.mrf.mxu0
      %v3163 = vadd.f32 0.0, %v3162
      %v3164 = vpop.f32.mrf.mxu0
      %3165 = vdwg.mxu0
      %v3166 = vadd.f32 %v2756, %v2963
      %v3167 = vadd.f32 %v2757, %v2968
      %v3168 = vadd.f32 %v2758, %v2973
      %v3169 = vadd.f32 %v2759, %v2978
      %v3170 = vadd.f32 %v2760, %v2983
      %v3171 = vadd.f32 %v2761, %v2988
      %v3172 = vadd.f32 %v2762, %v2993
      %v3173 = vadd.f32 %v2763, %v2998
      %v3174 = vadd.f32 %v2764, %v3003
      %v3175 = vadd.f32 %v2765, %v3008
      %v3176 = vadd.f32 %v2766, %v3013
      %v3177 = vadd.f32 %v2767, %v3018
      %v3178 = vadd.f32 %v2768, %v3023
      %v3179 = vadd.f32 %v2769, %v3028
      %v3180 = vadd.f32 %v2770, %v3033
      %v3181 = vadd.f32 %v2771, %v3038
      %v3182 = vadd.f32 %v2772, %v3043
      %v3183 = vadd.f32 %v2773, %v3048
      %v3184 = vadd.f32 %v2774, %v3053
      %v3185 = vadd.f32 %v2775, %v3058
      %v3186 = vadd.f32 %v2776, %v3063
      %v3187 = vadd.f32 %v2777, %v3068
      %v3188 = vadd.f32 %v2778, %v3073
      %v3189 = vadd.f32 %v2779, %v3078
      %v3190 = vadd.f32 %v2780, %v3083
      %v3191 = vadd.f32 %v2781, %v3088
      %v3192 = vadd.f32 %v2782, %v3093
      %v3193 = vadd.f32 %v2783, %v3098
      %v3194 = vadd.f32 %v2784, %v3103
      %v3195 = vadd.f32 %v2785, %v3108
      %v3196 = vadd.f32 %v2786, %v3113
      %v3197 = vadd.f32 %v2787, %v3118
      %v3198 = vadd.f32 %v2788, %v3123
      %v3199 = vadd.f32 %v2789, %v3128
      %v3200 = vadd.f32 %v2790, %v3133
      %v3201 = vadd.f32 %v2791, %v3138
      %v3202 = vadd.f32 %v2792, %v3143
      %v3203 = vadd.f32 %v2793, %v3148
      %v3204 = vadd.f32 %v2794, %v3153
      %v3205 = vadd.f32 %v2795, %v3158
      %v3206 = vadd.f32 %v2796, %v3163
      %v3207 = vld [vmem:[%s5 + $0x300] sm:$0xff]
      %v3208 = vld [vmem:[%s5 + $0x308] sm:$0xff]
      %v3209 = vld [vmem:[%s5 + $0x310] sm:$0xff]
      %v3210 = vld [vmem:[%s5 + $0x318] sm:$0xff]
      %v3211 = vld [vmem:[%s5 + $0x320] sm:$0xff]
      %v3212 = vld [vmem:[%s5 + $0x328] sm:$0xff]
      %v3213 = vld [vmem:[%s5 + $0x330] sm:$0xff]
      %v3214 = vld [vmem:[%s5 + $0x338] sm:$0xff]
      %v3215 = vld [vmem:[%s5 + $0x340] sm:$0xff]
      %v3216 = vld [vmem:[%s5 + $0x348] sm:$0xff]
      %v3217 = vld [vmem:[%s5 + $0x350] sm:$0xff]
      %v3218 = vld [vmem:[%s5 + $0x358] sm:$0xff]
      %v3219 = vld [vmem:[%s5 + $0x360] sm:$0xff]
      %v3220 = vld [vmem:[%s5 + $0x368] sm:$0xff]
      %v3221 = vld [vmem:[%s5 + $0x370] sm:$0xff]
      %v3222 = vld [vmem:[%s5 + $0x378] sm:$0xff]
      %3223 = vmatprep.subr.mxu0 0.0
      %3224 = vmatpush1.msra.mxu0 %v3222
      %3225 = vmatprep.subr.mxu0 0.0
      %3226 = vmatpush1.msra.mxu0 %v3221
      %3227 = vmatprep.subr.mxu0 0.0
      %3228 = vmatpush1.msra.mxu0 %v3220
      %3229 = vmatprep.subr.mxu0 0.0
      %3230 = vmatpush1.msra.mxu0 %v3219
      %3231 = vmatprep.subr.mxu0 0.0
      %3232 = vmatpush1.msra.mxu0 %v3218
      %3233 = vmatprep.subr.mxu0 0.0
      %3234 = vmatpush1.msra.mxu0 %v3217
      %3235 = vmatprep.subr.mxu0 0.0
      %3236 = vmatpush1.msra.mxu0 %v3216
      %3237 = vmatprep.subr.mxu0 0.0
      %3238 = vmatpush1.msra.mxu0 %v3215
      %3239 = vmatprep.subr.mxu0 0.0
      %3240 = vmatpush1.msra.mxu0 %v3214
      %3241 = vmatprep.subr.mxu0 0.0
      %3242 = vmatpush1.msra.mxu0 %v3213
      %3243 = vmatprep.subr.mxu0 0.0
      %3244 = vmatpush1.msra.mxu0 %v3212
      %3245 = vmatprep.subr.mxu0 0.0
      %3246 = vmatpush1.msra.mxu0 %v3211
      %3247 = vmatprep.subr.mxu0 0.0
      %3248 = vmatpush1.msra.mxu0 %v3210
      %3249 = vmatprep.subr.mxu0 0.0
      %3250 = vmatpush1.msra.mxu0 %v3209
      %3251 = vmatprep.subr.mxu0 0.0
      %3252 = vmatpush1.msra.mxu0 %v3208
      %3253 = vmatprep.subr.mxu0 0.0
      %3254 = vmatpush1.msra.mxu0 %v3207
      %3255 = vmatprep.subr.mxu0 0.0
      %3256 = vmatpush2.msra.mxu0 0.0
      %3257 = vmatprep.subr.mxu0 0.0
      %3258 = vmatpush2.msra.mxu0 0.0
      %3259 = vmatprep.subr.mxu0 0.0
      %3260 = vmatpush2.msra.mxu0 0.0
      %3261 = vmatprep.subr.mxu0 0.0
      %3262 = vmatpush2.msra.mxu0 0.0
      %3263 = vmatprep.subr.mxu0 0.0
      %3264 = vmatpush2.msra.mxu0 0.0
      %3265 = vmatprep.subr.mxu0 0.0
      %3266 = vmatpush2.msra.mxu0 0.0
      %3267 = vmatprep.subr.mxu0 0.0
      %3268 = vmatpush2.msra.mxu0 0.0
      %3269 = vmatprep.subr.mxu0 0.0
      %3270 = vmatpush2.msra.mxu0 0.0
      %3271 = vmatprep.subr.mxu0 0.0
      %3272 = vmatpush2.msra.mxu0 0.0
      %3273 = vmatprep.subr.mxu0 0.0
      %3274 = vmatpush2.msra.mxu0 0.0
      %3275 = vmatprep.subr.mxu0 0.0
      %3276 = vmatpush2.msra.mxu0 0.0
      %3277 = vmatprep.subr.mxu0 0.0
      %3278 = vmatpush2.msra.mxu0 0.0
      %3279 = vmatprep.subr.mxu0 0.0
      %3280 = vmatpush2.msra.mxu0 0.0
      %3281 = vmatprep.subr.mxu0 0.0
      %3282 = vmatpush2.msra.mxu0 0.0
      %3283 = vmatprep.subr.mxu0 0.0
      %3284 = vmatpush2.msra.mxu0 0.0
      %3285 = vmatprep.subr.mxu0 0.0
      %3286 = vmatpush2.msra.mxu0 0.0
      %3287 = vmatprep.mubr.f32.mxu0 0.0
      %3288 = vmatmul.mubr.f32.gmra.mxu0 %v2876
      %v3289 = vpop.f32.mrf.mxu0
      %v3290 = vadd.f32 0.0, %v3289
      %v3291 = vpop.f32.mrf.mxu0
      %3292 = vmatprep.mubr.f32.mxu0 0.0
      %3293 = vmatmul.mubr.f32.gmra.mxu0 %v2875
      %v3294 = vpop.f32.mrf.mxu0
      %v3295 = vadd.f32 0.0, %v3294
      %v3296 = vpop.f32.mrf.mxu0
      %3297 = vmatprep.mubr.f32.mxu0 0.0
      %3298 = vmatmul.mubr.f32.gmra.mxu0 %v2874
      %v3299 = vpop.f32.mrf.mxu0
      %v3300 = vadd.f32 0.0, %v3299
      %v3301 = vpop.f32.mrf.mxu0
      %3302 = vmatprep.mubr.f32.mxu0 0.0
      %3303 = vmatmul.mubr.f32.gmra.mxu0 %v2873
      %v3304 = vpop.f32.mrf.mxu0
      %v3305 = vadd.f32 0.0, %v3304
      %v3306 = vpop.f32.mrf.mxu0
      %3307 = vmatprep.mubr.f32.mxu0 0.0
      %3308 = vmatmul.mubr.f32.gmra.mxu0 %v2872
      %v3309 = vpop.f32.mrf.mxu0
      %v3310 = vadd.f32 0.0, %v3309
      %v3311 = vpop.f32.mrf.mxu0
      %3312 = vmatprep.mubr.f32.mxu0 0.0
      %3313 = vmatmul.mubr.f32.gmra.mxu0 %v2871
      %v3314 = vpop.f32.mrf.mxu0
      %v3315 = vadd.f32 0.0, %v3314
      %v3316 = vpop.f32.mrf.mxu0
      %3317 = vmatprep.mubr.f32.mxu0 0.0
      %3318 = vmatmul.mubr.f32.gmra.mxu0 %v2870
      %v3319 = vpop.f32.mrf.mxu0
      %v3320 = vadd.f32 0.0, %v3319
      %v3321 = vpop.f32.mrf.mxu0
      %3322 = vmatprep.mubr.f32.mxu0 0.0
      %3323 = vmatmul.mubr.f32.gmra.mxu0 %v2869
      %v3324 = vpop.f32.mrf.mxu0
      %v3325 = vadd.f32 0.0, %v3324
      %v3326 = vpop.f32.mrf.mxu0
      %3327 = vmatprep.mubr.f32.mxu0 0.0
      %3328 = vmatmul.mubr.f32.gmra.mxu0 %v2868
      %v3329 = vpop.f32.mrf.mxu0
      %v3330 = vadd.f32 0.0, %v3329
      %v3331 = vpop.f32.mrf.mxu0
      %3332 = vmatprep.mubr.f32.mxu0 0.0
      %3333 = vmatmul.mubr.f32.gmra.mxu0 %v2867
      %v3334 = vpop.f32.mrf.mxu0
      %v3335 = vadd.f32 0.0, %v3334
      %v3336 = vpop.f32.mrf.mxu0
      %3337 = vmatprep.mubr.f32.mxu0 0.0
      %3338 = vmatmul.mubr.f32.gmra.mxu0 %v2866
      %v3339 = vpop.f32.mrf.mxu0
      %v3340 = vadd.f32 0.0, %v3339
      %v3341 = vpop.f32.mrf.mxu0
      %3342 = vmatprep.mubr.f32.mxu0 0.0
      %3343 = vmatmul.mubr.f32.gmra.mxu0 %v2865
      %v3344 = vpop.f32.mrf.mxu0
      %v3345 = vadd.f32 0.0, %v3344
      %v3346 = vpop.f32.mrf.mxu0
      %3347 = vmatprep.mubr.f32.mxu0 0.0
      %3348 = vmatmul.mubr.f32.gmra.mxu0 %v2864
      %v3349 = vpop.f32.mrf.mxu0
      %v3350 = vadd.f32 0.0, %v3349
      %v3351 = vpop.f32.mrf.mxu0
      %3352 = vmatprep.mubr.f32.mxu0 0.0
      %3353 = vmatmul.mubr.f32.gmra.mxu0 %v2863
      %v3354 = vpop.f32.mrf.mxu0
      %v3355 = vadd.f32 0.0, %v3354
      %v3356 = vpop.f32.mrf.mxu0
      %3357 = vmatprep.mubr.f32.mxu0 0.0
      %3358 = vmatmul.mubr.f32.gmra.mxu0 %v2862
      %v3359 = vpop.f32.mrf.mxu0
      %v3360 = vadd.f32 0.0, %v3359
      %v3361 = vpop.f32.mrf.mxu0
      %3362 = vmatprep.mubr.f32.mxu0 0.0
      %3363 = vmatmul.mubr.f32.gmra.mxu0 %v2861
      %v3364 = vpop.f32.mrf.mxu0
      %v3365 = vadd.f32 0.0, %v3364
      %v3366 = vpop.f32.mrf.mxu0
      %3367 = vmatprep.mubr.f32.mxu0 0.0
      %3368 = vmatmul.mubr.f32.gmra.mxu0 %v2860
      %v3369 = vpop.f32.mrf.mxu0
      %v3370 = vadd.f32 0.0, %v3369
      %v3371 = vpop.f32.mrf.mxu0
      %3372 = vmatprep.mubr.f32.mxu0 0.0
      %3373 = vmatmul.mubr.f32.gmra.mxu0 %v2859
      %v3374 = vpop.f32.mrf.mxu0
      %v3375 = vadd.f32 0.0, %v3374
      %v3376 = vpop.f32.mrf.mxu0
      %3377 = vmatprep.mubr.f32.mxu0 0.0
      %3378 = vmatmul.mubr.f32.gmra.mxu0 %v2858
      %v3379 = vpop.f32.mrf.mxu0
      %v3380 = vadd.f32 0.0, %v3379
      %v3381 = vpop.f32.mrf.mxu0
      %3382 = vmatprep.mubr.f32.mxu0 0.0
      %3383 = vmatmul.mubr.f32.gmra.mxu0 %v2857
      %v3384 = vpop.f32.mrf.mxu0
      %v3385 = vadd.f32 0.0, %v3384
      %v3386 = vpop.f32.mrf.mxu0
      %3387 = vmatprep.mubr.f32.mxu0 0.0
      %3388 = vmatmul.mubr.f32.gmra.mxu0 %v2856
      %v3389 = vpop.f32.mrf.mxu0
      %v3390 = vadd.f32 0.0, %v3389
      %v3391 = vpop.f32.mrf.mxu0
      %3392 = vmatprep.mubr.f32.mxu0 0.0
      %3393 = vmatmul.mubr.f32.gmra.mxu0 %v2855
      %v3394 = vpop.f32.mrf.mxu0
      %v3395 = vadd.f32 0.0, %v3394
      %v3396 = vpop.f32.mrf.mxu0
      %3397 = vmatprep.mubr.f32.mxu0 0.0
      %3398 = vmatmul.mubr.f32.gmra.mxu0 %v2854
      %v3399 = vpop.f32.mrf.mxu0
      %v3400 = vadd.f32 0.0, %v3399
      %v3401 = vpop.f32.mrf.mxu0
      %3402 = vmatprep.mubr.f32.mxu0 0.0
      %3403 = vmatmul.mubr.f32.gmra.mxu0 %v2853
      %v3404 = vpop.f32.mrf.mxu0
      %v3405 = vadd.f32 0.0, %v3404
      %v3406 = vpop.f32.mrf.mxu0
      %3407 = vmatprep.mubr.f32.mxu0 0.0
      %3408 = vmatmul.mubr.f32.gmra.mxu0 %v2852
      %v3409 = vpop.f32.mrf.mxu0
      %v3410 = vadd.f32 0.0, %v3409
      %v3411 = vpop.f32.mrf.mxu0
      %3412 = vmatprep.mubr.f32.mxu0 0.0
      %3413 = vmatmul.mubr.f32.gmra.mxu0 %v2851
      %v3414 = vpop.f32.mrf.mxu0
      %v3415 = vadd.f32 0.0, %v3414
      %v3416 = vpop.f32.mrf.mxu0
      %3417 = vmatprep.mubr.f32.mxu0 0.0
      %3418 = vmatmul.mubr.f32.gmra.mxu0 %v2850
      %v3419 = vpop.f32.mrf.mxu0
      %v3420 = vadd.f32 0.0, %v3419
      %v3421 = vpop.f32.mrf.mxu0
      %3422 = vmatprep.mubr.f32.mxu0 0.0
      %3423 = vmatmul.mubr.f32.gmra.mxu0 %v2849
      %v3424 = vpop.f32.mrf.mxu0
      %v3425 = vadd.f32 0.0, %v3424
      %v3426 = vpop.f32.mrf.mxu0
      %3427 = vmatprep.mubr.f32.mxu0 0.0
      %3428 = vmatmul.mubr.f32.gmra.mxu0 %v2848
      %v3429 = vpop.f32.mrf.mxu0
      %v3430 = vadd.f32 0.0, %v3429
      %v3431 = vpop.f32.mrf.mxu0
      %3432 = vmatprep.mubr.f32.mxu0 0.0
      %3433 = vmatmul.mubr.f32.gmra.mxu0 %v2847
      %v3434 = vpop.f32.mrf.mxu0
      %v3435 = vadd.f32 0.0, %v3434
      %v3436 = vpop.f32.mrf.mxu0
      %3437 = vmatprep.mubr.f32.mxu0 0.0
      %3438 = vmatmul.mubr.f32.gmra.mxu0 %v2846
      %v3439 = vpop.f32.mrf.mxu0
      %v3440 = vadd.f32 0.0, %v3439
      %v3441 = vpop.f32.mrf.mxu0
      %3442 = vmatprep.mubr.f32.mxu0 0.0
      %3443 = vmatmul.mubr.f32.gmra.mxu0 %v2845
      %v3444 = vpop.f32.mrf.mxu0
      %v3445 = vadd.f32 0.0, %v3444
      %v3446 = vpop.f32.mrf.mxu0
      %3447 = vmatprep.mubr.f32.mxu0 0.0
      %3448 = vmatmul.mubr.f32.gmra.mxu0 %v2844
      %v3449 = vpop.f32.mrf.mxu0
      %v3450 = vadd.f32 0.0, %v3449
      %v3451 = vpop.f32.mrf.mxu0
      %3452 = vmatprep.mubr.f32.mxu0 0.0
      %3453 = vmatmul.mubr.f32.gmra.mxu0 %v2843
      %v3454 = vpop.f32.mrf.mxu0
      %v3455 = vadd.f32 0.0, %v3454
      %v3456 = vpop.f32.mrf.mxu0
      %3457 = vmatprep.mubr.f32.mxu0 0.0
      %3458 = vmatmul.mubr.f32.gmra.mxu0 %v2842
      %v3459 = vpop.f32.mrf.mxu0
      %v3460 = vadd.f32 0.0, %v3459
      %v3461 = vpop.f32.mrf.mxu0
      %3462 = vmatprep.mubr.f32.mxu0 0.0
      %3463 = vmatmul.mubr.f32.gmra.mxu0 %v2841
      %v3464 = vpop.f32.mrf.mxu0
      %v3465 = vadd.f32 0.0, %v3464
      %v3466 = vpop.f32.mrf.mxu0
      %3467 = vmatprep.mubr.f32.mxu0 0.0
      %3468 = vmatmul.mubr.f32.gmra.mxu0 %v2840
      %v3469 = vpop.f32.mrf.mxu0
      %v3470 = vadd.f32 0.0, %v3469
      %v3471 = vpop.f32.mrf.mxu0
      %3472 = vmatprep.mubr.f32.mxu0 0.0
      %3473 = vmatmul.mubr.f32.gmra.mxu0 %v2839
      %v3474 = vpop.f32.mrf.mxu0
      %v3475 = vadd.f32 0.0, %v3474
      %v3476 = vpop.f32.mrf.mxu0
      %3477 = vmatprep.mubr.f32.mxu0 0.0
      %3478 = vmatmul.mubr.f32.gmra.mxu0 %v2879
      %v3479 = vpop.f32.mrf.mxu0
      %v3480 = vadd.f32 0.0, %v3479
      %v3481 = vpop.f32.mrf.mxu0
      %3482 = vmatprep.mubr.f32.mxu0 0.0
      %3483 = vmatmul.mubr.f32.gmra.mxu0 %v2878
      %v3484 = vpop.f32.mrf.mxu0
      %v3485 = vadd.f32 0.0, %v3484
      %v3486 = vpop.f32.mrf.mxu0
      %3487 = vmatprep.mubr.f32.mxu0 0.0
      %3488 = vmatmul.mubr.f32.gmra.mxu0 %v2877
      %v3489 = vpop.f32.mrf.mxu0
      %v3490 = vadd.f32 0.0, %v3489
      %v3491 = vpop.f32.mrf.mxu0
      %3492 = vdwg.mxu0
      %v3493 = vadd.f32 %v3166, %v3290
      %v3494 = vadd.f32 %v3167, %v3295
      %v3495 = vadd.f32 %v3168, %v3300
      %v3496 = vadd.f32 %v3169, %v3305
      %v3497 = vadd.f32 %v3170, %v3310
      %v3498 = vadd.f32 %v3171, %v3315
      %v3499 = vadd.f32 %v3172, %v3320
      %v3500 = vadd.f32 %v3173, %v3325
      %v3501 = vadd.f32 %v3174, %v3330
      %v3502 = vadd.f32 %v3175, %v3335
      %v3503 = vadd.f32 %v3176, %v3340
      %v3504 = vadd.f32 %v3177, %v3345
      %v3505 = vadd.f32 %v3178, %v3350
      %v3506 = vadd.f32 %v3179, %v3355
      %v3507 = vadd.f32 %v3180, %v3360
      %v3508 = vadd.f32 %v3181, %v3365
      %v3509 = vadd.f32 %v3182, %v3370
      %v3510 = vadd.f32 %v3183, %v3375
      %v3511 = vadd.f32 %v3184, %v3380
      %v3512 = vadd.f32 %v3185, %v3385
      %v3513 = vadd.f32 %v3186, %v3390
      %v3514 = vadd.f32 %v3187, %v3395
      %v3515 = vadd.f32 %v3188, %v3400
      %v3516 = vadd.f32 %v3189, %v3405
      %v3517 = vadd.f32 %v3190, %v3410
      %v3518 = vadd.f32 %v3191, %v3415
      %v3519 = vadd.f32 %v3192, %v3420
      %v3520 = vadd.f32 %v3193, %v3425
      %v3521 = vadd.f32 %v3194, %v3430
      %v3522 = vadd.f32 %v3195, %v3435
      %v3523 = vadd.f32 %v3196, %v3440
      %v3524 = vadd.f32 %v3197, %v3445
      %v3525 = vadd.f32 %v3198, %v3450
      %v3526 = vadd.f32 %v3199, %v3455
      %v3527 = vadd.f32 %v3200, %v3460
      %v3528 = vadd.f32 %v3201, %v3465
      %v3529 = vadd.f32 %v3202, %v3470
      %v3530 = vadd.f32 %v3203, %v3475
      %v3531 = vadd.f32 %v3204, %v3480
      %v3532 = vadd.f32 %v3205, %v3485
      %v3533 = vadd.f32 %v3206, %v3490
      %v3534 = vrot.slane %v952, 2
      %v3535 = vrot.slane %v953, 2
      %v3536 = vrot.slane %v954, 2
      %v3537 = vrot.slane %v955, 2
      %v3538 = vrot.slane %v956, 2
      %v3539 = vrot.slane %v957, 2
      %v3540 = vrot.slane %v958, 2
      %v3541 = vrot.slane %v959, 2
      %v3542 = vrot.slane %v960, 2
      %v3543 = vrot.slane %v961, 2
      %v3544 = vrot.slane %v962, 2
      %v3545 = vrot.slane %v963, 2
      %v3546 = vrot.slane %v964, 2
      %v3547 = vrot.slane %v965, 2
      %v3548 = vrot.slane %v966, 2
      %v3549 = vrot.slane %v967, 2
      %v3550 = vrot.slane %v968, 2
      %v3551 = vrot.slane %v969, 2
      %v3552 = vrot.slane %v970, 2
      %v3553 = vrot.slane %v971, 2
      %v3554 = vrot.slane %v972, 2
      %v3555 = vrot.slane %v973, 2
      %v3556 = vrot.slane %v974, 2
      %v3557 = vrot.slane %v975, 2
      %v3558 = vrot.slane %v976, 2
      %v3559 = vrot.slane %v977, 2
      %v3560 = vrot.slane %v978, 2
      %v3561 = vrot.slane %v979, 2
      %v3562 = vrot.slane %v980, 2
      %v3563 = vrot.slane %v981, 2
      %v3564 = vrot.slane %v982, 2
      %v3565 = vrot.slane %v983, 2
      %v3566 = vrot.slane %v984, 2
      %v3567 = vrot.slane %v985, 2
      %v3568 = vrot.slane %v986, 2
      %v3569 = vrot.slane %v987, 2
      %v3570 = vrot.slane %v988, 2
      %v3571 = vrot.slane %v989, 2
      %v3572 = vrot.slane %v990, 2
      %v3573 = vrot.slane %v991, 2
      %v3574 = vrot.slane %v992, 2
      %vm3575 = vcmp.lt.s32.totalorder %v1035, 6
      %v3576 = vsel %vm3575, %v3573, %v3574
      %v3577 = vsel %vm3575, %v3572, %v3573
      %v3578 = vsel %vm3575, %v3571, %v3572
      %v3579 = vsel %vm3575, %v3570, %v3571
      %v3580 = vsel %vm3575, %v3569, %v3570
      %v3581 = vsel %vm3575, %v3568, %v3569
      %v3582 = vsel %vm3575, %v3567, %v3568
      %v3583 = vsel %vm3575, %v3566, %v3567
      %v3584 = vsel %vm3575, %v3565, %v3566
      %v3585 = vsel %vm3575, %v3564, %v3565
      %v3586 = vsel %vm3575, %v3563, %v3564
      %v3587 = vsel %vm3575, %v3562, %v3563
      %v3588 = vsel %vm3575, %v3561, %v3562
      %v3589 = vsel %vm3575, %v3560, %v3561
      %v3590 = vsel %vm3575, %v3559, %v3560
      %v3591 = vsel %vm3575, %v3558, %v3559
      %v3592 = vsel %vm3575, %v3557, %v3558
      %v3593 = vsel %vm3575, %v3556, %v3557
      %v3594 = vsel %vm3575, %v3555, %v3556
      %v3595 = vsel %vm3575, %v3554, %v3555
      %v3596 = vsel %vm3575, %v3553, %v3554
      %v3597 = vsel %vm3575, %v3552, %v3553
      %v3598 = vsel %vm3575, %v3551, %v3552
      %v3599 = vsel %vm3575, %v3550, %v3551
      %v3600 = vsel %vm3575, %v3549, %v3550
      %v3601 = vsel %vm3575, %v3548, %v3549
      %v3602 = vsel %vm3575, %v3547, %v3548
      %v3603 = vsel %vm3575, %v3546, %v3547
      %v3604 = vsel %vm3575, %v3545, %v3546
      %v3605 = vsel %vm3575, %v3544, %v3545
      %v3606 = vsel %vm3575, %v3543, %v3544
      %v3607 = vsel %vm3575, %v3542, %v3543
      %v3608 = vsel %vm3575, %v3541, %v3542
      %v3609 = vsel %vm3575, %v3540, %v3541
      %v3610 = vsel %vm3575, %v3539, %v3540
      %v3611 = vsel %vm3575, %v3538, %v3539
      %v3612 = vsel %vm3575, %v3537, %v3538
      %v3613 = vsel %vm3575, %v3536, %v3537
      %v3614 = vsel %vm3575, %v3535, %v3536
      %v3615 = vsel %vm3575, %v3534, %v3535
      %v3616 = vsel %vm3575, %v3574, %v3534
      %v3617 = vld [vmem:[%s5 + $0x380] sm:$0xff]
      %v3618 = vld [vmem:[%s5 + $0x388] sm:$0xff]
      %v3619 = vld [vmem:[%s5 + $0x390] sm:$0xff]
      %v3620 = vld [vmem:[%s5 + $0x398] sm:$0xff]
      %v3621 = vld [vmem:[%s5 + $0x3a0] sm:$0xff]
      %v3622 = vld [vmem:[%s5 + $0x3a8] sm:$0xff]
      %v3623 = vld [vmem:[%s5 + $0x3b0] sm:$0xff]
      %v3624 = vld [vmem:[%s5 + $0x3b8] sm:$0xff]
      %v3625 = vld [vmem:[%s5 + $0x3c0] sm:$0xff]
      %v3626 = vld [vmem:[%s5 + $0x3c8] sm:$0xff]
      %v3627 = vld [vmem:[%s5 + $0x3d0] sm:$0xff]
      %v3628 = vld [vmem:[%s5 + $0x3d8] sm:$0xff]
      %v3629 = vld [vmem:[%s5 + $0x3e0] sm:$0xff]
      %v3630 = vld [vmem:[%s5 + $0x3e8] sm:$0xff]
      %v3631 = vld [vmem:[%s5 + $0x3f0] sm:$0xff]
      %v3632 = vld [vmem:[%s5 + $0x3f8] sm:$0xff]
      %3633 = vmatprep.subr.mxu0 0.0
      %3634 = vmatpush1.msra.mxu0 %v3632
      %3635 = vmatprep.subr.mxu0 0.0
      %3636 = vmatpush1.msra.mxu0 %v3631
      %3637 = vmatprep.subr.mxu0 0.0
      %3638 = vmatpush1.msra.mxu0 %v3630
      %3639 = vmatprep.subr.mxu0 0.0
      %3640 = vmatpush1.msra.mxu0 %v3629
      %3641 = vmatprep.subr.mxu0 0.0
      %3642 = vmatpush1.msra.mxu0 %v3628
      %3643 = vmatprep.subr.mxu0 0.0
      %3644 = vmatpush1.msra.mxu0 %v3627
      %3645 = vmatprep.subr.mxu0 0.0
      %3646 = vmatpush1.msra.mxu0 %v3626
      %3647 = vmatprep.subr.mxu0 0.0
      %3648 = vmatpush1.msra.mxu0 %v3625
      %3649 = vmatprep.subr.mxu0 0.0
      %3650 = vmatpush1.msra.mxu0 %v3624
      %3651 = vmatprep.subr.mxu0 0.0
      %3652 = vmatpush1.msra.mxu0 %v3623
      %3653 = vmatprep.subr.mxu0 0.0
      %3654 = vmatpush1.msra.mxu0 %v3622
      %3655 = vmatprep.subr.mxu0 0.0
      %3656 = vmatpush1.msra.mxu0 %v3621
      %3657 = vmatprep.subr.mxu0 0.0
      %3658 = vmatpush1.msra.mxu0 %v3620
      %3659 = vmatprep.subr.mxu0 0.0
      %3660 = vmatpush1.msra.mxu0 %v3619
      %3661 = vmatprep.subr.mxu0 0.0
      %3662 = vmatpush1.msra.mxu0 %v3618
      %3663 = vmatprep.subr.mxu0 0.0
      %3664 = vmatpush1.msra.mxu0 %v3617
      %3665 = vmatprep.subr.mxu0 0.0
      %3666 = vmatpush2.msra.mxu0 0.0
      %3667 = vmatprep.subr.mxu0 0.0
      %3668 = vmatpush2.msra.mxu0 0.0
      %3669 = vmatprep.subr.mxu0 0.0
      %3670 = vmatpush2.msra.mxu0 0.0
      %3671 = vmatprep.subr.mxu0 0.0
      %3672 = vmatpush2.msra.mxu0 0.0
      %3673 = vmatprep.subr.mxu0 0.0
      %3674 = vmatpush2.msra.mxu0 0.0
      %3675 = vmatprep.subr.mxu0 0.0
      %3676 = vmatpush2.msra.mxu0 0.0
      %3677 = vmatprep.subr.mxu0 0.0
      %3678 = vmatpush2.msra.mxu0 0.0
      %3679 = vmatprep.subr.mxu0 0.0
      %3680 = vmatpush2.msra.mxu0 0.0
      %3681 = vmatprep.subr.mxu0 0.0
      %3682 = vmatpush2.msra.mxu0 0.0
      %3683 = vmatprep.subr.mxu0 0.0
      %3684 = vmatpush2.msra.mxu0 0.0
      %3685 = vmatprep.subr.mxu0 0.0
      %3686 = vmatpush2.msra.mxu0 0.0
      %3687 = vmatprep.subr.mxu0 0.0
      %3688 = vmatpush2.msra.mxu0 0.0
      %3689 = vmatprep.subr.mxu0 0.0
      %3690 = vmatpush2.msra.mxu0 0.0
      %3691 = vmatprep.subr.mxu0 0.0
      %3692 = vmatpush2.msra.mxu0 0.0
      %3693 = vmatprep.subr.mxu0 0.0
      %3694 = vmatpush2.msra.mxu0 0.0
      %3695 = vmatprep.subr.mxu0 0.0
      %3696 = vmatpush2.msra.mxu0 0.0
      %3697 = vmatprep.mubr.f32.mxu0 0.0
      %3698 = vmatmul.mubr.f32.gmra.mxu0 %v3613
      %v3699 = vpop.f32.mrf.mxu0
      %v3700 = vadd.f32 0.0, %v3699
      %v3701 = vpop.f32.mrf.mxu0
      %3702 = vmatprep.mubr.f32.mxu0 0.0
      %3703 = vmatmul.mubr.f32.gmra.mxu0 %v3612
      %v3704 = vpop.f32.mrf.mxu0
      %v3705 = vadd.f32 0.0, %v3704
      %v3706 = vpop.f32.mrf.mxu0
      %3707 = vmatprep.mubr.f32.mxu0 0.0
      %3708 = vmatmul.mubr.f32.gmra.mxu0 %v3611
      %v3709 = vpop.f32.mrf.mxu0
      %v3710 = vadd.f32 0.0, %v3709
      %v3711 = vpop.f32.mrf.mxu0
      %3712 = vmatprep.mubr.f32.mxu0 0.0
      %3713 = vmatmul.mubr.f32.gmra.mxu0 %v3610
      %v3714 = vpop.f32.mrf.mxu0
      %v3715 = vadd.f32 0.0, %v3714
      %v3716 = vpop.f32.mrf.mxu0
      %3717 = vmatprep.mubr.f32.mxu0 0.0
      %3718 = vmatmul.mubr.f32.gmra.mxu0 %v3609
      %v3719 = vpop.f32.mrf.mxu0
      %v3720 = vadd.f32 0.0, %v3719
      %v3721 = vpop.f32.mrf.mxu0
      %3722 = vmatprep.mubr.f32.mxu0 0.0
      %3723 = vmatmul.mubr.f32.gmra.mxu0 %v3608
      %v3724 = vpop.f32.mrf.mxu0
      %v3725 = vadd.f32 0.0, %v3724
      %v3726 = vpop.f32.mrf.mxu0
      %3727 = vmatprep.mubr.f32.mxu0 0.0
      %3728 = vmatmul.mubr.f32.gmra.mxu0 %v3607
      %v3729 = vpop.f32.mrf.mxu0
      %v3730 = vadd.f32 0.0, %v3729
      %v3731 = vpop.f32.mrf.mxu0
      %3732 = vmatprep.mubr.f32.mxu0 0.0
      %3733 = vmatmul.mubr.f32.gmra.mxu0 %v3606
      %v3734 = vpop.f32.mrf.mxu0
      %v3735 = vadd.f32 0.0, %v3734
      %v3736 = vpop.f32.mrf.mxu0
      %3737 = vmatprep.mubr.f32.mxu0 0.0
      %3738 = vmatmul.mubr.f32.gmra.mxu0 %v3605
      %v3739 = vpop.f32.mrf.mxu0
      %v3740 = vadd.f32 0.0, %v3739
      %v3741 = vpop.f32.mrf.mxu0
      %3742 = vmatprep.mubr.f32.mxu0 0.0
      %3743 = vmatmul.mubr.f32.gmra.mxu0 %v3604
      %v3744 = vpop.f32.mrf.mxu0
      %v3745 = vadd.f32 0.0, %v3744
      %v3746 = vpop.f32.mrf.mxu0
      %3747 = vmatprep.mubr.f32.mxu0 0.0
      %3748 = vmatmul.mubr.f32.gmra.mxu0 %v3603
      %v3749 = vpop.f32.mrf.mxu0
      %v3750 = vadd.f32 0.0, %v3749
      %v3751 = vpop.f32.mrf.mxu0
      %3752 = vmatprep.mubr.f32.mxu0 0.0
      %3753 = vmatmul.mubr.f32.gmra.mxu0 %v3602
      %v3754 = vpop.f32.mrf.mxu0
      %v3755 = vadd.f32 0.0, %v3754
      %v3756 = vpop.f32.mrf.mxu0
      %3757 = vmatprep.mubr.f32.mxu0 0.0
      %3758 = vmatmul.mubr.f32.gmra.mxu0 %v3601
      %v3759 = vpop.f32.mrf.mxu0
      %v3760 = vadd.f32 0.0, %v3759
      %v3761 = vpop.f32.mrf.mxu0
      %3762 = vmatprep.mubr.f32.mxu0 0.0
      %3763 = vmatmul.mubr.f32.gmra.mxu0 %v3600
      %v3764 = vpop.f32.mrf.mxu0
      %v3765 = vadd.f32 0.0, %v3764
      %v3766 = vpop.f32.mrf.mxu0
      %3767 = vmatprep.mubr.f32.mxu0 0.0
      %3768 = vmatmul.mubr.f32.gmra.mxu0 %v3599
      %v3769 = vpop.f32.mrf.mxu0
      %v3770 = vadd.f32 0.0, %v3769
      %v3771 = vpop.f32.mrf.mxu0
      %3772 = vmatprep.mubr.f32.mxu0 0.0
      %3773 = vmatmul.mubr.f32.gmra.mxu0 %v3598
      %v3774 = vpop.f32.mrf.mxu0
      %v3775 = vadd.f32 0.0, %v3774
      %v3776 = vpop.f32.mrf.mxu0
      %3777 = vmatprep.mubr.f32.mxu0 0.0
      %3778 = vmatmul.mubr.f32.gmra.mxu0 %v3597
      %v3779 = vpop.f32.mrf.mxu0
      %v3780 = vadd.f32 0.0, %v3779
      %v3781 = vpop.f32.mrf.mxu0
      %3782 = vmatprep.mubr.f32.mxu0 0.0
      %3783 = vmatmul.mubr.f32.gmra.mxu0 %v3596
      %v3784 = vpop.f32.mrf.mxu0
      %v3785 = vadd.f32 0.0, %v3784
      %v3786 = vpop.f32.mrf.mxu0
      %3787 = vmatprep.mubr.f32.mxu0 0.0
      %3788 = vmatmul.mubr.f32.gmra.mxu0 %v3595
      %v3789 = vpop.f32.mrf.mxu0
      %v3790 = vadd.f32 0.0, %v3789
      %v3791 = vpop.f32.mrf.mxu0
      %3792 = vmatprep.mubr.f32.mxu0 0.0
      %3793 = vmatmul.mubr.f32.gmra.mxu0 %v3594
      %v3794 = vpop.f32.mrf.mxu0
      %v3795 = vadd.f32 0.0, %v3794
      %v3796 = vpop.f32.mrf.mxu0
      %3797 = vmatprep.mubr.f32.mxu0 0.0
      %3798 = vmatmul.mubr.f32.gmra.mxu0 %v3593
      %v3799 = vpop.f32.mrf.mxu0
      %v3800 = vadd.f32 0.0, %v3799
      %v3801 = vpop.f32.mrf.mxu0
      %3802 = vmatprep.mubr.f32.mxu0 0.0
      %3803 = vmatmul.mubr.f32.gmra.mxu0 %v3592
      %v3804 = vpop.f32.mrf.mxu0
      %v3805 = vadd.f32 0.0, %v3804
      %v3806 = vpop.f32.mrf.mxu0
      %3807 = vmatprep.mubr.f32.mxu0 0.0
      %3808 = vmatmul.mubr.f32.gmra.mxu0 %v3591
      %v3809 = vpop.f32.mrf.mxu0
      %v3810 = vadd.f32 0.0, %v3809
      %v3811 = vpop.f32.mrf.mxu0
      %3812 = vmatprep.mubr.f32.mxu0 0.0
      %3813 = vmatmul.mubr.f32.gmra.mxu0 %v3590
      %v3814 = vpop.f32.mrf.mxu0
      %v3815 = vadd.f32 0.0, %v3814
      %v3816 = vpop.f32.mrf.mxu0
      %3817 = vmatprep.mubr.f32.mxu0 0.0
      %3818 = vmatmul.mubr.f32.gmra.mxu0 %v3589
      %v3819 = vpop.f32.mrf.mxu0
      %v3820 = vadd.f32 0.0, %v3819
      %v3821 = vpop.f32.mrf.mxu0
      %3822 = vmatprep.mubr.f32.mxu0 0.0
      %3823 = vmatmul.mubr.f32.gmra.mxu0 %v3588
      %v3824 = vpop.f32.mrf.mxu0
      %v3825 = vadd.f32 0.0, %v3824
      %v3826 = vpop.f32.mrf.mxu0
      %3827 = vmatprep.mubr.f32.mxu0 0.0
      %3828 = vmatmul.mubr.f32.gmra.mxu0 %v3587
      %v3829 = vpop.f32.mrf.mxu0
      %v3830 = vadd.f32 0.0, %v3829
      %v3831 = vpop.f32.mrf.mxu0
      %3832 = vmatprep.mubr.f32.mxu0 0.0
      %3833 = vmatmul.mubr.f32.gmra.mxu0 %v3586
      %v3834 = vpop.f32.mrf.mxu0
      %v3835 = vadd.f32 0.0, %v3834
      %v3836 = vpop.f32.mrf.mxu0
      %3837 = vmatprep.mubr.f32.mxu0 0.0
      %3838 = vmatmul.mubr.f32.gmra.mxu0 %v3585
      %v3839 = vpop.f32.mrf.mxu0
      %v3840 = vadd.f32 0.0, %v3839
      %v3841 = vpop.f32.mrf.mxu0
      %3842 = vmatprep.mubr.f32.mxu0 0.0
      %3843 = vmatmul.mubr.f32.gmra.mxu0 %v3584
      %v3844 = vpop.f32.mrf.mxu0
      %v3845 = vadd.f32 0.0, %v3844
      %v3846 = vpop.f32.mrf.mxu0
      %3847 = vmatprep.mubr.f32.mxu0 0.0
      %3848 = vmatmul.mubr.f32.gmra.mxu0 %v3583
      %v3849 = vpop.f32.mrf.mxu0
      %v3850 = vadd.f32 0.0, %v3849
      %v3851 = vpop.f32.mrf.mxu0
      %3852 = vmatprep.mubr.f32.mxu0 0.0
      %3853 = vmatmul.mubr.f32.gmra.mxu0 %v3582
      %v3854 = vpop.f32.mrf.mxu0
      %v3855 = vadd.f32 0.0, %v3854
      %v3856 = vpop.f32.mrf.mxu0
      %3857 = vmatprep.mubr.f32.mxu0 0.0
      %3858 = vmatmul.mubr.f32.gmra.mxu0 %v3581
      %v3859 = vpop.f32.mrf.mxu0
      %v3860 = vadd.f32 0.0, %v3859
      %v3861 = vpop.f32.mrf.mxu0
      %3862 = vmatprep.mubr.f32.mxu0 0.0
      %3863 = vmatmul.mubr.f32.gmra.mxu0 %v3580
      %v3864 = vpop.f32.mrf.mxu0
      %v3865 = vadd.f32 0.0, %v3864
      %v3866 = vpop.f32.mrf.mxu0
      %3867 = vmatprep.mubr.f32.mxu0 0.0
      %3868 = vmatmul.mubr.f32.gmra.mxu0 %v3579
      %v3869 = vpop.f32.mrf.mxu0
      %v3870 = vadd.f32 0.0, %v3869
      %v3871 = vpop.f32.mrf.mxu0
      %3872 = vmatprep.mubr.f32.mxu0 0.0
      %3873 = vmatmul.mubr.f32.gmra.mxu0 %v3578
      %v3874 = vpop.f32.mrf.mxu0
      %v3875 = vadd.f32 0.0, %v3874
      %v3876 = vpop.f32.mrf.mxu0
      %3877 = vmatprep.mubr.f32.mxu0 0.0
      %3878 = vmatmul.mubr.f32.gmra.mxu0 %v3577
      %v3879 = vpop.f32.mrf.mxu0
      %v3880 = vadd.f32 0.0, %v3879
      %v3881 = vpop.f32.mrf.mxu0
      %3882 = vmatprep.mubr.f32.mxu0 0.0
      %3883 = vmatmul.mubr.f32.gmra.mxu0 %v3576
      %v3884 = vpop.f32.mrf.mxu0
      %v3885 = vadd.f32 0.0, %v3884
      %v3886 = vpop.f32.mrf.mxu0
      %3887 = vmatprep.mubr.f32.mxu0 0.0
      %3888 = vmatmul.mubr.f32.gmra.mxu0 %v3616
      %v3889 = vpop.f32.mrf.mxu0
      %v3890 = vadd.f32 0.0, %v3889
      %v3891 = vpop.f32.mrf.mxu0
      %3892 = vmatprep.mubr.f32.mxu0 0.0
      %3893 = vmatmul.mubr.f32.gmra.mxu0 %v3615
      %v3894 = vpop.f32.mrf.mxu0
      %v3895 = vadd.f32 0.0, %v3894
      %v3896 = vpop.f32.mrf.mxu0
      %3897 = vmatprep.mubr.f32.mxu0 0.0
      %3898 = vmatmul.mubr.f32.gmra.mxu0 %v3614
      %v3899 = vpop.f32.mrf.mxu0
      %v3900 = vadd.f32 0.0, %v3899
      %v3901 = vpop.f32.mrf.mxu0
      %3902 = vdwg.mxu0
      %v3903 = vadd.f32 %v3493, %v3700
      %v3904 = vadd.f32 %v3494, %v3705
      %v3905 = vadd.f32 %v3495, %v3710
      %v3906 = vadd.f32 %v3496, %v3715
      %v3907 = vadd.f32 %v3497, %v3720
      %v3908 = vadd.f32 %v3498, %v3725
      %v3909 = vadd.f32 %v3499, %v3730
      %v3910 = vadd.f32 %v3500, %v3735
      %v3911 = vadd.f32 %v3501, %v3740
      %v3912 = vadd.f32 %v3502, %v3745
      %v3913 = vadd.f32 %v3503, %v3750
      %v3914 = vadd.f32 %v3504, %v3755
      %v3915 = vadd.f32 %v3505, %v3760
      %v3916 = vadd.f32 %v3506, %v3765
      %v3917 = vadd.f32 %v3507, %v3770
      %v3918 = vadd.f32 %v3508, %v3775
      %v3919 = vadd.f32 %v3509, %v3780
      %v3920 = vadd.f32 %v3510, %v3785
      %v3921 = vadd.f32 %v3511, %v3790
      %v3922 = vadd.f32 %v3512, %v3795
      %v3923 = vadd.f32 %v3513, %v3800
      %v3924 = vadd.f32 %v3514, %v3805
      %v3925 = vadd.f32 %v3515, %v3810
      %v3926 = vadd.f32 %v3516, %v3815
      %v3927 = vadd.f32 %v3517, %v3820
      %v3928 = vadd.f32 %v3518, %v3825
      %v3929 = vadd.f32 %v3519, %v3830
      %v3930 = vadd.f32 %v3520, %v3835
      %v3931 = vadd.f32 %v3521, %v3840
      %v3932 = vadd.f32 %v3522, %v3845
      %v3933 = vadd.f32 %v3523, %v3850
      %v3934 = vadd.f32 %v3524, %v3855
      %v3935 = vadd.f32 %v3525, %v3860
      %v3936 = vadd.f32 %v3526, %v3865
      %v3937 = vadd.f32 %v3527, %v3870
      %v3938 = vadd.f32 %v3528, %v3875
      %v3939 = vadd.f32 %v3529, %v3880
      %v3940 = vadd.f32 %v3530, %v3885
      %v3941 = vadd.f32 %v3531, %v3890
      %v3942 = vadd.f32 %v3532, %v3895
      %v3943 = vadd.f32 %v3533, %v3900
      %v3944 = vrot.slane %v952, 3
      %v3945 = vrot.slane %v953, 3
      %v3946 = vrot.slane %v954, 3
      %v3947 = vrot.slane %v955, 3
      %v3948 = vrot.slane %v956, 3
      %v3949 = vrot.slane %v957, 3
      %v3950 = vrot.slane %v958, 3
      %v3951 = vrot.slane %v959, 3
      %v3952 = vrot.slane %v960, 3
      %v3953 = vrot.slane %v961, 3
      %v3954 = vrot.slane %v962, 3
      %v3955 = vrot.slane %v963, 3
      %v3956 = vrot.slane %v964, 3
      %v3957 = vrot.slane %v965, 3
      %v3958 = vrot.slane %v966, 3
      %v3959 = vrot.slane %v967, 3
      %v3960 = vrot.slane %v968, 3
      %v3961 = vrot.slane %v969, 3
      %v3962 = vrot.slane %v970, 3
      %v3963 = vrot.slane %v971, 3
      %v3964 = vrot.slane %v972, 3
      %v3965 = vrot.slane %v973, 3
      %v3966 = vrot.slane %v974, 3
      %v3967 = vrot.slane %v975, 3
      %v3968 = vrot.slane %v976, 3
      %v3969 = vrot.slane %v977, 3
      %v3970 = vrot.slane %v978, 3
      %v3971 = vrot.slane %v979, 3
      %v3972 = vrot.slane %v980, 3
      %v3973 = vrot.slane %v981, 3
      %v3974 = vrot.slane %v982, 3
      %v3975 = vrot.slane %v983, 3
      %v3976 = vrot.slane %v984, 3
      %v3977 = vrot.slane %v985, 3
      %v3978 = vrot.slane %v986, 3
      %v3979 = vrot.slane %v987, 3
      %v3980 = vrot.slane %v988, 3
      %v3981 = vrot.slane %v989, 3
      %v3982 = vrot.slane %v990, 3
      %v3983 = vrot.slane %v991, 3
      %v3984 = vrot.slane %v992, 3
      %vm3985 = vcmp.lt.s32.totalorder %v1035, 5
      %v3986 = vsel %vm3985, %v3983, %v3984
      %v3987 = vsel %vm3985, %v3982, %v3983
      %v3988 = vsel %vm3985, %v3981, %v3982
      %v3989 = vsel %vm3985, %v3980, %v3981
      %v3990 = vsel %vm3985, %v3979, %v3980
      %v3991 = vsel %vm3985, %v3978, %v3979
      %v3992 = vsel %vm3985, %v3977, %v3978
      %v3993 = vsel %vm3985, %v3976, %v3977
      %v3994 = vsel %vm3985, %v3975, %v3976
      %v3995 = vsel %vm3985, %v3974, %v3975
      %v3996 = vsel %vm3985, %v3973, %v3974
      %v3997 = vsel %vm3985, %v3972, %v3973
      %v3998 = vsel %vm3985, %v3971, %v3972
      %v3999 = vsel %vm3985, %v3970, %v3971
      %v4000 = vsel %vm3985, %v3969, %v3970
      %v4001 = vsel %vm3985, %v3968, %v3969
      %v4002 = vsel %vm3985, %v3967, %v3968
      %v4003 = vsel %vm3985, %v3966, %v3967
      %v4004 = vsel %vm3985, %v3965, %v3966
      %v4005 = vsel %vm3985, %v3964, %v3965
      %v4006 = vsel %vm3985, %v3963, %v3964
      %v4007 = vsel %vm3985, %v3962, %v3963
      %v4008 = vsel %vm3985, %v3961, %v3962
      %v4009 = vsel %vm3985, %v3960, %v3961
      %v4010 = vsel %vm3985, %v3959, %v3960
      %v4011 = vsel %vm3985, %v3958, %v3959
      %v4012 = vsel %vm3985, %v3957, %v3958
      %v4013 = vsel %vm3985, %v3956, %v3957
      %v4014 = vsel %vm3985, %v3955, %v3956
      %v4015 = vsel %vm3985, %v3954, %v3955
      %v4016 = vsel %vm3985, %v3953, %v3954
      %v4017 = vsel %vm3985, %v3952, %v3953
      %v4018 = vsel %vm3985, %v3951, %v3952
      %v4019 = vsel %vm3985, %v3950, %v3951
      %v4020 = vsel %vm3985, %v3949, %v3950
      %v4021 = vsel %vm3985, %v3948, %v3949
      %v4022 = vsel %vm3985, %v3947, %v3948
      %v4023 = vsel %vm3985, %v3946, %v3947
      %v4024 = vsel %vm3985, %v3945, %v3946
      %v4025 = vsel %vm3985, %v3944, %v3945
      %v4026 = vsel %vm3985, %v3984, %v3944
      %v4027 = vld [vmem:[%s5 + $0x400] sm:$0xff]
      %v4028 = vld [vmem:[%s5 + $0x408] sm:$0xff]
      %v4029 = vld [vmem:[%s5 + $0x410] sm:$0xff]
      %v4030 = vld [vmem:[%s5 + $0x418] sm:$0xff]
      %v4031 = vld [vmem:[%s5 + $0x420] sm:$0xff]
      %v4032 = vld [vmem:[%s5 + $0x428] sm:$0xff]
      %v4033 = vld [vmem:[%s5 + $0x430] sm:$0xff]
      %v4034 = vld [vmem:[%s5 + $0x438] sm:$0xff]
      %v4035 = vld [vmem:[%s5 + $0x440] sm:$0xff]
      %v4036 = vld [vmem:[%s5 + $0x448] sm:$0xff]
      %v4037 = vld [vmem:[%s5 + $0x450] sm:$0xff]
      %v4038 = vld [vmem:[%s5 + $0x458] sm:$0xff]
      %v4039 = vld [vmem:[%s5 + $0x460] sm:$0xff]
      %v4040 = vld [vmem:[%s5 + $0x468] sm:$0xff]
      %v4041 = vld [vmem:[%s5 + $0x470] sm:$0xff]
      %v4042 = vld [vmem:[%s5 + $0x478] sm:$0xff]
      %4043 = vmatprep.subr.mxu0 0.0
      %4044 = vmatpush1.msra.mxu0 %v4042
      %4045 = vmatprep.subr.mxu0 0.0
      %4046 = vmatpush1.msra.mxu0 %v4041
      %4047 = vmatprep.subr.mxu0 0.0
      %4048 = vmatpush1.msra.mxu0 %v4040
      %4049 = vmatprep.subr.mxu0 0.0
      %4050 = vmatpush1.msra.mxu0 %v4039
      %4051 = vmatprep.subr.mxu0 0.0
      %4052 = vmatpush1.msra.mxu0 %v4038
      %4053 = vmatprep.subr.mxu0 0.0
      %4054 = vmatpush1.msra.mxu0 %v4037
      %4055 = vmatprep.subr.mxu0 0.0
      %4056 = vmatpush1.msra.mxu0 %v4036
      %4057 = vmatprep.subr.mxu0 0.0
      %4058 = vmatpush1.msra.mxu0 %v4035
      %4059 = vmatprep.subr.mxu0 0.0
      %4060 = vmatpush1.msra.mxu0 %v4034
      %4061 = vmatprep.subr.mxu0 0.0
      %4062 = vmatpush1.msra.mxu0 %v4033
      %4063 = vmatprep.subr.mxu0 0.0
      %4064 = vmatpush1.msra.mxu0 %v4032
      %4065 = vmatprep.subr.mxu0 0.0
      %4066 = vmatpush1.msra.mxu0 %v4031
      %4067 = vmatprep.subr.mxu0 0.0
      %4068 = vmatpush1.msra.mxu0 %v4030
      %4069 = vmatprep.subr.mxu0 0.0
      %4070 = vmatpush1.msra.mxu0 %v4029
      %4071 = vmatprep.subr.mxu0 0.0
      %4072 = vmatpush1.msra.mxu0 %v4028
      %4073 = vmatprep.subr.mxu0 0.0
      %4074 = vmatpush1.msra.mxu0 %v4027
      %4075 = vmatprep.subr.mxu0 0.0
      %4076 = vmatpush2.msra.mxu0 0.0
      %4077 = vmatprep.subr.mxu0 0.0
      %4078 = vmatpush2.msra.mxu0 0.0
      %4079 = vmatprep.subr.mxu0 0.0
      %4080 = vmatpush2.msra.mxu0 0.0
      %4081 = vmatprep.subr.mxu0 0.0
      %4082 = vmatpush2.msra.mxu0 0.0
      %4083 = vmatprep.subr.mxu0 0.0
      %4084 = vmatpush2.msra.mxu0 0.0
      %4085 = vmatprep.subr.mxu0 0.0
      %4086 = vmatpush2.msra.mxu0 0.0
      %4087 = vmatprep.subr.mxu0 0.0
      %4088 = vmatpush2.msra.mxu0 0.0
      %4089 = vmatprep.subr.mxu0 0.0
      %4090 = vmatpush2.msra.mxu0 0.0
      %4091 = vmatprep.subr.mxu0 0.0
      %4092 = vmatpush2.msra.mxu0 0.0
      %4093 = vmatprep.subr.mxu0 0.0
      %4094 = vmatpush2.msra.mxu0 0.0
      %4095 = vmatprep.subr.mxu0 0.0
      %4096 = vmatpush2.msra.mxu0 0.0
      %4097 = vmatprep.subr.mxu0 0.0
      %4098 = vmatpush2.msra.mxu0 0.0
      %4099 = vmatprep.subr.mxu0 0.0
      %4100 = vmatpush2.msra.mxu0 0.0
      %4101 = vmatprep.subr.mxu0 0.0
      %4102 = vmatpush2.msra.mxu0 0.0
      %4103 = vmatprep.subr.mxu0 0.0
      %4104 = vmatpush2.msra.mxu0 0.0
      %4105 = vmatprep.subr.mxu0 0.0
      %4106 = vmatpush2.msra.mxu0 0.0
      %4107 = vmatprep.mubr.f32.mxu0 0.0
      %4108 = vmatmul.mubr.f32.gmra.mxu0 %v4023
      %v4109 = vpop.f32.mrf.mxu0
      %v4110 = vadd.f32 0.0, %v4109
      %v4111 = vpop.f32.mrf.mxu0
      %4112 = vmatprep.mubr.f32.mxu0 0.0
      %4113 = vmatmul.mubr.f32.gmra.mxu0 %v4022
      %v4114 = vpop.f32.mrf.mxu0
      %v4115 = vadd.f32 0.0, %v4114
      %v4116 = vpop.f32.mrf.mxu0
      %4117 = vmatprep.mubr.f32.mxu0 0.0
      %4118 = vmatmul.mubr.f32.gmra.mxu0 %v4021
      %v4119 = vpop.f32.mrf.mxu0
      %v4120 = vadd.f32 0.0, %v4119
      %v4121 = vpop.f32.mrf.mxu0
      %4122 = vmatprep.mubr.f32.mxu0 0.0
      %4123 = vmatmul.mubr.f32.gmra.mxu0 %v4020
      %v4124 = vpop.f32.mrf.mxu0
      %v4125 = vadd.f32 0.0, %v4124
      %v4126 = vpop.f32.mrf.mxu0
      %4127 = vmatprep.mubr.f32.mxu0 0.0
      %4128 = vmatmul.mubr.f32.gmra.mxu0 %v4019
      %v4129 = vpop.f32.mrf.mxu0
      %v4130 = vadd.f32 0.0, %v4129
      %v4131 = vpop.f32.mrf.mxu0
      %4132 = vmatprep.mubr.f32.mxu0 0.0
      %4133 = vmatmul.mubr.f32.gmra.mxu0 %v4018
      %v4134 = vpop.f32.mrf.mxu0
      %v4135 = vadd.f32 0.0, %v4134
      %v4136 = vpop.f32.mrf.mxu0
      %4137 = vmatprep.mubr.f32.mxu0 0.0
      %4138 = vmatmul.mubr.f32.gmra.mxu0 %v4017
      %v4139 = vpop.f32.mrf.mxu0
      %v4140 = vadd.f32 0.0, %v4139
      %v4141 = vpop.f32.mrf.mxu0
      %4142 = vmatprep.mubr.f32.mxu0 0.0
      %4143 = vmatmul.mubr.f32.gmra.mxu0 %v4016
      %v4144 = vpop.f32.mrf.mxu0
      %v4145 = vadd.f32 0.0, %v4144
      %v4146 = vpop.f32.mrf.mxu0
      %4147 = vmatprep.mubr.f32.mxu0 0.0
      %4148 = vmatmul.mubr.f32.gmra.mxu0 %v4015
      %v4149 = vpop.f32.mrf.mxu0
      %v4150 = vadd.f32 0.0, %v4149
      %v4151 = vpop.f32.mrf.mxu0
      %4152 = vmatprep.mubr.f32.mxu0 0.0
      %4153 = vmatmul.mubr.f32.gmra.mxu0 %v4014
      %v4154 = vpop.f32.mrf.mxu0
      %v4155 = vadd.f32 0.0, %v4154
      %v4156 = vpop.f32.mrf.mxu0
      %4157 = vmatprep.mubr.f32.mxu0 0.0
      %4158 = vmatmul.mubr.f32.gmra.mxu0 %v4013
      %v4159 = vpop.f32.mrf.mxu0
      %v4160 = vadd.f32 0.0, %v4159
      %v4161 = vpop.f32.mrf.mxu0
      %4162 = vmatprep.mubr.f32.mxu0 0.0
      %4163 = vmatmul.mubr.f32.gmra.mxu0 %v4012
      %v4164 = vpop.f32.mrf.mxu0
      %v4165 = vadd.f32 0.0, %v4164
      %v4166 = vpop.f32.mrf.mxu0
      %4167 = vmatprep.mubr.f32.mxu0 0.0
      %4168 = vmatmul.mubr.f32.gmra.mxu0 %v4011
      %v4169 = vpop.f32.mrf.mxu0
      %v4170 = vadd.f32 0.0, %v4169
      %v4171 = vpop.f32.mrf.mxu0
      %4172 = vmatprep.mubr.f32.mxu0 0.0
      %4173 = vmatmul.mubr.f32.gmra.mxu0 %v4010
      %v4174 = vpop.f32.mrf.mxu0
      %v4175 = vadd.f32 0.0, %v4174
      %v4176 = vpop.f32.mrf.mxu0
      %4177 = vmatprep.mubr.f32.mxu0 0.0
      %4178 = vmatmul.mubr.f32.gmra.mxu0 %v4009
      %v4179 = vpop.f32.mrf.mxu0
      %v4180 = vadd.f32 0.0, %v4179
      %v4181 = vpop.f32.mrf.mxu0
      %4182 = vmatprep.mubr.f32.mxu0 0.0
      %4183 = vmatmul.mubr.f32.gmra.mxu0 %v4008
      %v4184 = vpop.f32.mrf.mxu0
      %v4185 = vadd.f32 0.0, %v4184
      %v4186 = vpop.f32.mrf.mxu0
      %4187 = vmatprep.mubr.f32.mxu0 0.0
      %4188 = vmatmul.mubr.f32.gmra.mxu0 %v4007
      %v4189 = vpop.f32.mrf.mxu0
      %v4190 = vadd.f32 0.0, %v4189
      %v4191 = vpop.f32.mrf.mxu0
      %4192 = vmatprep.mubr.f32.mxu0 0.0
      %4193 = vmatmul.mubr.f32.gmra.mxu0 %v4006
      %v4194 = vpop.f32.mrf.mxu0
      %v4195 = vadd.f32 0.0, %v4194
      %v4196 = vpop.f32.mrf.mxu0
      %4197 = vmatprep.mubr.f32.mxu0 0.0
      %4198 = vmatmul.mubr.f32.gmra.mxu0 %v4005
      %v4199 = vpop.f32.mrf.mxu0
      %v4200 = vadd.f32 0.0, %v4199
      %v4201 = vpop.f32.mrf.mxu0
      %4202 = vmatprep.mubr.f32.mxu0 0.0
      %4203 = vmatmul.mubr.f32.gmra.mxu0 %v4004
      %v4204 = vpop.f32.mrf.mxu0
      %v4205 = vadd.f32 0.0, %v4204
      %v4206 = vpop.f32.mrf.mxu0
      %4207 = vmatprep.mubr.f32.mxu0 0.0
      %4208 = vmatmul.mubr.f32.gmra.mxu0 %v4003
      %v4209 = vpop.f32.mrf.mxu0
      %v4210 = vadd.f32 0.0, %v4209
      %v4211 = vpop.f32.mrf.mxu0
      %4212 = vmatprep.mubr.f32.mxu0 0.0
      %4213 = vmatmul.mubr.f32.gmra.mxu0 %v4002
      %v4214 = vpop.f32.mrf.mxu0
      %v4215 = vadd.f32 0.0, %v4214
      %v4216 = vpop.f32.mrf.mxu0
      %4217 = vmatprep.mubr.f32.mxu0 0.0
      %4218 = vmatmul.mubr.f32.gmra.mxu0 %v4001
      %v4219 = vpop.f32.mrf.mxu0
      %v4220 = vadd.f32 0.0, %v4219
      %v4221 = vpop.f32.mrf.mxu0
      %4222 = vmatprep.mubr.f32.mxu0 0.0
      %4223 = vmatmul.mubr.f32.gmra.mxu0 %v4000
      %v4224 = vpop.f32.mrf.mxu0
      %v4225 = vadd.f32 0.0, %v4224
      %v4226 = vpop.f32.mrf.mxu0
      %4227 = vmatprep.mubr.f32.mxu0 0.0
      %4228 = vmatmul.mubr.f32.gmra.mxu0 %v3999
      %v4229 = vpop.f32.mrf.mxu0
      %v4230 = vadd.f32 0.0, %v4229
      %v4231 = vpop.f32.mrf.mxu0
      %4232 = vmatprep.mubr.f32.mxu0 0.0
      %4233 = vmatmul.mubr.f32.gmra.mxu0 %v3998
      %v4234 = vpop.f32.mrf.mxu0
      %v4235 = vadd.f32 0.0, %v4234
      %v4236 = vpop.f32.mrf.mxu0
      %4237 = vmatprep.mubr.f32.mxu0 0.0
      %4238 = vmatmul.mubr.f32.gmra.mxu0 %v3997
      %v4239 = vpop.f32.mrf.mxu0
      %v4240 = vadd.f32 0.0, %v4239
      %v4241 = vpop.f32.mrf.mxu0
      %4242 = vmatprep.mubr.f32.mxu0 0.0
      %4243 = vmatmul.mubr.f32.gmra.mxu0 %v3996
      %v4244 = vpop.f32.mrf.mxu0
      %v4245 = vadd.f32 0.0, %v4244
      %v4246 = vpop.f32.mrf.mxu0
      %4247 = vmatprep.mubr.f32.mxu0 0.0
      %4248 = vmatmul.mubr.f32.gmra.mxu0 %v3995
      %v4249 = vpop.f32.mrf.mxu0
      %v4250 = vadd.f32 0.0, %v4249
      %v4251 = vpop.f32.mrf.mxu0
      %4252 = vmatprep.mubr.f32.mxu0 0.0
      %4253 = vmatmul.mubr.f32.gmra.mxu0 %v3994
      %v4254 = vpop.f32.mrf.mxu0
      %v4255 = vadd.f32 0.0, %v4254
      %v4256 = vpop.f32.mrf.mxu0
      %4257 = vmatprep.mubr.f32.mxu0 0.0
      %4258 = vmatmul.mubr.f32.gmra.mxu0 %v3993
      %v4259 = vpop.f32.mrf.mxu0
      %v4260 = vadd.f32 0.0, %v4259
      %v4261 = vpop.f32.mrf.mxu0
      %4262 = vmatprep.mubr.f32.mxu0 0.0
      %4263 = vmatmul.mubr.f32.gmra.mxu0 %v3992
      %v4264 = vpop.f32.mrf.mxu0
      %v4265 = vadd.f32 0.0, %v4264
      %v4266 = vpop.f32.mrf.mxu0
      %4267 = vmatprep.mubr.f32.mxu0 0.0
      %4268 = vmatmul.mubr.f32.gmra.mxu0 %v3991
      %v4269 = vpop.f32.mrf.mxu0
      %v4270 = vadd.f32 0.0, %v4269
      %v4271 = vpop.f32.mrf.mxu0
      %4272 = vmatprep.mubr.f32.mxu0 0.0
      %4273 = vmatmul.mubr.f32.gmra.mxu0 %v3990
      %v4274 = vpop.f32.mrf.mxu0
      %v4275 = vadd.f32 0.0, %v4274
      %v4276 = vpop.f32.mrf.mxu0
      %4277 = vmatprep.mubr.f32.mxu0 0.0
      %4278 = vmatmul.mubr.f32.gmra.mxu0 %v3989
      %v4279 = vpop.f32.mrf.mxu0
      %v4280 = vadd.f32 0.0, %v4279
      %v4281 = vpop.f32.mrf.mxu0
      %4282 = vmatprep.mubr.f32.mxu0 0.0
      %4283 = vmatmul.mubr.f32.gmra.mxu0 %v3988
      %v4284 = vpop.f32.mrf.mxu0
      %v4285 = vadd.f32 0.0, %v4284
      %v4286 = vpop.f32.mrf.mxu0
      %4287 = vmatprep.mubr.f32.mxu0 0.0
      %4288 = vmatmul.mubr.f32.gmra.mxu0 %v3987
      %v4289 = vpop.f32.mrf.mxu0
      %v4290 = vadd.f32 0.0, %v4289
      %v4291 = vpop.f32.mrf.mxu0
      %4292 = vmatprep.mubr.f32.mxu0 0.0
      %4293 = vmatmul.mubr.f32.gmra.mxu0 %v3986
      %v4294 = vpop.f32.mrf.mxu0
      %v4295 = vadd.f32 0.0, %v4294
      %v4296 = vpop.f32.mrf.mxu0
      %4297 = vmatprep.mubr.f32.mxu0 0.0
      %4298 = vmatmul.mubr.f32.gmra.mxu0 %v4026
      %v4299 = vpop.f32.mrf.mxu0
      %v4300 = vadd.f32 0.0, %v4299
      %v4301 = vpop.f32.mrf.mxu0
      %4302 = vmatprep.mubr.f32.mxu0 0.0
      %4303 = vmatmul.mubr.f32.gmra.mxu0 %v4025
      %v4304 = vpop.f32.mrf.mxu0
      %v4305 = vadd.f32 0.0, %v4304
      %v4306 = vpop.f32.mrf.mxu0
      %4307 = vmatprep.mubr.f32.mxu0 0.0
      %4308 = vmatmul.mubr.f32.gmra.mxu0 %v4024
      %v4309 = vpop.f32.mrf.mxu0
      %v4310 = vadd.f32 0.0, %v4309
      %v4311 = vpop.f32.mrf.mxu0
      %4312 = vdwg.mxu0
      %v4313 = vadd.f32 %v3903, %v4110
      %v4314 = vadd.f32 %v3904, %v4115
      %v4315 = vadd.f32 %v3905, %v4120
      %v4316 = vadd.f32 %v3906, %v4125
      %v4317 = vadd.f32 %v3907, %v4130
      %v4318 = vadd.f32 %v3908, %v4135
      %v4319 = vadd.f32 %v3909, %v4140
      %v4320 = vadd.f32 %v3910, %v4145
      %v4321 = vadd.f32 %v3911, %v4150
      %v4322 = vadd.f32 %v3912, %v4155
      %v4323 = vadd.f32 %v3913, %v4160
      %v4324 = vadd.f32 %v3914, %v4165
      %v4325 = vadd.f32 %v3915, %v4170
      %v4326 = vadd.f32 %v3916, %v4175
      %v4327 = vadd.f32 %v3917, %v4180
      %v4328 = vadd.f32 %v3918, %v4185
      %v4329 = vadd.f32 %v3919, %v4190
      %v4330 = vadd.f32 %v3920, %v4195
      %v4331 = vadd.f32 %v3921, %v4200
      %v4332 = vadd.f32 %v3922, %v4205
      %v4333 = vadd.f32 %v3923, %v4210
      %v4334 = vadd.f32 %v3924, %v4215
      %v4335 = vadd.f32 %v3925, %v4220
      %v4336 = vadd.f32 %v3926, %v4225
      %v4337 = vadd.f32 %v3927, %v4230
      %v4338 = vadd.f32 %v3928, %v4235
      %v4339 = vadd.f32 %v3929, %v4240
      %v4340 = vadd.f32 %v3930, %v4245
      %v4341 = vadd.f32 %v3931, %v4250
      %v4342 = vadd.f32 %v3932, %v4255
      %v4343 = vadd.f32 %v3933, %v4260
      %v4344 = vadd.f32 %v3934, %v4265
      %v4345 = vadd.f32 %v3935, %v4270
      %v4346 = vadd.f32 %v3936, %v4275
      %v4347 = vadd.f32 %v3937, %v4280
      %v4348 = vadd.f32 %v3938, %v4285
      %v4349 = vadd.f32 %v3939, %v4290
      %v4350 = vadd.f32 %v3940, %v4295
      %v4351 = vadd.f32 %v3941, %v4300
      %v4352 = vadd.f32 %v3942, %v4305
      %v4353 = vadd.f32 %v3943, %v4310
      %v4354 = vld [vmem:[%s6] sm:$0xff]
      %v4355 = vlaneseq
      %v4356 = vshrl.u32 %v4355, 7
      %v4357 = vsub.s32 0, %v4356
      %v4358 = vrot.slane %v4354, %v4357
      %v4359 = vadd.f32 %v4313, %v4358
      %v4360 = vadd.f32 %v4314, %v4358
      %v4361 = vadd.f32 %v4315, %v4358
      %v4362 = vadd.f32 %v4316, %v4358
      %v4363 = vadd.f32 %v4317, %v4358
      %v4364 = vadd.f32 %v4318, %v4358
      %v4365 = vadd.f32 %v4319, %v4358
      %v4366 = vadd.f32 %v4320, %v4358
      %v4367 = vadd.f32 %v4321, %v4358
      %v4368 = vadd.f32 %v4322, %v4358
      %v4369 = vadd.f32 %v4323, %v4358
      %v4370 = vadd.f32 %v4324, %v4358
      %v4371 = vadd.f32 %v4325, %v4358
      %v4372 = vadd.f32 %v4326, %v4358
      %v4373 = vadd.f32 %v4327, %v4358
      %v4374 = vadd.f32 %v4328, %v4358
      %v4375 = vadd.f32 %v4329, %v4358
      %v4376 = vadd.f32 %v4330, %v4358
      %v4377 = vadd.f32 %v4331, %v4358
      %v4378 = vadd.f32 %v4332, %v4358
      %v4379 = vadd.f32 %v4333, %v4358
      %v4380 = vadd.f32 %v4334, %v4358
      %v4381 = vadd.f32 %v4335, %v4358
      %v4382 = vadd.f32 %v4336, %v4358
      %v4383 = vadd.f32 %v4337, %v4358
      %v4384 = vadd.f32 %v4338, %v4358
      %v4385 = vadd.f32 %v4339, %v4358
      %v4386 = vadd.f32 %v4340, %v4358
      %v4387 = vadd.f32 %v4341, %v4358
      %v4388 = vadd.f32 %v4342, %v4358
      %v4389 = vadd.f32 %v4343, %v4358
      %v4390 = vadd.f32 %v4344, %v4358
      %v4391 = vadd.f32 %v4345, %v4358
      %v4392 = vadd.f32 %v4346, %v4358
      %v4393 = vadd.f32 %v4347, %v4358
      %v4394 = vadd.f32 %v4348, %v4358
      %v4395 = vadd.f32 %v4349, %v4358
      %v4396 = vadd.f32 %v4350, %v4358
      %v4397 = vadd.f32 %v4351, %v4358
      %v4398 = vadd.f32 %v4352, %v4358
      %v4399 = vadd.f32 %v4353, %v4358
      %v4400 = vmax.f32 %v4359, 0.0
      %v4401 = vmax.f32 %v4360, 0.0
      %v4402 = vmax.f32 %v4361, 0.0
      %v4403 = vmax.f32 %v4362, 0.0
      %v4404 = vmax.f32 %v4363, 0.0
      %v4405 = vmax.f32 %v4364, 0.0
      %v4406 = vmax.f32 %v4365, 0.0
      %v4407 = vmax.f32 %v4366, 0.0
      %v4408 = vmax.f32 %v4367, 0.0
      %v4409 = vmax.f32 %v4368, 0.0
      %v4410 = vmax.f32 %v4369, 0.0
      %v4411 = vmax.f32 %v4370, 0.0
      %v4412 = vmax.f32 %v4371, 0.0
      %v4413 = vmax.f32 %v4372, 0.0
      %v4414 = vmax.f32 %v4373, 0.0
      %v4415 = vmax.f32 %v4374, 0.0
      %v4416 = vmax.f32 %v4375, 0.0
      %v4417 = vmax.f32 %v4376, 0.0
      %v4418 = vmax.f32 %v4377, 0.0
      %v4419 = vmax.f32 %v4378, 0.0
      %v4420 = vmax.f32 %v4379, 0.0
      %v4421 = vmax.f32 %v4380, 0.0
      %v4422 = vmax.f32 %v4381, 0.0
      %v4423 = vmax.f32 %v4382, 0.0
      %v4424 = vmax.f32 %v4383, 0.0
      %v4425 = vmax.f32 %v4384, 0.0
      %v4426 = vmax.f32 %v4385, 0.0
      %v4427 = vmax.f32 %v4386, 0.0
      %v4428 = vmax.f32 %v4387, 0.0
      %v4429 = vmax.f32 %v4388, 0.0
      %v4430 = vmax.f32 %v4389, 0.0
      %v4431 = vmax.f32 %v4390, 0.0
      %v4432 = vmax.f32 %v4391, 0.0
      %v4433 = vmax.f32 %v4392, 0.0
      %v4434 = vmax.f32 %v4393, 0.0
      %v4435 = vmax.f32 %v4394, 0.0
      %v4436 = vmax.f32 %v4395, 0.0
      %v4437 = vmax.f32 %v4396, 0.0
      %v4438 = vmax.f32 %v4397, 0.0
      %v4439 = vmax.f32 %v4398, 0.0
      %v4440 = vmax.f32 %v4399, 0.0
      %v4441 = vld [vmem:[%s2] sm:$0xff]
      %v4442 = vld [vmem:[%s2 + $0x8] sm:$0xff]
      %v4443 = vld [vmem:[%s2 + $0x10] sm:$0xff]
      %vm4444 = vcmask 588800
      %v4446 = vsel %vm4444, %v4443, 0
      %4448 = vmatprep.subr.mxu0 0.0
      %4449 = vmatpush1.msra.mxu0 %v4415
      %4450 = vmatprep.subr.mxu0 0.0
      %4451 = vmatpush1.msra.mxu0 %v4414
      %4452 = vmatprep.subr.mxu0 0.0
      %4453 = vmatpush1.msra.mxu0 %v4413
      %4454 = vmatprep.subr.mxu0 0.0
      %4455 = vmatpush1.msra.mxu0 %v4412
      %4456 = vmatprep.subr.mxu0 0.0
      %4457 = vmatpush1.msra.mxu0 %v4411
      %4458 = vmatprep.subr.mxu0 0.0
      %4459 = vmatpush1.msra.mxu0 %v4410
      %4460 = vmatprep.subr.mxu0 0.0
      %4461 = vmatpush1.msra.mxu0 %v4409
      %4462 = vmatprep.subr.mxu0 0.0
      %4463 = vmatpush1.msra.mxu0 %v4408
      %4464 = vmatprep.subr.mxu0 0.0
      %4465 = vmatpush1.msra.mxu0 %v4407
      %4466 = vmatprep.subr.mxu0 0.0
      %4467 = vmatpush1.msra.mxu0 %v4406
      %4468 = vmatprep.subr.mxu0 0.0
      %4469 = vmatpush1.msra.mxu0 %v4405
      %4470 = vmatprep.subr.mxu0 0.0
      %4471 = vmatpush1.msra.mxu0 %v4404
      %4472 = vmatprep.subr.mxu0 0.0
      %4473 = vmatpush1.msra.mxu0 %v4403
      %4474 = vmatprep.subr.mxu0 0.0
      %4475 = vmatpush1.msra.mxu0 %v4402
      %4476 = vmatprep.subr.mxu0 0.0
      %4477 = vmatpush1.msra.mxu0 %v4401
      %4478 = vmatprep.subr.mxu0 0.0
      %4479 = vmatpush1.msra.mxu0 %v4400
      %4480 = vmatprep.subr.mxu0 0.0
      %4481 = vmatpush2.msra.mxu0 %v4431
      %4482 = vmatprep.subr.mxu0 0.0
      %4483 = vmatpush2.msra.mxu0 %v4430
      %4484 = vmatprep.subr.mxu0 0.0
      %4485 = vmatpush2.msra.mxu0 %v4429
      %4486 = vmatprep.subr.mxu0 0.0
      %4487 = vmatpush2.msra.mxu0 %v4428
      %4488 = vmatprep.subr.mxu0 0.0
      %4489 = vmatpush2.msra.mxu0 %v4427
      %4490 = vmatprep.subr.mxu0 0.0
      %4491 = vmatpush2.msra.mxu0 %v4426
      %4492 = vmatprep.subr.mxu0 0.0
      %4493 = vmatpush2.msra.mxu0 %v4425
      %4494 = vmatprep.subr.mxu0 0.0
      %4495 = vmatpush2.msra.mxu0 %v4424
      %4496 = vmatprep.subr.mxu0 0.0
      %4497 = vmatpush2.msra.mxu0 %v4423
      %4498 = vmatprep.subr.mxu0 0.0
      %4499 = vmatpush2.msra.mxu0 %v4422
      %4500 = vmatprep.subr.mxu0 0.0
      %4501 = vmatpush2.msra.mxu0 %v4421
      %4502 = vmatprep.subr.mxu0 0.0
      %4503 = vmatpush2.msra.mxu0 %v4420
      %4504 = vmatprep.subr.mxu0 0.0
      %4505 = vmatpush2.msra.mxu0 %v4419
      %4506 = vmatprep.subr.mxu0 0.0
      %4507 = vmatpush2.msra.mxu0 %v4418
      %4508 = vmatprep.subr.mxu0 0.0
      %4509 = vmatpush2.msra.mxu0 %v4417
      %4510 = vmatprep.subr.mxu0 0.0
      %4511 = vmatpush2.msra.mxu0 %v4416
      %4512 = vmatprep.mubr.f32.mxu0 %v4442
      %4513 = vmatmul.mubr.f32.gmra.mxu0 %v4441
      %v4514 = vpop.f32.mrf.mxu0
      %v4515 = vadd.f32 0.0, %v4514
      %v4516 = vpop.f32.mrf.mxu0
      %4517 = vdwg.mxu0
      %4518 = vmatprep.subr.mxu0 0.0
      %4519 = vmatpush1.msra.mxu0 0.0
      %4520 = vmatprep.subr.mxu0 0.0
      %4521 = vmatpush1.msra.mxu0 0.0
      %4522 = vmatprep.subr.mxu0 0.0
      %4523 = vmatpush1.msra.mxu0 0.0
      %4524 = vmatprep.subr.mxu0 0.0
      %4525 = vmatpush1.msra.mxu0 0.0
      %4526 = vmatprep.subr.mxu0 0.0
      %4527 = vmatpush1.msra.mxu0 0.0
      %4528 = vmatprep.subr.mxu0 0.0
      %4529 = vmatpush1.msra.mxu0 0.0
      %4530 = vmatprep.subr.mxu0 0.0
      %4531 = vmatpush1.msra.mxu0 0.0
      %4532 = vmatprep.subr.mxu0 0.0
      %4533 = vmatpush1.msra.mxu0 %v4440
      %4534 = vmatprep.subr.mxu0 0.0
      %4535 = vmatpush1.msra.mxu0 %v4439
      %4536 = vmatprep.subr.mxu0 0.0
      %4537 = vmatpush1.msra.mxu0 %v4438
      %4538 = vmatprep.subr.mxu0 0.0
      %4539 = vmatpush1.msra.mxu0 %v4437
      %4540 = vmatprep.subr.mxu0 0.0
      %4541 = vmatpush1.msra.mxu0 %v4436
      %4542 = vmatprep.subr.mxu0 0.0
      %4543 = vmatpush1.msra.mxu0 %v4435
      %4544 = vmatprep.subr.mxu0 0.0
      %4545 = vmatpush1.msra.mxu0 %v4434
      %4546 = vmatprep.subr.mxu0 0.0
      %4547 = vmatpush1.msra.mxu0 %v4433
      %4548 = vmatprep.subr.mxu0 0.0
      %4549 = vmatpush1.msra.mxu0 %v4432
      %4550 = vmatprep.subr.mxu0 0.0
      %4551 = vmatpush2.msra.mxu0 0.0
      %4552 = vmatprep.subr.mxu0 0.0
      %4553 = vmatpush2.msra.mxu0 0.0
      %4554 = vmatprep.subr.mxu0 0.0
      %4555 = vmatpush2.msra.mxu0 0.0
      %4556 = vmatprep.subr.mxu0 0.0
      %4557 = vmatpush2.msra.mxu0 0.0
      %4558 = vmatprep.subr.mxu0 0.0
      %4559 = vmatpush2.msra.mxu0 0.0
      %4560 = vmatprep.subr.mxu0 0.0
      %4561 = vmatpush2.msra.mxu0 0.0
      %4562 = vmatprep.subr.mxu0 0.0
      %4563 = vmatpush2.msra.mxu0 0.0
      %4564 = vmatprep.subr.mxu0 0.0
      %4565 = vmatpush2.msra.mxu0 0.0
      %4566 = vmatprep.subr.mxu0 0.0
      %4567 = vmatpush2.msra.mxu0 0.0
      %4568 = vmatprep.subr.mxu0 0.0
      %4569 = vmatpush2.msra.mxu0 0.0
      %4570 = vmatprep.subr.mxu0 0.0
      %4571 = vmatpush2.msra.mxu0 0.0
      %4572 = vmatprep.subr.mxu0 0.0
      %4573 = vmatpush2.msra.mxu0 0.0
      %4574 = vmatprep.subr.mxu0 0.0
      %4575 = vmatpush2.msra.mxu0 0.0
      %4576 = vmatprep.subr.mxu0 0.0
      %4577 = vmatpush2.msra.mxu0 0.0
      %4578 = vmatprep.subr.mxu0 0.0
      %4579 = vmatpush2.msra.mxu0 0.0
      %4580 = vmatprep.subr.mxu0 0.0
      %4581 = vmatpush2.msra.mxu0 0.0
      %4582 = vmatprep.mubr.f32.mxu0 0.0
      %4583 = vmatmul.mubr.f32.gmra.mxu0 %v4446
      %v4584 = vpop.f32.mrf.mxu0
      %v4585 = vadd.f32 %v4515, %v4584
      %v4586 = vpop.f32.mrf.mxu0
      %4587 = vdwg.mxu0
      %v4588 = vld [vmem:[%s7] sm:$0xff]
      %v4589 = vld [vmem:[%s7 + $0x8] sm:$0xff]
      %v4590 = vld [vmem:[%s7 + $0x10] sm:$0xff]
      %v4591 = vld [vmem:[%s7 + $0x18] sm:$0xff]
      %v4592 = vld [vmem:[%s7 + $0x20] sm:$0xff]
      %v4593 = vld [vmem:[%s7 + $0x28] sm:$0xff]
      %v4594 = vld [vmem:[%s7 + $0x30] sm:$0xff]
      %v4595 = vld [vmem:[%s7 + $0x38] sm:$0xff]
      %v4596 = vld [vmem:[%s7 + $0x40] sm:$0xff]
      %v4597 = vld [vmem:[%s7 + $0x48] sm:$0xff]
      %v4598 = vld [vmem:[%s7 + $0x50] sm:$0xff]
      %v4599 = vld [vmem:[%s7 + $0x58] sm:$0xff]
      %v4600 = vld [vmem:[%s7 + $0x60] sm:$0xff]
      %v4601 = vld [vmem:[%s7 + $0x68] sm:$0xff]
      %v4602 = vld [vmem:[%s7 + $0x70] sm:$0xff]
      %v4603 = vld [vmem:[%s7 + $0x78] sm:$0xff]
      %v4604 = vld [vmem:[%s8] sm:$0xff]
      %4605 = vmatprep.subr.mxu0 0.0
      %4606 = vmatpush1.msra.mxu0 %v4603
      %4607 = vmatprep.subr.mxu0 0.0
      %4608 = vmatpush1.msra.mxu0 %v4602
      %4609 = vmatprep.subr.mxu0 0.0
      %4610 = vmatpush1.msra.mxu0 %v4601
      %4611 = vmatprep.subr.mxu0 0.0
      %4612 = vmatpush1.msra.mxu0 %v4600
      %4613 = vmatprep.subr.mxu0 0.0
      %4614 = vmatpush1.msra.mxu0 %v4599
      %4615 = vmatprep.subr.mxu0 0.0
      %4616 = vmatpush1.msra.mxu0 %v4598
      %4617 = vmatprep.subr.mxu0 0.0
      %4618 = vmatpush1.msra.mxu0 %v4597
      %4619 = vmatprep.subr.mxu0 0.0
      %4620 = vmatpush1.msra.mxu0 %v4596
      %4621 = vmatprep.subr.mxu0 0.0
      %4622 = vmatpush1.msra.mxu0 %v4595
      %4623 = vmatprep.subr.mxu0 0.0
      %4624 = vmatpush1.msra.mxu0 %v4594
      %4625 = vmatprep.subr.mxu0 0.0
      %4626 = vmatpush1.msra.mxu0 %v4593
      %4627 = vmatprep.subr.mxu0 0.0
      %4628 = vmatpush1.msra.mxu0 %v4592
      %4629 = vmatprep.subr.mxu0 0.0
      %4630 = vmatpush1.msra.mxu0 %v4591
      %4631 = vmatprep.subr.mxu0 0.0
      %4632 = vmatpush1.msra.mxu0 %v4590
      %4633 = vmatprep.subr.mxu0 0.0
      %4634 = vmatpush1.msra.mxu0 %v4589
      %4635 = vmatprep.subr.mxu0 0.0
      %4636 = vmatpush1.msra.mxu0 %v4588
      %4637 = vmatprep.subr.mxu0 0.0
      %4638 = vmatpush2.msra.mxu0 0.0
      %4639 = vmatprep.subr.mxu0 0.0
      %4640 = vmatpush2.msra.mxu0 0.0
      %4641 = vmatprep.subr.mxu0 0.0
      %4642 = vmatpush2.msra.mxu0 0.0
      %4643 = vmatprep.subr.mxu0 0.0
      %4644 = vmatpush2.msra.mxu0 0.0
      %4645 = vmatprep.subr.mxu0 0.0
      %4646 = vmatpush2.msra.mxu0 0.0
      %4647 = vmatprep.subr.mxu0 0.0
      %4648 = vmatpush2.msra.mxu0 0.0
      %4649 = vmatprep.subr.mxu0 0.0
      %4650 = vmatpush2.msra.mxu0 0.0
      %4651 = vmatprep.subr.mxu0 0.0
      %4652 = vmatpush2.msra.mxu0 0.0
      %4653 = vmatprep.subr.mxu0 0.0
      %4654 = vmatpush2.msra.mxu0 0.0
      %4655 = vmatprep.subr.mxu0 0.0
      %4656 = vmatpush2.msra.mxu0 0.0
      %4657 = vmatprep.subr.mxu0 0.0
      %4658 = vmatpush2.msra.mxu0 0.0
      %4659 = vmatprep.subr.mxu0 0.0
      %4660 = vmatpush2.msra.mxu0 0.0
      %4661 = vmatprep.subr.mxu0 0.0
      %4662 = vmatpush2.msra.mxu0 0.0
      %4663 = vmatprep.subr.mxu0 0.0
      %4664 = vmatpush2.msra.mxu0 0.0
      %4665 = vmatprep.subr.mxu0 0.0
      %4666 = vmatpush2.msra.mxu0 0.0
      %4667 = vmatprep.subr.mxu0 0.0
      %4668 = vmatpush2.msra.mxu0 0.0
      %4669 = vmatprep.mubr.f32.mxu0 0.0
      %4670 = vmatmul.mubr.f32.gmra.mxu0 %v4585
      %v4671 = vpop.f32.mrf.mxu0
      %v4672 = vadd.f32 %v4604, %v4671
      %v4673 = vpop.f32.mrf.mxu0
      %4674 = vdwg.mxu0
      %4675 = vst [vmem:[%s332] sm:$0xff] %v4672
      %p4676 = scmp.lt.s32.totalorder %s20, 1
      %s4677 = scalar_select %p4676, %s20, 1
      %s4678 = smul.addr %s4677, 8
      %s4679 = scalar_lea.vmem %s9, %s4678
      // Predicated region
      $region57: #{a_call__.1} parent=55 // pred_check
        %p4680 = pneg %p232
      $region58: #{a_call__.1} parent=55 // pred_check_branch
        %4682 = sbr.rel (%p4680) target = $region60
      $region59: #{a_call__.1} parent=55 // pred_region
        _
      $region60: #{a_call__.1} parent=55 // pred_fallthru
        _
    $region56: #{a_call__.1} parent=5 // pred_fallthru
      _
    %p4683 = scmp.le.s32.totalorder 2, %s15
    // Predicated region
    $region61: #{a_call__.1} parent=5 // pred_check
      %p4684 = pneg %p4683
    $region62: #{a_call__.1} parent=5 // pred_check_branch
      %4686 = sbr.rel (%p4684) target = $region64
    $region63: #{a_call__.1} parent=5 // pred_region
      %s4687 = ssub.s32 %s15, 2
      // Predicated region
      $region65: #{a_call__.1} parent=63 // pred_check
        %p4688 = pneg %p238
      $region66: #{a_call__.1} parent=63 // pred_check_branch
        %4690 = sbr.rel (%p4688) target = $region68
      $region67: #{a_call__.1} parent=63 // pred_region
        %p4691 = scmp.lt.s32.totalorder %s21, 1
        %s4692 = scalar_select %p4691, %s21, 1
        %s4693 = smul.addr %s4692, 8
        %s4694 = scalar_lea.vmem %s9, %s4693
      $region68: #{a_call__.1} parent=63 // pred_fallthru
        _
    $region64: #{a_call__.1} parent=5 // pred_fallthru
      _
  $region6: #{a_call__.1} parent=0 // loop_footer
    %s19 = sadd.s32 1, %s15
  $region7: #{a_call__.1} parent=0 // loop_footer_branch
    %14 = sbr.rel target = $region3
  $region8: #{a_call__.1} parent=0 // loop_exit
    _

</llo_original>
